<compile_context>
chip_gen: v6e
topology: v6e:2x2x1
jax: 0.10.0
libtpu: 0.0.40
codegen_flags: <defaults>
</compile_context>

<pallas_src>
import functools

import numpy as np
import jax
import jax.numpy as jnp
from jax import lax
from jax.experimental import pallas as pl
from jax.experimental.pallas import tpu as pltpu


# ---------------------------------------------------------------------------
# Fused CBAM kernel (one batch element per grid step)
# ---------------------------------------------------------------------------
def _cbam_kernel(H, W, ext_pad,
                 x_ref, w1_ref, b1_ref, w2_ref, b2_ref, cmask_ref, wconv_ref,
                 o_ref):
    HW = H * W
    x = x_ref[0].astype(jnp.float32)                      # (C, HW), lane-dense

    # ---- ChannelGate: spatial avg/max pool -> shared MLP -> sigmoid --------
    avg = jnp.mean(x, axis=1, keepdims=True)              # (C, 1)
    mx = jnp.max(x, axis=1, keepdims=True)                # (C, 1)
    pooled = jnp.concatenate([avg, mx], axis=1)           # (C, 2) cols=[avg,max]

    # w1: (hidden, C), b1: (hidden, 1), w2: (C, hidden), b2: (C, 1)
    h = jnp.dot(w1_ref[...], pooled,
                preferred_element_type=jnp.float32) + b1_ref[...]    # (hidden, 2)
    h = jnp.maximum(h, 0.0)
    att = jnp.dot(w2_ref[...], h,
                  preferred_element_type=jnp.float32) + b2_ref[...]  # (C, 2)
    att_sum = att[:, 0:1] + att[:, 1:2]                   # (C, 1)
    cscale = 1.0 / (1.0 + jnp.exp(-att_sum))              # sigmoid, (C, 1)

    xg = x * cscale                                       # (C, HW), lane-broadcast

    # ---- ChannelPool: [max over C ; mean over C] ----------------------------
    cmax = jnp.max(xg, axis=0, keepdims=True)             # (1, HW)
    cmean = jnp.mean(xg, axis=0, keepdims=True)           # (1, HW)
    comp = jnp.concatenate([cmax, cmean], axis=0)         # (2, HW)

    # ---- SpatialGate 7x7 conv + folded BN, in the flat row-major layout -----
    # Zero-extend along lanes: vertical out-of-image taps read real zeros;
    # horizontal cross-row wrap is zeroed by the per-dw column masks.
    zpad = jnp.zeros((2, ext_pad), jnp.float32)
    ext = jnp.concatenate([zpad, comp, zpad], axis=1)     # (2, HW + 2*ext_pad)
    cmask = cmask_ref[...]                                # (7, HW), 1.0/0.0

    acc = jnp.zeros((1, HW), jnp.float32)
    for dw in range(7):
        d = dw - 3
        part = jnp.zeros((1, HW), jnp.float32)
        for ci in range(2):                               # 0 = max map, 1 = mean map
            for dh in range(7):
                off = (dh - 3) * W + d
                tap = ext[ci:ci + 1, ext_pad + off:ext_pad + off + HW]   # (1, HW)
                part = part + wconv_ref[ci * 49 + dh * 7 + dw] * tap
        acc = acc + cmask[dw:dw + 1, :] * part
    acc = acc + wconv_ref[98]                             # folded BN bias
    sscale = 1.0 / (1.0 + jnp.exp(-acc))                  # sigmoid, (1, HW)

    # ---- Apply both gates, single lane-dense store ---------------------------
    o_ref[0] = (xg * sscale).astype(o_ref.dtype)


# ---------------------------------------------------------------------------
# Wrapper
# ---------------------------------------------------------------------------
def cbam_forward(x, params, *, reduction_ratio=16, eps=1e-5):
    """CBAM forward. x: (N, C, H, W) NCHW. Returns same shape/dtype.

    params:
      'w1': (C//r, C)  'b1': (C//r,)      # Linear(C -> C//r)  (PyTorch layout)
      'w2': (C, C//r)  'b2': (C,)         # Linear(C//r -> C)
      'conv_w': (1, 2, 7, 7)              # SpatialGate 7x7 conv, bias=False
      'bn_gamma','bn_beta','bn_mean','bn_var': scalars (BatchNorm2d, eval stats)
    """
    N, C, H, W = x.shape
    HW = H * W
    hidden = C // reduction_ratio
    assert hidden >= 1, "gate_channels // reduction_ratio must be >= 1"

    x_flat = x.reshape(N, C, HW)                          # free metadata reshape

    w1 = params["w1"].astype(jnp.float32)                 # (hidden, C)
    b1 = params["b1"].astype(jnp.float32).reshape(hidden, 1)
    w2 = params["w2"].astype(jnp.float32)                 # (C, hidden)
    b2 = params["b2"].astype(jnp.float32).reshape(C, 1)

    # Fold eval-mode BatchNorm into the conv weights + bias.
    # TODO(synk): training-mode batch-statistics normalization is not implemented
    #             (eval-mode running stats are folded into the conv).
    bn_scale = params["bn_gamma"].astype(jnp.float32) / jnp.sqrt(
        params["bn_var"].astype(jnp.float32) + eps)
    w_eff = (params["conv_w"].astype(jnp.float32) * bn_scale).reshape(-1)   # (98,)
    b_eff = (params["bn_beta"].astype(jnp.float32)
             - params["bn_mean"].astype(jnp.float32) * bn_scale)
    w_fold = jnp.concatenate([w_eff, jnp.reshape(b_eff, (1,))]).astype(jnp.float32)

    # Per-dw horizontal validity masks in the flat row-major layout
    # (1.0 where the tap stays inside the row, 0.0 where it crosses an edge).
    col = np.arange(W)
    cmask_np = np.empty((7, HW), np.float32)
    for dw in range(7):
        d = dw - 3
        valid = ((col + d) >= 0) & ((col + d) < W)
        cmask_np[dw] = np.tile(valid.astype(np.float32), H)
    cmask = jnp.asarray(cmask_np)

    # Lane-aligned zero-extension width for the flat conv (>= 3*W + 3).
    ext_pad = ((3 * W + 3 + 127) // 128) * 128

    itemsize = jnp.dtype(x.dtype).itemsize
    block_bytes = C * HW * itemsize
    # in + out double-buffered blocks + f32 working copies, with headroom.
    vmem_limit = int(min(64 << 20, max(4 << 20, 4 * block_bytes + 6 * C * HW * 4)))
    # TODO(synk): for very large C*HW on v7x (64 MiB VMEM) add a channel-tiled
    #             two-pass fallback; one whole image per block is assumed to fit here.

    cost = pl.CostEstimate(
        flops=int(N * (6 * C * HW + 220 * HW)),
        transcendentals=int(N * (C + HW)),
        bytes_accessed=int(2 * N * C * HW * itemsize),
    )

    out_flat = pl.pallas_call(
        functools.partial(_cbam_kernel, H, W, ext_pad),
        out_shape=jax.ShapeDtypeStruct((N, C, HW), x.dtype),
        grid_spec=pltpu.PrefetchScalarGridSpec(
            num_scalar_prefetch=0,
            grid=(N,),
            in_specs=[
                pl.BlockSpec((1, C, HW), lambda n: (n, 0, 0)),
                pl.BlockSpec((hidden, C), lambda n: (0, 0)),
                pl.BlockSpec((hidden, 1), lambda n: (0, 0)),
                pl.BlockSpec((C, hidden), lambda n: (0, 0)),
                pl.BlockSpec((C, 1), lambda n: (0, 0)),
                pl.BlockSpec((7, HW), lambda n: (0, 0)),
                pl.BlockSpec(memory_space=pltpu.MemorySpace.SMEM),
            ],
            out_specs=pl.BlockSpec((1, C, HW), lambda n: (n, 0, 0)),
        ),
        compiler_params=pltpu.CompilerParams(
            dimension_semantics=("parallel",),
            vmem_limit_bytes=vmem_limit,
        ),
        cost_estimate=cost,
    )(x_flat, w1, b1, w2, b2, cmask, w_fold)

    return out_flat.reshape(N, C, H, W)


# ---------------------------------------------------------------------------
# Pure-JAX reference (mirrors the PyTorch module, eval-mode BN)
# ---------------------------------------------------------------------------
def _cbam_ref(x, params, *, eps=1e-5):
    xf = x.astype(jnp.float32)
    w1, b1 = params["w1"], params["b1"]
    w2, b2 = params["w2"], params["b2"]

    def mlp(p):                                           # p: (N, C)
        h = jnp.maximum(p @ w1.T + b1, 0.0)
        return h @ w2.T + b2

    avg = jnp.mean(xf, axis=(2, 3))
    mx = jnp.max(xf, axis=(2, 3))
    att = mlp(avg) + mlp(mx)
    cscale = 1.0 / (1.0 + jnp.exp(-att))
    xg = xf * cscale[:, :, None, None]

    cmax = jnp.max(xg, axis=1, keepdims=True)
    cmean = jnp.mean(xg, axis=1, keepdims=True)
    comp = jnp.concatenate([cmax, cmean], axis=1)         # (N, 2, H, W)
    conv = lax.conv_general_dilated(
        comp, params["conv_w"].astype(jnp.float32),
        window_strides=(1, 1), padding=((3, 3), (3, 3)),
        dimension_numbers=("NCHW", "OIHW", "NCHW"))
    bn_scale = params["bn_gamma"] / jnp.sqrt(params["bn_var"] + eps)
    bn = (conv - params["bn_mean"]) * bn_scale + params["bn_beta"]
    sscale = 1.0 / (1.0 + jnp.exp(-bn))
    return (xg * sscale).astype(x.dtype)


if __name__ == "__main__":
    key = jax.random.PRNGKey(0)
    N, C, H, W = 2, 32, 16, 16          # gate_channels=32, reduction_ratio=16 -> hidden=2
    r = 16
    hidden = C // r

    ks = jax.random.split(key, 6)
    x = jax.random.normal(ks[0], (N, C, H, W), dtype=jnp.float32)
    params = {
        "w1": jax.random.normal(ks[1], (hidden, C), jnp.float32) / jnp.sqrt(C),
        "b1": jax.random.normal(ks[2], (hidden,), jnp.float32) * 0.1,
        "w2": jax.random.normal(ks[3], (C, hidden), jnp.float32) / jnp.sqrt(hidden),
        "b2": jax.random.normal(ks[4], (C,), jnp.float32) * 0.1,
        "conv_w": jax.random.normal(ks[5], (1, 2, 7, 7), jnp.float32) / jnp.sqrt(2 * 49),
        "bn_gamma": jnp.float32(1.0),
        "bn_beta": jnp.float32(0.0),
        "bn_mean": jnp.float32(0.0),
        "bn_var": jnp.float32(1.0),
    }

    y = cbam_forward(x, params, reduction_ratio=r)
    y = jax.block_until_ready(y)

    y_ref = _cbam_ref(x, params)
    assert y.shape == x.shape and y.dtype == x.dtype
    max_err = float(jnp.max(jnp.abs(y.astype(jnp.float32) - y_ref.astype(jnp.float32))))
    assert jnp.allclose(y, y_ref, atol=1e-4, rtol=1e-4), f"mismatch vs reference: {max_err}"

    print("KERNEL_OK")
</pallas_src>

<mosaic_0001>
module attributes {stable_mosaic.version = 11 : i64} {
  func.func @_cbam_kernel(%arg0: i32, %arg1: memref<1x32x256xf32, #tpu.memory_space<vmem>>, %arg2: memref<2x32xf32, #tpu.memory_space<vmem>>, %arg3: memref<2x1xf32, #tpu.memory_space<vmem>>, %arg4: memref<32x2xf32, #tpu.memory_space<vmem>>, %arg5: memref<32x1xf32, #tpu.memory_space<vmem>>, %arg6: memref<7x256xf32, #tpu.memory_space<vmem>>, %arg7: memref<99xf32, #tpu.memory_space<smem>>, %arg8: memref<1x32x256xf32, #tpu.memory_space<vmem>>) attributes {dimension_semantics = [#tpu.dimension_semantics<parallel>], iteration_bounds = array<i64: 2>, scalar_prefetch = 0 : i64, scratch_operands = 0 : i64, tpu.core_type = #tpu.core_type<tc>, window_params = [{transform_indices = @transform_0, window_bounds = array<i64: 1, 32, 256>}, {pipeline_mode = #tpu.pipeline_mode<synchronous>, transform_indices = @transform_1, window_bounds = array<i64: 2, 32>}, {pipeline_mode = #tpu.pipeline_mode<synchronous>, transform_indices = @transform_2, window_bounds = array<i64: 2, 1>}, {pipeline_mode = #tpu.pipeline_mode<synchronous>, transform_indices = @transform_3, window_bounds = array<i64: 32, 2>}, {pipeline_mode = #tpu.pipeline_mode<synchronous>, transform_indices = @transform_4, window_bounds = array<i64: 32, 1>}, {pipeline_mode = #tpu.pipeline_mode<synchronous>, transform_indices = @transform_5, window_bounds = array<i64: 7, 256>}, {transform_indices = @transform_6, window_bounds = array<i64: 99>}, {transform_indices = @transform_7, window_bounds = array<i64: 1, 32, 256>}]} {
    %c0 = arith.constant 0 : index
    %c0_0 = arith.constant 0 : index
    %c0_1 = arith.constant 0 : index
    %0 = vector.load %arg1[%c0, %c0_0, %c0_1] : memref<1x32x256xf32, #tpu.memory_space<vmem>>, vector<1x32x256xf32>
    %1 = vector.shape_cast %0 : vector<1x32x256xf32> to vector<32x256xf32>
    %cst = arith.constant dense<0.000000e+00> : vector<32xf32>
    %2 = vector.multi_reduction <add>, %1, %cst [1] : vector<32x256xf32> to vector<32xf32>
    %3 = vector.shape_cast %2 : vector<32xf32> to vector<32x1xf32>
    %cst_2 = arith.constant 2.560000e+02 : f32
    %4 = vector.broadcast %cst_2 : f32 to vector<32x1xf32>
    %5 = arith.divf %3, %4 : vector<32x1xf32>
    %cst_3 = arith.constant dense<0xFF800000> : vector<32xf32>
    %6 = vector.multi_reduction <maximumf>, %1, %cst_3 [1] : vector<32x256xf32> to vector<32xf32>
    %7 = vector.shape_cast %6 : vector<32xf32> to vector<32x1xf32>
    %8 = tpu.concatenate %5, %7 in 1 : vector<32x1xf32>, vector<32x1xf32> -> vector<32x2xf32>
    %c0_4 = arith.constant 0 : index
    %c0_5 = arith.constant 0 : index
    %9 = vector.load %arg2[%c0_4, %c0_5] : memref<2x32xf32, #tpu.memory_space<vmem>>, vector<2x32xf32>
    %cst_6 = arith.constant dense<0.000000e+00> : vector<2x2xf32>
    %10 = tpu.matmul %9, %8, %cst_6 {dimension_numbers = #tpu.dot_dimension_numbers<[1], [0], [0], [1], [0, 0, 1, 1], [], []>} : vector<2x32xf32>, vector<32x2xf32>, vector<2x2xf32> -> vector<2x2xf32>
    %c0_7 = arith.constant 0 : index
    %c0_8 = arith.constant 0 : index
    %11 = vector.load %arg3[%c0_7, %c0_8] : memref<2x1xf32, #tpu.memory_space<vmem>>, vector<2x1xf32>
    %12 = vector.broadcast %11 : vector<2x1xf32> to vector<2x2xf32>
    %13 = arith.addf %10, %12 : vector<2x2xf32>
    %cst_9 = arith.constant 0.000000e+00 : f32
    %14 = vector.broadcast %cst_9 : f32 to vector<2x2xf32>
    %15 = arith.maximumf %13, %14 : vector<2x2xf32>
    %c0_10 = arith.constant 0 : index
    %c0_11 = arith.constant 0 : index
    %16 = vector.load %arg4[%c0_10, %c0_11] : memref<32x2xf32, #tpu.memory_space<vmem>>, vector<32x2xf32>
    %cst_12 = arith.constant dense<0.000000e+00> : vector<32x2xf32>
    %17 = tpu.matmul %16, %15, %cst_12 {dimension_numbers = #tpu.dot_dimension_numbers<[1], [0], [0], [1], [0, 0, 1, 1], [], []>} : vector<32x2xf32>, vector<2x2xf32>, vector<32x2xf32> -> vector<32x2xf32>
    %c0_13 = arith.constant 0 : index
    %c0_14 = arith.constant 0 : index
    %18 = vector.load %arg5[%c0_13, %c0_14] : memref<32x1xf32, #tpu.memory_space<vmem>>, vector<32x1xf32>
    %19 = vector.broadcast %18 : vector<32x1xf32> to vector<32x2xf32>
    %20 = arith.addf %17, %19 : vector<32x2xf32>
    %21 = vector.extract_strided_slice %20 {offsets = [0, 0], sizes = [32, 1], strides = [1, 1]} : vector<32x2xf32> to vector<32x1xf32>
    %22 = vector.extract_strided_slice %20 {offsets = [0, 1], sizes = [32, 1], strides = [1, 1]} : vector<32x2xf32> to vector<32x1xf32>
    %23 = arith.addf %21, %22 : vector<32x1xf32>
    %cst_15 = arith.constant 0.000000e+00 : f32
    %24 = vector.broadcast %cst_15 : f32 to vector<32x1xf32>
    %25 = arith.subf %24, %23 : vector<32x1xf32>
    %26 = math.exp %25 : vector<32x1xf32>
    %cst_16 = arith.constant 1.000000e+00 : f32
    %27 = vector.broadcast %cst_16 : f32 to vector<32x1xf32>
    %28 = arith.addf %27, %26 : vector<32x1xf32>
    %cst_17 = arith.constant 1.000000e+00 : f32
    %29 = vector.broadcast %cst_17 : f32 to vector<32x1xf32>
    %30 = arith.divf %29, %28 : vector<32x1xf32>
    %31 = vector.broadcast %30 : vector<32x1xf32> to vector<32x256xf32>
    %32 = arith.mulf %1, %31 : vector<32x256xf32>
    %cst_18 = arith.constant dense<0xFF800000> : vector<256xf32>
    %33 = vector.multi_reduction <maximumf>, %32, %cst_18 [0] : vector<32x256xf32> to vector<256xf32>
    %34 = vector.shape_cast %33 : vector<256xf32> to vector<1x256xf32>
    %cst_19 = arith.constant dense<0.000000e+00> : vector<256xf32>
    %35 = vector.multi_reduction <add>, %32, %cst_19 [0] : vector<32x256xf32> to vector<256xf32>
    %36 = vector.shape_cast %35 : vector<256xf32> to vector<1x256xf32>
    %cst_20 = arith.constant 3.200000e+01 : f32
    %37 = vector.broadcast %cst_20 : f32 to vector<1x256xf32>
    %38 = arith.divf %36, %37 : vector<1x256xf32>
    %39 = tpu.concatenate %34, %38 in 0 : vector<1x256xf32>, vector<1x256xf32> -> vector<2x256xf32>
    %cst_21 = arith.constant 0.000000e+00 : f32
    %40 = vector.broadcast %cst_21 : f32 to vector<2x128xf32>
    %41 = tpu.concatenate %40, %39, %40 in 1 : vector<2x128xf32>, vector<2x256xf32>, vector<2x128xf32> -> vector<2x512xf32>
    %c0_22 = arith.constant 0 : index
    %c0_23 = arith.constant 0 : index
    %42 = vector.load %arg6[%c0_22, %c0_23] : memref<7x256xf32, #tpu.memory_space<vmem>>, vector<7x256xf32>
    %cst_24 = arith.constant 0.000000e+00 : f32
    %43 = vector.broadcast %cst_24 : f32 to vector<1x256xf32>
    %cst_25 = arith.constant 0.000000e+00 : f32
    %44 = vector.broadcast %cst_25 : f32 to vector<1x256xf32>
    %45 = vector.extract_strided_slice %41 {offsets = [0, 77], sizes = [1, 256], strides = [1, 1]} : vector<2x512xf32> to vector<1x256xf32>
    %c0_26 = arith.constant 0 : index
    %46 = memref.load %arg7[%c0_26] : memref<99xf32, #tpu.memory_space<smem>>
    %47 = vector.broadcast %46 : f32 to vector<1x256xf32>
    %48 = arith.mulf %47, %45 : vector<1x256xf32>
    %49 = arith.addf %44, %48 : vector<1x256xf32>
    %50 = vector.extract_strided_slice %41 {offsets = [0, 93], sizes = [1, 256], strides = [1, 1]} : vector<2x512xf32> to vector<1x256xf32>
    %c7 = arith.constant 7 : index
    %51 = memref.load %arg7[%c7] : memref<99xf32, #tpu.memory_space<smem>>
    %52 = vector.broadcast %51 : f32 to vector<1x256xf32>
    %53 = arith.mulf %52, %50 : vector<1x256xf32>
    %54 = arith.addf %49, %53 : vector<1x256xf32>
    %55 = vector.extract_strided_slice %41 {offsets = [0, 109], sizes = [1, 256], strides = [1, 1]} : vector<2x512xf32> to vector<1x256xf32>
    %c14 = arith.constant 14 : index
    %56 = memref.load %arg7[%c14] : memref<99xf32, #tpu.memory_space<smem>>
    %57 = vector.broadcast %56 : f32 to vector<1x256xf32>
    %58 = arith.mulf %57, %55 : vector<1x256xf32>
    %59 = arith.addf %54, %58 : vector<1x256xf32>
    %60 = vector.extract_strided_slice %41 {offsets = [0, 125], sizes = [1, 256], strides = [1, 1]} : vector<2x512xf32> to vector<1x256xf32>
    %c21 = arith.constant 21 : index
    %61 = memref.load %arg7[%c21] : memref<99xf32, #tpu.memory_space<smem>>
    %62 = vector.broadcast %61 : f32 to vector<1x256xf32>
    %63 = arith.mulf %62, %60 : vector<1x256xf32>
    %64 = arith.addf %59, %63 : vector<1x256xf32>
    %65 = vector.extract_strided_slice %41 {offsets = [0, 141], sizes = [1, 256], strides = [1, 1]} : vector<2x512xf32> to vector<1x256xf32>
    %c28 = arith.constant 28 : index
    %66 = memref.load %arg7[%c28] : memref<99xf32, #tpu.memory_space<smem>>
    %67 = vector.broadcast %66 : f32 to vector<1x256xf32>
    %68 = arith.mulf %67, %65 : vector<1x256xf32>
    %69 = arith.addf %64, %68 : vector<1x256xf32>
    %70 = vector.extract_strided_slice %41 {offsets = [0, 157], sizes = [1, 256], strides = [1, 1]} : vector<2x512xf32> to vector<1x256xf32>
    %c35 = arith.constant 35 : index
    %71 = memref.load %arg7[%c35] : memref<99xf32, #tpu.memory_space<smem>>
    %72 = vector.broadcast %71 : f32 to vector<1x256xf32>
    %73 = arith.mulf %72, %70 : vector<1x256xf32>
    %74 = arith.addf %69, %73 : vector<1x256xf32>
    %75 = vector.extract_strided_slice %41 {offsets = [0, 173], sizes = [1, 256], strides = [1, 1]} : vector<2x512xf32> to vector<1x256xf32>
    %c42 = arith.constant 42 : index
    %76 = memref.load %arg7[%c42] : memref<99xf32, #tpu.memory_space<smem>>
    %77 = vector.broadcast %76 : f32 to vector<1x256xf32>
    %78 = arith.mulf %77, %75 : vector<1x256xf32>
    %79 = arith.addf %74, %78 : vector<1x256xf32>
    %80 = vector.extract_strided_slice %41 {offsets = [1, 77], sizes = [1, 256], strides = [1, 1]} : vector<2x512xf32> to vector<1x256xf32>
    %c49 = arith.constant 49 : index
    %81 = memref.load %arg7[%c49] : memref<99xf32, #tpu.memory_space<smem>>
    %82 = vector.broadcast %81 : f32 to vector<1x256xf32>
    %83 = arith.mulf %82, %80 : vector<1x256xf32>
    %84 = arith.addf %79, %83 : vector<1x256xf32>
    %85 = vector.extract_strided_slice %41 {offsets = [1, 93], sizes = [1, 256], strides = [1, 1]} : vector<2x512xf32> to vector<1x256xf32>
    %c56 = arith.constant 56 : index
    %86 = memref.load %arg7[%c56] : memref<99xf32, #tpu.memory_space<smem>>
    %87 = vector.broadcast %86 : f32 to vector<1x256xf32>
    %88 = arith.mulf %87, %85 : vector<1x256xf32>
    %89 = arith.addf %84, %88 : vector<1x256xf32>
    %90 = vector.extract_strided_slice %41 {offsets = [1, 109], sizes = [1, 256], strides = [1, 1]} : vector<2x512xf32> to vector<1x256xf32>
    %c63 = arith.constant 63 : index
    %91 = memref.load %arg7[%c63] : memref<99xf32, #tpu.memory_space<smem>>
    %92 = vector.broadcast %91 : f32 to vector<1x256xf32>
    %93 = arith.mulf %92, %90 : vector<1x256xf32>
    %94 = arith.addf %89, %93 : vector<1x256xf32>
    %95 = vector.extract_strided_slice %41 {offsets = [1, 125], sizes = [1, 256], strides = [1, 1]} : vector<2x512xf32> to vector<1x256xf32>
    %c70 = arith.constant 70 : index
    %96 = memref.load %arg7[%c70] : memref<99xf32, #tpu.memory_space<smem>>
    %97 = vector.broadcast %96 : f32 to vector<1x256xf32>
    %98 = arith.mulf %97, %95 : vector<1x256xf32>
    %99 = arith.addf %94, %98 : vector<1x256xf32>
    %100 = vector.extract_strided_slice %41 {offsets = [1, 141], sizes = [1, 256], strides = [1, 1]} : vector<2x512xf32> to vector<1x256xf32>
    %c77 = arith.constant 77 : index
    %101 = memref.load %arg7[%c77] : memref<99xf32, #tpu.memory_space<smem>>
    %102 = vector.broadcast %101 : f32 to vector<1x256xf32>
    %103 = arith.mulf %102, %100 : vector<1x256xf32>
    %104 = arith.addf %99, %103 : vector<1x256xf32>
    %105 = vector.extract_strided_slice %41 {offsets = [1, 157], sizes = [1, 256], strides = [1, 1]} : vector<2x512xf32> to vector<1x256xf32>
    %c84 = arith.constant 84 : index
    %106 = memref.load %arg7[%c84] : memref<99xf32, #tpu.memory_space<smem>>
    %107 = vector.broadcast %106 : f32 to vector<1x256xf32>
    %108 = arith.mulf %107, %105 : vector<1x256xf32>
    %109 = arith.addf %104, %108 : vector<1x256xf32>
    %110 = vector.extract_strided_slice %41 {offsets = [1, 173], sizes = [1, 256], strides = [1, 1]} : vector<2x512xf32> to vector<1x256xf32>
    %c91 = arith.constant 91 : index
    %111 = memref.load %arg7[%c91] : memref<99xf32, #tpu.memory_space<smem>>
    %112 = vector.broadcast %111 : f32 to vector<1x256xf32>
    %113 = arith.mulf %112, %110 : vector<1x256xf32>
    %114 = arith.addf %109, %113 : vector<1x256xf32>
    %115 = vector.extract_strided_slice %42 {offsets = [0, 0], sizes = [1, 256], strides = [1, 1]} : vector<7x256xf32> to vector<1x256xf32>
    %116 = arith.mulf %115, %114 : vector<1x256xf32>
    %117 = arith.addf %43, %116 : vector<1x256xf32>
    %cst_27 = arith.constant 0.000000e+00 : f32
    %118 = vector.broadcast %cst_27 : f32 to vector<1x256xf32>
    %119 = vector.extract_strided_slice %41 {offsets = [0, 78], sizes = [1, 256], strides = [1, 1]} : vector<2x512xf32> to vector<1x256xf32>
    %c1 = arith.constant 1 : index
    %120 = memref.load %arg7[%c1] : memref<99xf32, #tpu.memory_space<smem>>
    %121 = vector.broadcast %120 : f32 to vector<1x256xf32>
    %122 = arith.mulf %121, %119 : vector<1x256xf32>
    %123 = arith.addf %118, %122 : vector<1x256xf32>
    %124 = vector.extract_strided_slice %41 {offsets = [0, 94], sizes = [1, 256], strides = [1, 1]} : vector<2x512xf32> to vector<1x256xf32>
    %c8 = arith.constant 8 : index
    %125 = memref.load %arg7[%c8] : memref<99xf32, #tpu.memory_space<smem>>
    %126 = vector.broadcast %125 : f32 to vector<1x256xf32>
    %127 = arith.mulf %126, %124 : vector<1x256xf32>
    %128 = arith.addf %123, %127 : vector<1x256xf32>
    %129 = vector.extract_strided_slice %41 {offsets = [0, 110], sizes = [1, 256], strides = [1, 1]} : vector<2x512xf32> to vector<1x256xf32>
    %c15 = arith.constant 15 : index
    %130 = memref.load %arg7[%c15] : memref<99xf32, #tpu.memory_space<smem>>
    %131 = vector.broadcast %130 : f32 to vector<1x256xf32>
    %132 = arith.mulf %131, %129 : vector<1x256xf32>
    %133 = arith.addf %128, %132 : vector<1x256xf32>
    %134 = vector.extract_strided_slice %41 {offsets = [0, 126], sizes = [1, 256], strides = [1, 1]} : vector<2x512xf32> to vector<1x256xf32>
    %c22 = arith.constant 22 : index
    %135 = memref.load %arg7[%c22] : memref<99xf32, #tpu.memory_space<smem>>
    %136 = vector.broadcast %135 : f32 to vector<1x256xf32>
    %137 = arith.mulf %136, %134 : vector<1x256xf32>
    %138 = arith.addf %133, %137 : vector<1x256xf32>
    %139 = vector.extract_strided_slice %41 {offsets = [0, 142], sizes = [1, 256], strides = [1, 1]} : vector<2x512xf32> to vector<1x256xf32>
    %c29 = arith.constant 29 : index
    %140 = memref.load %arg7[%c29] : memref<99xf32, #tpu.memory_space<smem>>
    %141 = vector.broadcast %140 : f32 to vector<1x256xf32>
    %142 = arith.mulf %141, %139 : vector<1x256xf32>
    %143 = arith.addf %138, %142 : vector<1x256xf32>
    %144 = vector.extract_strided_slice %41 {offsets = [0, 158], sizes = [1, 256], strides = [1, 1]} : vector<2x512xf32> to vector<1x256xf32>
    %c36 = arith.constant 36 : index
    %145 = memref.load %arg7[%c36] : memref<99xf32, #tpu.memory_space<smem>>
    %146 = vector.broadcast %145 : f32 to vector<1x256xf32>
    %147 = arith.mulf %146, %144 : vector<1x256xf32>
    %148 = arith.addf %143, %147 : vector<1x256xf32>
    %149 = vector.extract_strided_slice %41 {offsets = [0, 174], sizes = [1, 256], strides = [1, 1]} : vector<2x512xf32> to vector<1x256xf32>
    %c43 = arith.constant 43 : index
    %150 = memref.load %arg7[%c43] : memref<99xf32, #tpu.memory_space<smem>>
    %151 = vector.broadcast %150 : f32 to vector<1x256xf32>
    %152 = arith.mulf %151, %149 : vector<1x256xf32>
    %153 = arith.addf %148, %152 : vector<1x256xf32>
    %154 = vector.extract_strided_slice %41 {offsets = [1, 78], sizes = [1, 256], strides = [1, 1]} : vector<2x512xf32> to vector<1x256xf32>
    %c50 = arith.constant 50 : index
    %155 = memref.load %arg7[%c50] : memref<99xf32, #tpu.memory_space<smem>>
    %156 = vector.broadcast %155 : f32 to vector<1x256xf32>
    %157 = arith.mulf %156, %154 : vector<1x256xf32>
    %158 = arith.addf %153, %157 : vector<1x256xf32>
    %159 = vector.extract_strided_slice %41 {offsets = [1, 94], sizes = [1, 256], strides = [1, 1]} : vector<2x512xf32> to vector<1x256xf32>
    %c57 = arith.constant 57 : index
    %160 = memref.load %arg7[%c57] : memref<99xf32, #tpu.memory_space<smem>>
    %161 = vector.broadcast %160 : f32 to vector<1x256xf32>
    %162 = arith.mulf %161, %159 : vector<1x256xf32>
    %163 = arith.addf %158, %162 : vector<1x256xf32>
    %164 = vector.extract_strided_slice %41 {offsets = [1, 110], sizes = [1, 256], strides = [1, 1]} : vector<2x512xf32> to vector<1x256xf32>
    %c64 = arith.constant 64 : index
    %165 = memref.load %arg7[%c64] : memref<99xf32, #tpu.memory_space<smem>>
    %166 = vector.broadcast %165 : f32 to vector<1x256xf32>
    %167 = arith.mulf %166, %164 : vector<1x256xf32>
    %168 = arith.addf %163, %167 : vector<1x256xf32>
    %169 = vector.extract_strided_slice %41 {offsets = [1, 126], sizes = [1, 256], strides = [1, 1]} : vector<2x512xf32> to vector<1x256xf32>
    %c71 = arith.constant 71 : index
    %170 = memref.load %arg7[%c71] : memref<99xf32, #tpu.memory_space<smem>>
    %171 = vector.broadcast %170 : f32 to vector<1x256xf32>
    %172 = arith.mulf %171, %169 : vector<1x256xf32>
    %173 = arith.addf %168, %172 : vector<1x256xf32>
    %174 = vector.extract_strided_slice %41 {offsets = [1, 142], sizes = [1, 256], strides = [1, 1]} : vector<2x512xf32> to vector<1x256xf32>
    %c78 = arith.constant 78 : index
    %175 = memref.load %arg7[%c78] : memref<99xf32, #tpu.memory_space<smem>>
    %176 = vector.broadcast %175 : f32 to vector<1x256xf32>
    %177 = arith.mulf %176, %174 : vector<1x256xf32>
    %178 = arith.addf %173, %177 : vector<1x256xf32>
    %179 = vector.extract_strided_slice %41 {offsets = [1, 158], sizes = [1, 256], strides = [1, 1]} : vector<2x512xf32> to vector<1x256xf32>
    %c85 = arith.constant 85 : index
    %180 = memref.load %arg7[%c85] : memref<99xf32, #tpu.memory_space<smem>>
    %181 = vector.broadcast %180 : f32 to vector<1x256xf32>
    %182 = arith.mulf %181, %179 : vector<1x256xf32>
    %183 = arith.addf %178, %182 : vector<1x256xf32>
    %184 = vector.extract_strided_slice %41 {offsets = [1, 174], sizes = [1, 256], strides = [1, 1]} : vector<2x512xf32> to vector<1x256xf32>
    %c92 = arith.constant 92 : index
    %185 = memref.load %arg7[%c92] : memref<99xf32, #tpu.memory_space<smem>>
    %186 = vector.broadcast %185 : f32 to vector<1x256xf32>
    %187 = arith.mulf %186, %184 : vector<1x256xf32>
    %188 = arith.addf %183, %187 : vector<1x256xf32>
    %189 = vector.extract_strided_slice %42 {offsets = [1, 0], sizes = [1, 256], strides = [1, 1]} : vector<7x256xf32> to vector<1x256xf32>
    %190 = arith.mulf %189, %188 : vector<1x256xf32>
    %191 = arith.addf %117, %190 : vector<1x256xf32>
    %cst_28 = arith.constant 0.000000e+00 : f32
    %192 = vector.broadcast %cst_28 : f32 to vector<1x256xf32>
    %193 = vector.extract_strided_slice %41 {offsets = [0, 79], sizes = [1, 256], strides = [1, 1]} : vector<2x512xf32> to vector<1x256xf32>
    %c2 = arith.constant 2 : index
    %194 = memref.load %arg7[%c2] : memref<99xf32, #tpu.memory_space<smem>>
    %195 = vector.broadcast %194 : f32 to vector<1x256xf32>
    %196 = arith.mulf %195, %193 : vector<1x256xf32>
    %197 = arith.addf %192, %196 : vector<1x256xf32>
    %198 = vector.extract_strided_slice %41 {offsets = [0, 95], sizes = [1, 256], strides = [1, 1]} : vector<2x512xf32> to vector<1x256xf32>
    %c9 = arith.constant 9 : index
    %199 = memref.load %arg7[%c9] : memref<99xf32, #tpu.memory_space<smem>>
    %200 = vector.broadcast %199 : f32 to vector<1x256xf32>
    %201 = arith.mulf %200, %198 : vector<1x256xf32>
    %202 = arith.addf %197, %201 : vector<1x256xf32>
    %203 = vector.extract_strided_slice %41 {offsets = [0, 111], sizes = [1, 256], strides = [1, 1]} : vector<2x512xf32> to vector<1x256xf32>
    %c16 = arith.constant 16 : index
    %204 = memref.load %arg7[%c16] : memref<99xf32, #tpu.memory_space<smem>>
    %205 = vector.broadcast %204 : f32 to vector<1x256xf32>
    %206 = arith.mulf %205, %203 : vector<1x256xf32>
    %207 = arith.addf %202, %206 : vector<1x256xf32>
    %208 = vector.extract_strided_slice %41 {offsets = [0, 127], sizes = [1, 256], strides = [1, 1]} : vector<2x512xf32> to vector<1x256xf32>
    %c23 = arith.constant 23 : index
    %209 = memref.load %arg7[%c23] : memref<99xf32, #tpu.memory_space<smem>>
    %210 = vector.broadcast %209 : f32 to vector<1x256xf32>
    %211 = arith.mulf %210, %208 : vector<1x256xf32>
    %212 = arith.addf %207, %211 : vector<1x256xf32>
    %213 = vector.extract_strided_slice %41 {offsets = [0, 143], sizes = [1, 256], strides = [1, 1]} : vector<2x512xf32> to vector<1x256xf32>
    %c30 = arith.constant 30 : index
    %214 = memref.load %arg7[%c30] : memref<99xf32, #tpu.memory_space<smem>>
    %215 = vector.broadcast %214 : f32 to vector<1x256xf32>
    %216 = arith.mulf %215, %213 : vector<1x256xf32>
    %217 = arith.addf %212, %216 : vector<1x256xf32>
    %218 = vector.extract_strided_slice %41 {offsets = [0, 159], sizes = [1, 256], strides = [1, 1]} : vector<2x512xf32> to vector<1x256xf32>
    %c37 = arith.constant 37 : index
    %219 = memref.load %arg7[%c37] : memref<99xf32, #tpu.memory_space<smem>>
    %220 = vector.broadcast %219 : f32 to vector<1x256xf32>
    %221 = arith.mulf %220, %218 : vector<1x256xf32>
    %222 = arith.addf %217, %221 : vector<1x256xf32>
    %223 = vector.extract_strided_slice %41 {offsets = [0, 175], sizes = [1, 256], strides = [1, 1]} : vector<2x512xf32> to vector<1x256xf32>
    %c44 = arith.constant 44 : index
    %224 = memref.load %arg7[%c44] : memref<99xf32, #tpu.memory_space<smem>>
    %225 = vector.broadcast %224 : f32 to vector<1x256xf32>
    %226 = arith.mulf %225, %223 : vector<1x256xf32>
    %227 = arith.addf %222, %226 : vector<1x256xf32>
    %228 = vector.extract_strided_slice %41 {offsets = [1, 79], sizes = [1, 256], strides = [1, 1]} : vector<2x512xf32> to vector<1x256xf32>
    %c51 = arith.constant 51 : index
    %229 = memref.load %arg7[%c51] : memref<99xf32, #tpu.memory_space<smem>>
    %230 = vector.broadcast %229 : f32 to vector<1x256xf32>
    %231 = arith.mulf %230, %228 : vector<1x256xf32>
    %232 = arith.addf %227, %231 : vector<1x256xf32>
    %233 = vector.extract_strided_slice %41 {offsets = [1, 95], sizes = [1, 256], strides = [1, 1]} : vector<2x512xf32> to vector<1x256xf32>
    %c58 = arith.constant 58 : index
    %234 = memref.load %arg7[%c58] : memref<99xf32, #tpu.memory_space<smem>>
    %235 = vector.broadcast %234 : f32 to vector<1x256xf32>
    %236 = arith.mulf %235, %233 : vector<1x256xf32>
    %237 = arith.addf %232, %236 : vector<1x256xf32>
    %238 = vector.extract_strided_slice %41 {offsets = [1, 111], sizes = [1, 256], strides = [1, 1]} : vector<2x512xf32> to vector<1x256xf32>
    %c65 = arith.constant 65 : index
    %239 = memref.load %arg7[%c65] : memref<99xf32, #tpu.memory_space<smem>>
    %240 = vector.broadcast %239 : f32 to vector<1x256xf32>
    %241 = arith.mulf %240, %238 : vector<1x256xf32>
    %242 = arith.addf %237, %241 : vector<1x256xf32>
    %243 = vector.extract_strided_slice %41 {offsets = [1, 127], sizes = [1, 256], strides = [1, 1]} : vector<2x512xf32> to vector<1x256xf32>
    %c72 = arith.constant 72 : index
    %244 = memref.load %arg7[%c72] : memref<99xf32, #tpu.memory_space<smem>>
    %245 = vector.broadcast %244 : f32 to vector<1x256xf32>
    %246 = arith.mulf %245, %243 : vector<1x256xf32>
    %247 = arith.addf %242, %246 : vector<1x256xf32>
    %248 = vector.extract_strided_slice %41 {offsets = [1, 143], sizes = [1, 256], strides = [1, 1]} : vector<2x512xf32> to vector<1x256xf32>
    %c79 = arith.constant 79 : index
    %249 = memref.load %arg7[%c79] : memref<99xf32, #tpu.memory_space<smem>>
    %250 = vector.broadcast %249 : f32 to vector<1x256xf32>
    %251 = arith.mulf %250, %248 : vector<1x256xf32>
    %252 = arith.addf %247, %251 : vector<1x256xf32>
    %253 = vector.extract_strided_slice %41 {offsets = [1, 159], sizes = [1, 256], strides = [1, 1]} : vector<2x512xf32> to vector<1x256xf32>
    %c86 = arith.constant 86 : index
    %254 = memref.load %arg7[%c86] : memref<99xf32, #tpu.memory_space<smem>>
    %255 = vector.broadcast %254 : f32 to vector<1x256xf32>
    %256 = arith.mulf %255, %253 : vector<1x256xf32>
    %257 = arith.addf %252, %256 : vector<1x256xf32>
    %258 = vector.extract_strided_slice %41 {offsets = [1, 175], sizes = [1, 256], strides = [1, 1]} : vector<2x512xf32> to vector<1x256xf32>
    %c93 = arith.constant 93 : index
    %259 = memref.load %arg7[%c93] : memref<99xf32, #tpu.memory_space<smem>>
    %260 = vector.broadcast %259 : f32 to vector<1x256xf32>
    %261 = arith.mulf %260, %258 : vector<1x256xf32>
    %262 = arith.addf %257, %261 : vector<1x256xf32>
    %263 = vector.extract_strided_slice %42 {offsets = [2, 0], sizes = [1, 256], strides = [1, 1]} : vector<7x256xf32> to vector<1x256xf32>
    %264 = arith.mulf %263, %262 : vector<1x256xf32>
    %265 = arith.addf %191, %264 : vector<1x256xf32>
    %cst_29 = arith.constant 0.000000e+00 : f32
    %266 = vector.broadcast %cst_29 : f32 to vector<1x256xf32>
    %267 = vector.extract_strided_slice %41 {offsets = [0, 80], sizes = [1, 256], strides = [1, 1]} : vector<2x512xf32> to vector<1x256xf32>
    %c3 = arith.constant 3 : index
    %268 = memref.load %arg7[%c3] : memref<99xf32, #tpu.memory_space<smem>>
    %269 = vector.broadcast %268 : f32 to vector<1x256xf32>
    %270 = arith.mulf %269, %267 : vector<1x256xf32>
    %271 = arith.addf %266, %270 : vector<1x256xf32>
    %272 = vector.extract_strided_slice %41 {offsets = [0, 96], sizes = [1, 256], strides = [1, 1]} : vector<2x512xf32> to vector<1x256xf32>
    %c10 = arith.constant 10 : index
    %273 = memref.load %arg7[%c10] : memref<99xf32, #tpu.memory_space<smem>>
    %274 = vector.broadcast %273 : f32 to vector<1x256xf32>
    %275 = arith.mulf %274, %272 : vector<1x256xf32>
    %276 = arith.addf %271, %275 : vector<1x256xf32>
    %277 = vector.extract_strided_slice %41 {offsets = [0, 112], sizes = [1, 256], strides = [1, 1]} : vector<2x512xf32> to vector<1x256xf32>
    %c17 = arith.constant 17 : index
    %278 = memref.load %arg7[%c17] : memref<99xf32, #tpu.memory_space<smem>>
    %279 = vector.broadcast %278 : f32 to vector<1x256xf32>
    %280 = arith.mulf %279, %277 : vector<1x256xf32>
    %281 = arith.addf %276, %280 : vector<1x256xf32>
    %282 = vector.extract_strided_slice %41 {offsets = [0, 128], sizes = [1, 256], strides = [1, 1]} : vector<2x512xf32> to vector<1x256xf32>
    %c24 = arith.constant 24 : index
    %283 = memref.load %arg7[%c24] : memref<99xf32, #tpu.memory_space<smem>>
    %284 = vector.broadcast %283 : f32 to vector<1x256xf32>
    %285 = arith.mulf %284, %282 : vector<1x256xf32>
    %286 = arith.addf %281, %285 : vector<1x256xf32>
    %287 = vector.extract_strided_slice %41 {offsets = [0, 144], sizes = [1, 256], strides = [1, 1]} : vector<2x512xf32> to vector<1x256xf32>
    %c31 = arith.constant 31 : index
    %288 = memref.load %arg7[%c31] : memref<99xf32, #tpu.memory_space<smem>>
    %289 = vector.broadcast %288 : f32 to vector<1x256xf32>
    %290 = arith.mulf %289, %287 : vector<1x256xf32>
    %291 = arith.addf %286, %290 : vector<1x256xf32>
    %292 = vector.extract_strided_slice %41 {offsets = [0, 160], sizes = [1, 256], strides = [1, 1]} : vector<2x512xf32> to vector<1x256xf32>
    %c38 = arith.constant 38 : index
    %293 = memref.load %arg7[%c38] : memref<99xf32, #tpu.memory_space<smem>>
    %294 = vector.broadcast %293 : f32 to vector<1x256xf32>
    %295 = arith.mulf %294, %292 : vector<1x256xf32>
    %296 = arith.addf %291, %295 : vector<1x256xf32>
    %297 = vector.extract_strided_slice %41 {offsets = [0, 176], sizes = [1, 256], strides = [1, 1]} : vector<2x512xf32> to vector<1x256xf32>
    %c45 = arith.constant 45 : index
    %298 = memref.load %arg7[%c45] : memref<99xf32, #tpu.memory_space<smem>>
    %299 = vector.broadcast %298 : f32 to vector<1x256xf32>
    %300 = arith.mulf %299, %297 : vector<1x256xf32>
    %301 = arith.addf %296, %300 : vector<1x256xf32>
    %302 = vector.extract_strided_slice %41 {offsets = [1, 80], sizes = [1, 256], strides = [1, 1]} : vector<2x512xf32> to vector<1x256xf32>
    %c52 = arith.constant 52 : index
    %303 = memref.load %arg7[%c52] : memref<99xf32, #tpu.memory_space<smem>>
    %304 = vector.broadcast %303 : f32 to vector<1x256xf32>
    %305 = arith.mulf %304, %302 : vector<1x256xf32>
    %306 = arith.addf %301, %305 : vector<1x256xf32>
    %307 = vector.extract_strided_slice %41 {offsets = [1, 96], sizes = [1, 256], strides = [1, 1]} : vector<2x512xf32> to vector<1x256xf32>
    %c59 = arith.constant 59 : index
    %308 = memref.load %arg7[%c59] : memref<99xf32, #tpu.memory_space<smem>>
    %309 = vector.broadcast %308 : f32 to vector<1x256xf32>
    %310 = arith.mulf %309, %307 : vector<1x256xf32>
    %311 = arith.addf %306, %310 : vector<1x256xf32>
    %312 = vector.extract_strided_slice %41 {offsets = [1, 112], sizes = [1, 256], strides = [1, 1]} : vector<2x512xf32> to vector<1x256xf32>
    %c66 = arith.constant 66 : index
    %313 = memref.load %arg7[%c66] : memref<99xf32, #tpu.memory_space<smem>>
    %314 = vector.broadcast %313 : f32 to vector<1x256xf32>
    %315 = arith.mulf %314, %312 : vector<1x256xf32>
    %316 = arith.addf %311, %315 : vector<1x256xf32>
    %317 = vector.extract_strided_slice %41 {offsets = [1, 128], sizes = [1, 256], strides = [1, 1]} : vector<2x512xf32> to vector<1x256xf32>
    %c73 = arith.constant 73 : index
    %318 = memref.load %arg7[%c73] : memref<99xf32, #tpu.memory_space<smem>>
    %319 = vector.broadcast %318 : f32 to vector<1x256xf32>
    %320 = arith.mulf %319, %317 : vector<1x256xf32>
    %321 = arith.addf %316, %320 : vector<1x256xf32>
    %322 = vector.extract_strided_slice %41 {offsets = [1, 144], sizes = [1, 256], strides = [1, 1]} : vector<2x512xf32> to vector<1x256xf32>
    %c80 = arith.constant 80 : index
    %323 = memref.load %arg7[%c80] : memref<99xf32, #tpu.memory_space<smem>>
    %324 = vector.broadcast %323 : f32 to vector<1x256xf32>
    %325 = arith.mulf %324, %322 : vector<1x256xf32>
    %326 = arith.addf %321, %325 : vector<1x256xf32>
    %327 = vector.extract_strided_slice %41 {offsets = [1, 160], sizes = [1, 256], strides = [1, 1]} : vector<2x512xf32> to vector<1x256xf32>
    %c87 = arith.constant 87 : index
    %328 = memref.load %arg7[%c87] : memref<99xf32, #tpu.memory_space<smem>>
    %329 = vector.broadcast %328 : f32 to vector<1x256xf32>
    %330 = arith.mulf %329, %327 : vector<1x256xf32>
    %331 = arith.addf %326, %330 : vector<1x256xf32>
    %332 = vector.extract_strided_slice %41 {offsets = [1, 176], sizes = [1, 256], strides = [1, 1]} : vector<2x512xf32> to vector<1x256xf32>
    %c94 = arith.constant 94 : index
    %333 = memref.load %arg7[%c94] : memref<99xf32, #tpu.memory_space<smem>>
    %334 = vector.broadcast %333 : f32 to vector<1x256xf32>
    %335 = arith.mulf %334, %332 : vector<1x256xf32>
    %336 = arith.addf %331, %335 : vector<1x256xf32>
    %337 = vector.extract_strided_slice %42 {offsets = [3, 0], sizes = [1, 256], strides = [1, 1]} : vector<7x256xf32> to vector<1x256xf32>
    %338 = arith.mulf %337, %336 : vector<1x256xf32>
    %339 = arith.addf %265, %338 : vector<1x256xf32>
    %cst_30 = arith.constant 0.000000e+00 : f32
    %340 = vector.broadcast %cst_30 : f32 to vector<1x256xf32>
    %341 = vector.extract_strided_slice %41 {offsets = [0, 81], sizes = [1, 256], strides = [1, 1]} : vector<2x512xf32> to vector<1x256xf32>
    %c4 = arith.constant 4 : index
    %342 = memref.load %arg7[%c4] : memref<99xf32, #tpu.memory_space<smem>>
    %343 = vector.broadcast %342 : f32 to vector<1x256xf32>
    %344 = arith.mulf %343, %341 : vector<1x256xf32>
    %345 = arith.addf %340, %344 : vector<1x256xf32>
    %346 = vector.extract_strided_slice %41 {offsets = [0, 97], sizes = [1, 256], strides = [1, 1]} : vector<2x512xf32> to vector<1x256xf32>
    %c11 = arith.constant 11 : index
    %347 = memref.load %arg7[%c11] : memref<99xf32, #tpu.memory_space<smem>>
    %348 = vector.broadcast %347 : f32 to vector<1x256xf32>
    %349 = arith.mulf %348, %346 : vector<1x256xf32>
    %350 = arith.addf %345, %349 : vector<1x256xf32>
    %351 = vector.extract_strided_slice %41 {offsets = [0, 113], sizes = [1, 256], strides = [1, 1]} : vector<2x512xf32> to vector<1x256xf32>
    %c18 = arith.constant 18 : index
    %352 = memref.load %arg7[%c18] : memref<99xf32, #tpu.memory_space<smem>>
    %353 = vector.broadcast %352 : f32 to vector<1x256xf32>
    %354 = arith.mulf %353, %351 : vector<1x256xf32>
    %355 = arith.addf %350, %354 : vector<1x256xf32>
    %356 = vector.extract_strided_slice %41 {offsets = [0, 129], sizes = [1, 256], strides = [1, 1]} : vector<2x512xf32> to vector<1x256xf32>
    %c25 = arith.constant 25 : index
    %357 = memref.load %arg7[%c25] : memref<99xf32, #tpu.memory_space<smem>>
    %358 = vector.broadcast %357 : f32 to vector<1x256xf32>
    %359 = arith.mulf %358, %356 : vector<1x256xf32>
    %360 = arith.addf %355, %359 : vector<1x256xf32>
    %361 = vector.extract_strided_slice %41 {offsets = [0, 145], sizes = [1, 256], strides = [1, 1]} : vector<2x512xf32> to vector<1x256xf32>
    %c32 = arith.constant 32 : index
    %362 = memref.load %arg7[%c32] : memref<99xf32, #tpu.memory_space<smem>>
    %363 = vector.broadcast %362 : f32 to vector<1x256xf32>
    %364 = arith.mulf %363, %361 : vector<1x256xf32>
    %365 = arith.addf %360, %364 : vector<1x256xf32>
    %366 = vector.extract_strided_slice %41 {offsets = [0, 161], sizes = [1, 256], strides = [1, 1]} : vector<2x512xf32> to vector<1x256xf32>
    %c39 = arith.constant 39 : index
    %367 = memref.load %arg7[%c39] : memref<99xf32, #tpu.memory_space<smem>>
    %368 = vector.broadcast %367 : f32 to vector<1x256xf32>
    %369 = arith.mulf %368, %366 : vector<1x256xf32>
    %370 = arith.addf %365, %369 : vector<1x256xf32>
    %371 = vector.extract_strided_slice %41 {offsets = [0, 177], sizes = [1, 256], strides = [1, 1]} : vector<2x512xf32> to vector<1x256xf32>
    %c46 = arith.constant 46 : index
    %372 = memref.load %arg7[%c46] : memref<99xf32, #tpu.memory_space<smem>>
    %373 = vector.broadcast %372 : f32 to vector<1x256xf32>
    %374 = arith.mulf %373, %371 : vector<1x256xf32>
    %375 = arith.addf %370, %374 : vector<1x256xf32>
    %376 = vector.extract_strided_slice %41 {offsets = [1, 81], sizes = [1, 256], strides = [1, 1]} : vector<2x512xf32> to vector<1x256xf32>
    %c53 = arith.constant 53 : index
    %377 = memref.load %arg7[%c53] : memref<99xf32, #tpu.memory_space<smem>>
    %378 = vector.broadcast %377 : f32 to vector<1x256xf32>
    %379 = arith.mulf %378, %376 : vector<1x256xf32>
    %380 = arith.addf %375, %379 : vector<1x256xf32>
    %381 = vector.extract_strided_slice %41 {offsets = [1, 97], sizes = [1, 256], strides = [1, 1]} : vector<2x512xf32> to vector<1x256xf32>
    %c60 = arith.constant 60 : index
    %382 = memref.load %arg7[%c60] : memref<99xf32, #tpu.memory_space<smem>>
    %383 = vector.broadcast %382 : f32 to vector<1x256xf32>
    %384 = arith.mulf %383, %381 : vector<1x256xf32>
    %385 = arith.addf %380, %384 : vector<1x256xf32>
    %386 = vector.extract_strided_slice %41 {offsets = [1, 113], sizes = [1, 256], strides = [1, 1]} : vector<2x512xf32> to vector<1x256xf32>
    %c67 = arith.constant 67 : index
    %387 = memref.load %arg7[%c67] : memref<99xf32, #tpu.memory_space<smem>>
    %388 = vector.broadcast %387 : f32 to vector<1x256xf32>
    %389 = arith.mulf %388, %386 : vector<1x256xf32>
    %390 = arith.addf %385, %389 : vector<1x256xf32>
    %391 = vector.extract_strided_slice %41 {offsets = [1, 129], sizes = [1, 256], strides = [1, 1]} : vector<2x512xf32> to vector<1x256xf32>
    %c74 = arith.constant 74 : index
    %392 = memref.load %arg7[%c74] : memref<99xf32, #tpu.memory_space<smem>>
    %393 = vector.broadcast %392 : f32 to vector<1x256xf32>
    %394 = arith.mulf %393, %391 : vector<1x256xf32>
    %395 = arith.addf %390, %394 : vector<1x256xf32>
    %396 = vector.extract_strided_slice %41 {offsets = [1, 145], sizes = [1, 256], strides = [1, 1]} : vector<2x512xf32> to vector<1x256xf32>
    %c81 = arith.constant 81 : index
    %397 = memref.load %arg7[%c81] : memref<99xf32, #tpu.memory_space<smem>>
    %398 = vector.broadcast %397 : f32 to vector<1x256xf32>
    %399 = arith.mulf %398, %396 : vector<1x256xf32>
    %400 = arith.addf %395, %399 : vector<1x256xf32>
    %401 = vector.extract_strided_slice %41 {offsets = [1, 161], sizes = [1, 256], strides = [1, 1]} : vector<2x512xf32> to vector<1x256xf32>
    %c88 = arith.constant 88 : index
    %402 = memref.load %arg7[%c88] : memref<99xf32, #tpu.memory_space<smem>>
    %403 = vector.broadcast %402 : f32 to vector<1x256xf32>
    %404 = arith.mulf %403, %401 : vector<1x256xf32>
    %405 = arith.addf %400, %404 : vector<1x256xf32>
    %406 = vector.extract_strided_slice %41 {offsets = [1, 177], sizes = [1, 256], strides = [1, 1]} : vector<2x512xf32> to vector<1x256xf32>
    %c95 = arith.constant 95 : index
    %407 = memref.load %arg7[%c95] : memref<99xf32, #tpu.memory_space<smem>>
    %408 = vector.broadcast %407 : f32 to vector<1x256xf32>
    %409 = arith.mulf %408, %406 : vector<1x256xf32>
    %410 = arith.addf %405, %409 : vector<1x256xf32>
    %411 = vector.extract_strided_slice %42 {offsets = [4, 0], sizes = [1, 256], strides = [1, 1]} : vector<7x256xf32> to vector<1x256xf32>
    %412 = arith.mulf %411, %410 : vector<1x256xf32>
    %413 = arith.addf %339, %412 : vector<1x256xf32>
    %cst_31 = arith.constant 0.000000e+00 : f32
    %414 = vector.broadcast %cst_31 : f32 to vector<1x256xf32>
    %415 = vector.extract_strided_slice %41 {offsets = [0, 82], sizes = [1, 256], strides = [1, 1]} : vector<2x512xf32> to vector<1x256xf32>
    %c5 = arith.constant 5 : index
    %416 = memref.load %arg7[%c5] : memref<99xf32, #tpu.memory_space<smem>>
    %417 = vector.broadcast %416 : f32 to vector<1x256xf32>
    %418 = arith.mulf %417, %415 : vector<1x256xf32>
    %419 = arith.addf %414, %418 : vector<1x256xf32>
    %420 = vector.extract_strided_slice %41 {offsets = [0, 98], sizes = [1, 256], strides = [1, 1]} : vector<2x512xf32> to vector<1x256xf32>
    %c12 = arith.constant 12 : index
    %421 = memref.load %arg7[%c12] : memref<99xf32, #tpu.memory_space<smem>>
    %422 = vector.broadcast %421 : f32 to vector<1x256xf32>
    %423 = arith.mulf %422, %420 : vector<1x256xf32>
    %424 = arith.addf %419, %423 : vector<1x256xf32>
    %425 = vector.extract_strided_slice %41 {offsets = [0, 114], sizes = [1, 256], strides = [1, 1]} : vector<2x512xf32> to vector<1x256xf32>
    %c19 = arith.constant 19 : index
    %426 = memref.load %arg7[%c19] : memref<99xf32, #tpu.memory_space<smem>>
    %427 = vector.broadcast %426 : f32 to vector<1x256xf32>
    %428 = arith.mulf %427, %425 : vector<1x256xf32>
    %429 = arith.addf %424, %428 : vector<1x256xf32>
    %430 = vector.extract_strided_slice %41 {offsets = [0, 130], sizes = [1, 256], strides = [1, 1]} : vector<2x512xf32> to vector<1x256xf32>
    %c26 = arith.constant 26 : index
    %431 = memref.load %arg7[%c26] : memref<99xf32, #tpu.memory_space<smem>>
    %432 = vector.broadcast %431 : f32 to vector<1x256xf32>
    %433 = arith.mulf %432, %430 : vector<1x256xf32>
    %434 = arith.addf %429, %433 : vector<1x256xf32>
    %435 = vector.extract_strided_slice %41 {offsets = [0, 146], sizes = [1, 256], strides = [1, 1]} : vector<2x512xf32> to vector<1x256xf32>
    %c33 = arith.constant 33 : index
    %436 = memref.load %arg7[%c33] : memref<99xf32, #tpu.memory_space<smem>>
    %437 = vector.broadcast %436 : f32 to vector<1x256xf32>
    %438 = arith.mulf %437, %435 : vector<1x256xf32>
    %439 = arith.addf %434, %438 : vector<1x256xf32>
    %440 = vector.extract_strided_slice %41 {offsets = [0, 162], sizes = [1, 256], strides = [1, 1]} : vector<2x512xf32> to vector<1x256xf32>
    %c40 = arith.constant 40 : index
    %441 = memref.load %arg7[%c40] : memref<99xf32, #tpu.memory_space<smem>>
    %442 = vector.broadcast %441 : f32 to vector<1x256xf32>
    %443 = arith.mulf %442, %440 : vector<1x256xf32>
    %444 = arith.addf %439, %443 : vector<1x256xf32>
    %445 = vector.extract_strided_slice %41 {offsets = [0, 178], sizes = [1, 256], strides = [1, 1]} : vector<2x512xf32> to vector<1x256xf32>
    %c47 = arith.constant 47 : index
    %446 = memref.load %arg7[%c47] : memref<99xf32, #tpu.memory_space<smem>>
    %447 = vector.broadcast %446 : f32 to vector<1x256xf32>
    %448 = arith.mulf %447, %445 : vector<1x256xf32>
    %449 = arith.addf %444, %448 : vector<1x256xf32>
    %450 = vector.extract_strided_slice %41 {offsets = [1, 82], sizes = [1, 256], strides = [1, 1]} : vector<2x512xf32> to vector<1x256xf32>
    %c54 = arith.constant 54 : index
    %451 = memref.load %arg7[%c54] : memref<99xf32, #tpu.memory_space<smem>>
    %452 = vector.broadcast %451 : f32 to vector<1x256xf32>
    %453 = arith.mulf %452, %450 : vector<1x256xf32>
    %454 = arith.addf %449, %453 : vector<1x256xf32>
    %455 = vector.extract_strided_slice %41 {offsets = [1, 98], sizes = [1, 256], strides = [1, 1]} : vector<2x512xf32> to vector<1x256xf32>
    %c61 = arith.constant 61 : index
    %456 = memref.load %arg7[%c61] : memref<99xf32, #tpu.memory_space<smem>>
    %457 = vector.broadcast %456 : f32 to vector<1x256xf32>
    %458 = arith.mulf %457, %455 : vector<1x256xf32>
    %459 = arith.addf %454, %458 : vector<1x256xf32>
    %460 = vector.extract_strided_slice %41 {offsets = [1, 114], sizes = [1, 256], strides = [1, 1]} : vector<2x512xf32> to vector<1x256xf32>
    %c68 = arith.constant 68 : index
    %461 = memref.load %arg7[%c68] : memref<99xf32, #tpu.memory_space<smem>>
    %462 = vector.broadcast %461 : f32 to vector<1x256xf32>
    %463 = arith.mulf %462, %460 : vector<1x256xf32>
    %464 = arith.addf %459, %463 : vector<1x256xf32>
    %465 = vector.extract_strided_slice %41 {offsets = [1, 130], sizes = [1, 256], strides = [1, 1]} : vector<2x512xf32> to vector<1x256xf32>
    %c75 = arith.constant 75 : index
    %466 = memref.load %arg7[%c75] : memref<99xf32, #tpu.memory_space<smem>>
    %467 = vector.broadcast %466 : f32 to vector<1x256xf32>
    %468 = arith.mulf %467, %465 : vector<1x256xf32>
    %469 = arith.addf %464, %468 : vector<1x256xf32>
    %470 = vector.extract_strided_slice %41 {offsets = [1, 146], sizes = [1, 256], strides = [1, 1]} : vector<2x512xf32> to vector<1x256xf32>
    %c82 = arith.constant 82 : index
    %471 = memref.load %arg7[%c82] : memref<99xf32, #tpu.memory_space<smem>>
    %472 = vector.broadcast %471 : f32 to vector<1x256xf32>
    %473 = arith.mulf %472, %470 : vector<1x256xf32>
    %474 = arith.addf %469, %473 : vector<1x256xf32>
    %475 = vector.extract_strided_slice %41 {offsets = [1, 162], sizes = [1, 256], strides = [1, 1]} : vector<2x512xf32> to vector<1x256xf32>
    %c89 = arith.constant 89 : index
    %476 = memref.load %arg7[%c89] : memref<99xf32, #tpu.memory_space<smem>>
    %477 = vector.broadcast %476 : f32 to vector<1x256xf32>
    %478 = arith.mulf %477, %475 : vector<1x256xf32>
    %479 = arith.addf %474, %478 : vector<1x256xf32>
    %480 = vector.extract_strided_slice %41 {offsets = [1, 178], sizes = [1, 256], strides = [1, 1]} : vector<2x512xf32> to vector<1x256xf32>
    %c96 = arith.constant 96 : index
    %481 = memref.load %arg7[%c96] : memref<99xf32, #tpu.memory_space<smem>>
    %482 = vector.broadcast %481 : f32 to vector<1x256xf32>
    %483 = arith.mulf %482, %480 : vector<1x256xf32>
    %484 = arith.addf %479, %483 : vector<1x256xf32>
    %485 = vector.extract_strided_slice %42 {offsets = [5, 0], sizes = [1, 256], strides = [1, 1]} : vector<7x256xf32> to vector<1x256xf32>
    %486 = arith.mulf %485, %484 : vector<1x256xf32>
    %487 = arith.addf %413, %486 : vector<1x256xf32>
    %cst_32 = arith.constant 0.000000e+00 : f32
    %488 = vector.broadcast %cst_32 : f32 to vector<1x256xf32>
    %489 = vector.extract_strided_slice %41 {offsets = [0, 83], sizes = [1, 256], strides = [1, 1]} : vector<2x512xf32> to vector<1x256xf32>
    %c6 = arith.constant 6 : index
    %490 = memref.load %arg7[%c6] : memref<99xf32, #tpu.memory_space<smem>>
    %491 = vector.broadcast %490 : f32 to vector<1x256xf32>
    %492 = arith.mulf %491, %489 : vector<1x256xf32>
    %493 = arith.addf %488, %492 : vector<1x256xf32>
    %494 = vector.extract_strided_slice %41 {offsets = [0, 99], sizes = [1, 256], strides = [1, 1]} : vector<2x512xf32> to vector<1x256xf32>
    %c13 = arith.constant 13 : index
    %495 = memref.load %arg7[%c13] : memref<99xf32, #tpu.memory_space<smem>>
    %496 = vector.broadcast %495 : f32 to vector<1x256xf32>
    %497 = arith.mulf %496, %494 : vector<1x256xf32>
    %498 = arith.addf %493, %497 : vector<1x256xf32>
    %499 = vector.extract_strided_slice %41 {offsets = [0, 115], sizes = [1, 256], strides = [1, 1]} : vector<2x512xf32> to vector<1x256xf32>
    %c20 = arith.constant 20 : index
    %500 = memref.load %arg7[%c20] : memref<99xf32, #tpu.memory_space<smem>>
    %501 = vector.broadcast %500 : f32 to vector<1x256xf32>
    %502 = arith.mulf %501, %499 : vector<1x256xf32>
    %503 = arith.addf %498, %502 : vector<1x256xf32>
    %504 = vector.extract_strided_slice %41 {offsets = [0, 131], sizes = [1, 256], strides = [1, 1]} : vector<2x512xf32> to vector<1x256xf32>
    %c27 = arith.constant 27 : index
    %505 = memref.load %arg7[%c27] : memref<99xf32, #tpu.memory_space<smem>>
    %506 = vector.broadcast %505 : f32 to vector<1x256xf32>
    %507 = arith.mulf %506, %504 : vector<1x256xf32>
    %508 = arith.addf %503, %507 : vector<1x256xf32>
    %509 = vector.extract_strided_slice %41 {offsets = [0, 147], sizes = [1, 256], strides = [1, 1]} : vector<2x512xf32> to vector<1x256xf32>
    %c34 = arith.constant 34 : index
    %510 = memref.load %arg7[%c34] : memref<99xf32, #tpu.memory_space<smem>>
    %511 = vector.broadcast %510 : f32 to vector<1x256xf32>
    %512 = arith.mulf %511, %509 : vector<1x256xf32>
    %513 = arith.addf %508, %512 : vector<1x256xf32>
    %514 = vector.extract_strided_slice %41 {offsets = [0, 163], sizes = [1, 256], strides = [1, 1]} : vector<2x512xf32> to vector<1x256xf32>
    %c41 = arith.constant 41 : index
    %515 = memref.load %arg7[%c41] : memref<99xf32, #tpu.memory_space<smem>>
    %516 = vector.broadcast %515 : f32 to vector<1x256xf32>
    %517 = arith.mulf %516, %514 : vector<1x256xf32>
    %518 = arith.addf %513, %517 : vector<1x256xf32>
    %519 = vector.extract_strided_slice %41 {offsets = [0, 179], sizes = [1, 256], strides = [1, 1]} : vector<2x512xf32> to vector<1x256xf32>
    %c48 = arith.constant 48 : index
    %520 = memref.load %arg7[%c48] : memref<99xf32, #tpu.memory_space<smem>>
    %521 = vector.broadcast %520 : f32 to vector<1x256xf32>
    %522 = arith.mulf %521, %519 : vector<1x256xf32>
    %523 = arith.addf %518, %522 : vector<1x256xf32>
    %524 = vector.extract_strided_slice %41 {offsets = [1, 83], sizes = [1, 256], strides = [1, 1]} : vector<2x512xf32> to vector<1x256xf32>
    %c55 = arith.constant 55 : index
    %525 = memref.load %arg7[%c55] : memref<99xf32, #tpu.memory_space<smem>>
    %526 = vector.broadcast %525 : f32 to vector<1x256xf32>
    %527 = arith.mulf %526, %524 : vector<1x256xf32>
    %528 = arith.addf %523, %527 : vector<1x256xf32>
    %529 = vector.extract_strided_slice %41 {offsets = [1, 99], sizes = [1, 256], strides = [1, 1]} : vector<2x512xf32> to vector<1x256xf32>
    %c62 = arith.constant 62 : index
    %530 = memref.load %arg7[%c62] : memref<99xf32, #tpu.memory_space<smem>>
    %531 = vector.broadcast %530 : f32 to vector<1x256xf32>
    %532 = arith.mulf %531, %529 : vector<1x256xf32>
    %533 = arith.addf %528, %532 : vector<1x256xf32>
    %534 = vector.extract_strided_slice %41 {offsets = [1, 115], sizes = [1, 256], strides = [1, 1]} : vector<2x512xf32> to vector<1x256xf32>
    %c69 = arith.constant 69 : index
    %535 = memref.load %arg7[%c69] : memref<99xf32, #tpu.memory_space<smem>>
    %536 = vector.broadcast %535 : f32 to vector<1x256xf32>
    %537 = arith.mulf %536, %534 : vector<1x256xf32>
    %538 = arith.addf %533, %537 : vector<1x256xf32>
    %539 = vector.extract_strided_slice %41 {offsets = [1, 131], sizes = [1, 256], strides = [1, 1]} : vector<2x512xf32> to vector<1x256xf32>
    %c76 = arith.constant 76 : index
    %540 = memref.load %arg7[%c76] : memref<99xf32, #tpu.memory_space<smem>>
    %541 = vector.broadcast %540 : f32 to vector<1x256xf32>
    %542 = arith.mulf %541, %539 : vector<1x256xf32>
    %543 = arith.addf %538, %542 : vector<1x256xf32>
    %544 = vector.extract_strided_slice %41 {offsets = [1, 147], sizes = [1, 256], strides = [1, 1]} : vector<2x512xf32> to vector<1x256xf32>
    %c83 = arith.constant 83 : index
    %545 = memref.load %arg7[%c83] : memref<99xf32, #tpu.memory_space<smem>>
    %546 = vector.broadcast %545 : f32 to vector<1x256xf32>
    %547 = arith.mulf %546, %544 : vector<1x256xf32>
    %548 = arith.addf %543, %547 : vector<1x256xf32>
    %549 = vector.extract_strided_slice %41 {offsets = [1, 163], sizes = [1, 256], strides = [1, 1]} : vector<2x512xf32> to vector<1x256xf32>
    %c90 = arith.constant 90 : index
    %550 = memref.load %arg7[%c90] : memref<99xf32, #tpu.memory_space<smem>>
    %551 = vector.broadcast %550 : f32 to vector<1x256xf32>
    %552 = arith.mulf %551, %549 : vector<1x256xf32>
    %553 = arith.addf %548, %552 : vector<1x256xf32>
    %554 = vector.extract_strided_slice %41 {offsets = [1, 179], sizes = [1, 256], strides = [1, 1]} : vector<2x512xf32> to vector<1x256xf32>
    %c97 = arith.constant 97 : index
    %555 = memref.load %arg7[%c97] : memref<99xf32, #tpu.memory_space<smem>>
    %556 = vector.broadcast %555 : f32 to vector<1x256xf32>
    %557 = arith.mulf %556, %554 : vector<1x256xf32>
    %558 = arith.addf %553, %557 : vector<1x256xf32>
    %559 = vector.extract_strided_slice %42 {offsets = [6, 0], sizes = [1, 256], strides = [1, 1]} : vector<7x256xf32> to vector<1x256xf32>
    %560 = arith.mulf %559, %558 : vector<1x256xf32>
    %561 = arith.addf %487, %560 : vector<1x256xf32>
    %c98 = arith.constant 98 : index
    %562 = memref.load %arg7[%c98] : memref<99xf32, #tpu.memory_space<smem>>
    %563 = vector.broadcast %562 : f32 to vector<1x256xf32>
    %564 = arith.addf %561, %563 : vector<1x256xf32>
    %cst_33 = arith.constant 0.000000e+00 : f32
    %565 = vector.broadcast %cst_33 : f32 to vector<1x256xf32>
    %566 = arith.subf %565, %564 : vector<1x256xf32>
    %567 = math.exp %566 : vector<1x256xf32>
    %cst_34 = arith.constant 1.000000e+00 : f32
    %568 = vector.broadcast %cst_34 : f32 to vector<1x256xf32>
    %569 = arith.addf %568, %567 : vector<1x256xf32>
    %cst_35 = arith.constant 1.000000e+00 : f32
    %570 = vector.broadcast %cst_35 : f32 to vector<1x256xf32>
    %571 = arith.divf %570, %569 : vector<1x256xf32>
    %572 = vector.broadcast %571 : vector<1x256xf32> to vector<32x256xf32>
    %573 = arith.mulf %32, %572 : vector<32x256xf32>
    %c0_36 = arith.constant 0 : index
    %c0_37 = arith.constant 0 : index
    %c0_38 = arith.constant 0 : index
    %574 = vector.load %arg8[%c0_36, %c0_37, %c0_38] : memref<1x32x256xf32, #tpu.memory_space<vmem>>, vector<1x32x256xf32>
    %575 = vector.shape_cast %574 : vector<1x32x256xf32> to vector<32x256xf32>
    %576 = vector.shape_cast %573 : vector<32x256xf32> to vector<1x32x256xf32>
    tpu.vector_store %arg8[%c0_36, %c0_37, %c0_38], %576 {strides = array<i32>} : memref<1x32x256xf32, #tpu.memory_space<vmem>>, vector<1x32x256xf32>,
    return
  }
  func.func @transform_0(%arg0: i32) -> (i32, i32, i32) {
    %c0_i32 = arith.constant 0 : i32
    %c0_i32_0 = arith.constant 0 : i32
    %c0_i32_1 = arith.constant 0 : i32
    return %arg0, %c0_i32, %c0_i32_0 : i32, i32, i32
  }
  func.func @transform_1(%arg0: i32) -> (i32, i32) {
    %c0_i32 = arith.constant 0 : i32
    %c0_i32_0 = arith.constant 0 : i32
    %c0_i32_1 = arith.constant 0 : i32
    return %c0_i32, %c0_i32_0 : i32, i32
  }
  func.func @transform_2(%arg0: i32) -> (i32, i32) {
    %c0_i32 = arith.constant 0 : i32
    %c0_i32_0 = arith.constant 0 : i32
    %c0_i32_1 = arith.constant 0 : i32
    return %c0_i32, %c0_i32_0 : i32, i32
  }
  func.func @transform_3(%arg0: i32) -> (i32, i32) {
    %c0_i32 = arith.constant 0 : i32
    %c0_i32_0 = arith.constant 0 : i32
    %c0_i32_1 = arith.constant 0 : i32
    return %c0_i32, %c0_i32_0 : i32, i32
  }
  func.func @transform_4(%arg0: i32) -> (i32, i32) {
    %c0_i32 = arith.constant 0 : i32
    %c0_i32_0 = arith.constant 0 : i32
    %c0_i32_1 = arith.constant 0 : i32
    return %c0_i32, %c0_i32_0 : i32, i32
  }
  func.func @transform_5(%arg0: i32) -> (i32, i32) {
    %c0_i32 = arith.constant 0 : i32
    %c0_i32_0 = arith.constant 0 : i32
    %c0_i32_1 = arith.constant 0 : i32
    return %c0_i32, %c0_i32_0 : i32, i32
  }
  func.func @transform_6(%arg0: i32) -> i32 {
    %c0_i32 = arith.constant 0 : i32
    %c0_i32_0 = arith.constant 0 : i32
    return %c0_i32 : i32
  }
  func.func @transform_7(%arg0: i32) -> (i32, i32, i32) {
    %c0_i32 = arith.constant 0 : i32
    %c0_i32_0 = arith.constant 0 : i32
    %c0_i32_1 = arith.constant 0 : i32
    return %arg0, %c0_i32, %c0_i32_0 : i32, i32, i32
  }
}

</mosaic_0001>

<llo_original>
// kernel: tpu_custom_call.1
$region0: #{tpu_custom_call.1}
  #allocation0 [shape = 'u32[]', space=smem, size = 0x4, offset = 0x4, fixed_abs, tag = 'smem constant byte address 0x4 - core index']
  #allocation1 [shape = 'u32[144,128]{1,0:T(1,128)}', space=vmem, size = 0x12000, scoped, tag = 'internal scratch']
  %s0 = inlined_call_operand.hbm [shape: f32[2,32,256], index: 0, kind: input, shape index: {}]
  %s1 = inlined_call_operand.vmem [shape: f32[2,32], index: 1, kind: input, shape index: {}]
  %s2 = inlined_call_operand.vmem [shape: f32[2,1], index: 2, kind: input, shape index: {}]
  %s3 = inlined_call_operand.vmem [shape: f32[32,2], index: 3, kind: input, shape index: {}]
  %s4 = inlined_call_operand.vmem [shape: f32[32,1], index: 4, kind: input, shape index: {}]
  %s5 = inlined_call_operand.vmem [shape: f32[7,256], index: 5, kind: input, shape index: {}]
  %s6 = inlined_call_operand.vmem [shape: f32[99], index: 6, kind: input, shape index: {}]
  %s7 = inlined_call_operand.hbm [shape: f32[2,32,256], index: 7, kind: output, shape index: {}]
  %s8 = sld [smem:[#allocation0]]
  $region69: #{tpu_custom_call.1} parent=0
    _
  %s10 = ssub.s32 1, %s8
  %s11 = scalar_select 0, %s10, %s8
  $region1: #{tpu_custom_call.1} parent=0
    #allocation2 [shape = 'u8[65536]{0}', space=vmem, size = 0x10000, scoped, tag = 'input window, operand 0']
    #allocation3 [shape = 's32[2]{0}', space=sflag, size = 0x8, scoped, tag = 'scoped memory for tpu_custom_call.1']
    #allocation4 [shape = 's32[2]{0}', space=sflag, size = 0x8, scoped, tag = 'scoped memory for tpu_custom_call.1']
    #allocation5 [shape = 's32[2]{0}', space=sflag, size = 0x8, scoped, tag = 'scoped memory for tpu_custom_call.1']
    #allocation6 [shape = 'u8[512]{0}', space=smem, size = 0x200, scoped, tag = 'input window, operand 6, single buffered']
    #allocation7 [shape = 'u8[65536]{0}', space=vmem, size = 0x10000, scoped, tag = 'output window, operand 0']
    %12 = vsyncpa [#allocation3], 0
    %s13 = scalar_lea.sflag [#allocation3], 1
    %14 = vsyncpa %s13, 0
    %15 = vsyncpa [#allocation5], 0
    %16 = vsyncpa [#allocation4], 0
    %s17 = scalar_lea.sflag [#allocation4], 1
    %18 = vsyncpa %s17, 0
    loop: start=0, step=1, limit=4
    $region2: #{tpu_custom_call.1} parent=1 // loop_pre_header
      _
    $region3: #{tpu_custom_call.1} parent=1 // loop_header
      %s20 = sphi 0, %s24
      %p21 = scmp.ge.s32.totalorder %s20, 4
      %s30 = sphi 0, %s32
      %s33 = sphi 0, %s30
      %s34 = sphi 0, %s33
      %s50 = sphi 0, %s34
      %s54 = sphi 0, %s54
      %s56 = sphi 0, %s54
      %s57 = sphi 0, %s56
      %s71 = sphi 0, %s57
      %s75 = sphi 0, %s75
      %s77 = sphi 0, %s75
      %s78 = sphi 0, %s77
      %s92 = sphi 0, %s78
      %s96 = sphi 0, %s96
      %s98 = sphi 0, %s96
      %s99 = sphi 0, %s98
      %s113 = sphi 0, %s99
      %s117 = sphi 0, %s117
      %s119 = sphi 0, %s117
      %s120 = sphi 0, %s119
      %s134 = sphi 0, %s120
      %s138 = sphi 0, %s138
      %s140 = sphi 0, %s138
      %s141 = sphi 0, %s140
      %s155 = sphi 0, %s141
      %s159 = sphi 0, %s159
      %s161 = sphi 0, %s159
      %s162 = sphi 0, %s161
      %s176 = sphi 0, %s162
      %s182 = sphi 0, %s184
      %s185 = sphi 0, %s182
      %s186 = sphi 0, %s185
      %s202 = sphi 0, %s186
    $region4: #{tpu_custom_call.1} parent=1 // loop_header_branch
      %23 = sbr.rel (%p21) target = $region8
    $region5: #{tpu_custom_call.1} parent=1 // loop_body
      %s25 = ssub.s32 %s20, 1
      %s26 = ssub.s32 %s20, 2
      %s27 = sadd.s32 %s20, 1
      %s28 = ssub.s32 %s20, %s27
      %p29 = scmp.eq.s32.totalorder %s28, 0
      %s31 = sadd.s32 %s30, 1
      %s32 = scalar_select %p29, %s30, %s31
      %p35 = pneg %p29
      %p36 = scmp.eq.s32.totalorder %s20, 1
      %p37 = por %p35, %p36
      %p38 = scmp.ne.s32.totalorder %s30, %s33
      %p39 = scmp.eq.s32.totalorder %s20, 0
      %p40 = por %p38, %p39
      %p41 = scmp.ne.s32.totalorder %s30, %s33
      %p42 = scmp.eq.s32.totalorder %s25, 1
      %p43 = por %p41, %p42
      %p44 = scmp.ne.s32.totalorder %s33, %s34
      %p45 = scmp.eq.s32.totalorder %s25, 0
      %p46 = por %p44, %p45
      %p47 = scmp.ne.s32.totalorder %s33, %s34
      %p48 = scmp.eq.s32.totalorder %s26, 1
      %p49 = por %p47, %p48
      %p51 = scmp.ne.s32.totalorder %s34, %s50
      %p52 = scmp.eq.s32.totalorder %s26, 0
      %p53 = por %p51, %p52
      %s55 = sadd.s32 %s54, 1
      %p58 = scmp.eq.s32.totalorder %s20, 1
      %p59 = scmp.ne.s32.totalorder %s54, %s56
      %p60 = scmp.eq.s32.totalorder %s20, 0
      %p61 = por %p59, %p60
      %p62 = scmp.ne.s32.totalorder %s54, %s56
      %p63 = scmp.eq.s32.totalorder %s25, 1
      %p64 = por %p62, %p63
      %p65 = scmp.ne.s32.totalorder %s56, %s57
      %p66 = scmp.eq.s32.totalorder %s25, 0
      %p67 = por %p65, %p66
      %p68 = scmp.ne.s32.totalorder %s56, %s57
      %p69 = scmp.eq.s32.totalorder %s26, 1
      %p70 = por %p68, %p69
      %p72 = scmp.ne.s32.totalorder %s57, %s71
      %p73 = scmp.eq.s32.totalorder %s26, 0
      %p74 = por %p72, %p73
      %s76 = sadd.s32 %s75, 1
      %p79 = scmp.eq.s32.totalorder %s20, 1
      %p80 = scmp.ne.s32.totalorder %s75, %s77
      %p81 = scmp.eq.s32.totalorder %s20, 0
      %p82 = por %p80, %p81
      %p83 = scmp.ne.s32.totalorder %s75, %s77
      %p84 = scmp.eq.s32.totalorder %s25, 1
      %p85 = por %p83, %p84
      %p86 = scmp.ne.s32.totalorder %s77, %s78
      %p87 = scmp.eq.s32.totalorder %s25, 0
      %p88 = por %p86, %p87
      %p89 = scmp.ne.s32.totalorder %s77, %s78
      %p90 = scmp.eq.s32.totalorder %s26, 1
      %p91 = por %p89, %p90
      %p93 = scmp.ne.s32.totalorder %s78, %s92
      %p94 = scmp.eq.s32.totalorder %s26, 0
      %p95 = por %p93, %p94
      %s97 = sadd.s32 %s96, 1
      %p100 = scmp.eq.s32.totalorder %s20, 1
      %p101 = scmp.ne.s32.totalorder %s96, %s98
      %p102 = scmp.eq.s32.totalorder %s20, 0
      %p103 = por %p101, %p102
      %p104 = scmp.ne.s32.totalorder %s96, %s98
      %p105 = scmp.eq.s32.totalorder %s25, 1
      %p106 = por %p104, %p105
      %p107 = scmp.ne.s32.totalorder %s98, %s99
      %p108 = scmp.eq.s32.totalorder %s25, 0
      %p109 = por %p107, %p108
      %p110 = scmp.ne.s32.totalorder %s98, %s99
      %p111 = scmp.eq.s32.totalorder %s26, 1
      %p112 = por %p110, %p111
      %p114 = scmp.ne.s32.totalorder %s99, %s113
      %p115 = scmp.eq.s32.totalorder %s26, 0
      %p116 = por %p114, %p115
      %s118 = sadd.s32 %s117, 1
      %p121 = scmp.eq.s32.totalorder %s20, 1
      %p122 = scmp.ne.s32.totalorder %s117, %s119
      %p123 = scmp.eq.s32.totalorder %s20, 0
      %p124 = por %p122, %p123
      %p125 = scmp.ne.s32.totalorder %s117, %s119
      %p126 = scmp.eq.s32.totalorder %s25, 1
      %p127 = por %p125, %p126
      %p128 = scmp.ne.s32.totalorder %s119, %s120
      %p129 = scmp.eq.s32.totalorder %s25, 0
      %p130 = por %p128, %p129
      %p131 = scmp.ne.s32.totalorder %s119, %s120
      %p132 = scmp.eq.s32.totalorder %s26, 1
      %p133 = por %p131, %p132
      %p135 = scmp.ne.s32.totalorder %s120, %s134
      %p136 = scmp.eq.s32.totalorder %s26, 0
      %p137 = por %p135, %p136
      %s139 = sadd.s32 %s138, 1
      %p142 = scmp.eq.s32.totalorder %s20, 1
      %p143 = scmp.ne.s32.totalorder %s138, %s140
      %p144 = scmp.eq.s32.totalorder %s20, 0
      %p145 = por %p143, %p144
      %p146 = scmp.ne.s32.totalorder %s138, %s140
      %p147 = scmp.eq.s32.totalorder %s25, 1
      %p148 = por %p146, %p147
      %p149 = scmp.ne.s32.totalorder %s140, %s141
      %p150 = scmp.eq.s32.totalorder %s25, 0
      %p151 = por %p149, %p150
      %p152 = scmp.ne.s32.totalorder %s140, %s141
      %p153 = scmp.eq.s32.totalorder %s26, 1
      %p154 = por %p152, %p153
      %p156 = scmp.ne.s32.totalorder %s141, %s155
      %p157 = scmp.eq.s32.totalorder %s26, 0
      %p158 = por %p156, %p157
      %s160 = sadd.s32 %s159, 1
      %p163 = scmp.eq.s32.totalorder %s20, 1
      %p164 = scmp.ne.s32.totalorder %s159, %s161
      %p165 = scmp.eq.s32.totalorder %s20, 0
      %p166 = por %p164, %p165
      %p167 = scmp.ne.s32.totalorder %s159, %s161
      %p168 = scmp.eq.s32.totalorder %s25, 1
      %p169 = por %p167, %p168
      %p170 = scmp.ne.s32.totalorder %s161, %s162
      %p171 = scmp.eq.s32.totalorder %s25, 0
      %p172 = por %p170, %p171
      %p173 = scmp.ne.s32.totalorder %s161, %s162
      %p174 = scmp.eq.s32.totalorder %s26, 1
      %p175 = por %p173, %p174
      %p177 = scmp.ne.s32.totalorder %s162, %s176
      %p178 = scmp.eq.s32.totalorder %s26, 0
      %p179 = por %p177, %p178
      %s180 = ssub.s32 %s20, %s27
      %p181 = scmp.eq.s32.totalorder %s180, 0
      %s183 = sadd.s32 %s182, 1
      %s184 = scalar_select %p181, %s182, %s183
      %p187 = pneg %p181
      %p188 = scmp.eq.s32.totalorder %s20, 1
      %p189 = por %p187, %p188
      %p190 = scmp.ne.s32.totalorder %s182, %s185
      %p191 = scmp.eq.s32.totalorder %s20, 0
      %p192 = por %p190, %p191
      %p193 = scmp.ne.s32.totalorder %s182, %s185
      %p194 = scmp.eq.s32.totalorder %s25, 1
      %p195 = por %p193, %p194
      %p196 = scmp.ne.s32.totalorder %s185, %s186
      %p197 = scmp.eq.s32.totalorder %s25, 0
      %p198 = por %p196, %p197
      %p199 = scmp.ne.s32.totalorder %s185, %s186
      %p200 = scmp.eq.s32.totalorder %s26, 1
      %p201 = por %p199, %p200
      %p203 = scmp.ne.s32.totalorder %s186, %s202
      %p204 = scmp.eq.s32.totalorder %s26, 0
      %p205 = por %p203, %p204
      %p206 = scmp.le.s32.totalorder 1, %s20
      %p207 = scmp.lt.s32.totalorder %s20, 3
      %p208 = pnand %p206, %p207
      %p209 = pneg %p208
      // Predicated region
      $region9: #{tpu_custom_call.1} parent=5 // pred_check
        _
      $region10: #{tpu_custom_call.1} parent=5 // pred_check_branch
        %211 = sbr.rel (%p208) target = $region12
      $region11: #{tpu_custom_call.1} parent=5 // pred_region
        %s212 = ssub.s32 %s20, 1
        // Predicated region
        $region13: #{tpu_custom_call.1} parent=11 // pred_check
          %p213 = pneg %p67
        $region14: #{tpu_custom_call.1} parent=11 // pred_check_branch
          %215 = sbr.rel (%p213) target = $region16
        $region15: #{tpu_custom_call.1} parent=11 // pred_region
          _
        $region16: #{tpu_custom_call.1} parent=11 // pred_fallthru
          _
        // Predicated region
        $region17: #{tpu_custom_call.1} parent=11 // pred_check
          %p216 = pneg %p88
        $region18: #{tpu_custom_call.1} parent=11 // pred_check_branch
          %218 = sbr.rel (%p216) target = $region20
        $region19: #{tpu_custom_call.1} parent=11 // pred_region
          _
        $region20: #{tpu_custom_call.1} parent=11 // pred_fallthru
          _
        // Predicated region
        $region21: #{tpu_custom_call.1} parent=11 // pred_check
          %p219 = pneg %p109
        $region22: #{tpu_custom_call.1} parent=11 // pred_check_branch
          %221 = sbr.rel (%p219) target = $region24
        $region23: #{tpu_custom_call.1} parent=11 // pred_region
          _
        $region24: #{tpu_custom_call.1} parent=11 // pred_fallthru
          _
        // Predicated region
        $region25: #{tpu_custom_call.1} parent=11 // pred_check
          %p222 = pneg %p130
        $region26: #{tpu_custom_call.1} parent=11 // pred_check_branch
          %224 = sbr.rel (%p222) target = $region28
        $region27: #{tpu_custom_call.1} parent=11 // pred_region
          _
        $region28: #{tpu_custom_call.1} parent=11 // pred_fallthru
          _
        // Predicated region
        $region29: #{tpu_custom_call.1} parent=11 // pred_check
          %p225 = pneg %p151
        $region30: #{tpu_custom_call.1} parent=11 // pred_check_branch
          %227 = sbr.rel (%p225) target = $region32
        $region31: #{tpu_custom_call.1} parent=11 // pred_region
          _
        $region32: #{tpu_custom_call.1} parent=11 // pred_fallthru
          _
        // Predicated region
        $region33: #{tpu_custom_call.1} parent=11 // pred_check
          %p228 = pneg %p172
        $region34: #{tpu_custom_call.1} parent=11 // pred_check_branch
          %230 = sbr.rel (%p228) target = $region36
        $region35: #{tpu_custom_call.1} parent=11 // pred_region
          %s232 = ssub.s32 16, 16
          %233 = vsyncadd [#allocation5], %s232
          %s235 = sshll.u32 %s6, 4
          %s236 = int_to_ptr.vmem [resolvable:$true] %s235
          %238 = dma.vmem_to_smem %s236, 16, [#allocation6], [#allocation5]
        $region36: #{tpu_custom_call.1} parent=11 // pred_fallthru
          _
      $region12: #{tpu_custom_call.1} parent=5 // pred_fallthru
        _
      %p239 = scmp.lt.s32.totalorder %s20, 2
      // Predicated region
      $region37: #{tpu_custom_call.1} parent=5 // pred_check
        %p240 = pneg %p239
      $region38: #{tpu_custom_call.1} parent=5 // pred_check_branch
        %242 = sbr.rel (%p240) target = $region40
      $region39: #{tpu_custom_call.1} parent=5 // pred_region
        // Predicated region
        $region41: #{tpu_custom_call.1} parent=39 // pred_check
          %p243 = pneg %p40
        $region42: #{tpu_custom_call.1} parent=39 // pred_check_branch
          %245 = sbr.rel (%p243) target = $region44
        $region43: #{tpu_custom_call.1} parent=39 // pred_region
          %s246 = sand.u32 %s30, 1
          %s247 = scalar_lea.sflag [#allocation3], %s246
          %s248 = sand.u32 %s30, 1
          %s249 = smul.addr %s248, 64
          %s250 = scalar_lea.vmem [#allocation2], %s249
          %s252 = ssub.s32 1024, 1024
          %253 = vsyncadd %s247, %s252
          %s254 = smul.addr %s20, 8
          %s255 = smul.addr %s254, 128
          %s256 = scalar_lea.hbm %s0, %s255
          %s257 = sshll.u32 %s250, 4
          %s258 = int_to_ptr.vmem [resolvable:$true] %s257
          %263 = dma.hbm_to_vmem [thread:$0]  %s256, 1024, %s258, %s247, 256, 256, 16
        $region44: #{tpu_custom_call.1} parent=39 // pred_fallthru
          _
      $region40: #{tpu_custom_call.1} parent=5 // pred_fallthru
        _
      %p264 = scmp.le.s32.totalorder 1, %s20
      %p265 = scmp.lt.s32.totalorder %s20, 3
      %p266 = pnand %p264, %p265
      %p267 = pneg %p266
      // Predicated region
      $region45: #{tpu_custom_call.1} parent=5 // pred_check
        _
      $region46: #{tpu_custom_call.1} parent=5 // pred_check_branch
        %269 = sbr.rel (%p266) target = $region48
      $region47: #{tpu_custom_call.1} parent=5 // pred_region
        %s270 = ssub.s32 %s20, 1
        %s271 = sand.u32 %s33, 1
        %s272 = scalar_lea.sflag [#allocation3], %s271
        %s273 = sand.u32 %s33, 1
        %s274 = smul.addr %s273, 64
        %s275 = scalar_lea.vmem [#allocation2], %s274
        // Predicated region
        $region49: #{tpu_custom_call.1} parent=47 // pred_check
          %p276 = pneg %p46
        $region50: #{tpu_custom_call.1} parent=47 // pred_check_branch
          %278 = sbr.rel (%p276) target = $region52
        $region51: #{tpu_custom_call.1} parent=47 // pred_region
          %279 = dma.done %s272, 1024
        $region52: #{tpu_custom_call.1} parent=47 // pred_fallthru
          _
        // Predicated region
        $region53: #{tpu_custom_call.1} parent=47 // pred_check
          %p280 = pneg %p172
        $region54: #{tpu_custom_call.1} parent=47 // pred_check_branch
          %282 = sbr.rel (%p280) target = $region56
        $region55: #{tpu_custom_call.1} parent=47 // pred_region
          %283 = dma.done [#allocation5], 16
        $region56: #{tpu_custom_call.1} parent=47 // pred_fallthru
          _
        %284 = sfence
        %s285 = sand.u32 %s33, 1
        %s286 = scalar_lea.sflag [#allocation3], %s285
        %s287 = sand.u32 %s33, 1
        %s288 = smul.addr %s287, 64
        %s289 = scalar_lea.vmem [#allocation2], %s288
        %p290 = pneg %p46
        %p291 = pneg %p43
        %p292 = pneg %p67
        %p293 = pneg %p64
        %p294 = pneg %p88
        %p295 = pneg %p85
        %p296 = pneg %p109
        %p297 = pneg %p106
        %p298 = pneg %p130
        %p299 = pneg %p127
        %p300 = pneg %p151
        %p301 = pneg %p148
        %p302 = pneg %p172
        %p303 = pneg %p169
        %p304 = pneg %p198
        %p305 = pneg %p195
        %s306 = sand.u32 %s185, 1
        %s307 = scalar_lea.sflag [#allocation4], %s306
        %s308 = sand.u32 %s185, 1
        %s309 = smul.addr %s308, 64
        %s310 = scalar_lea.vmem [#allocation7], %s309
        %v311 = vld [vmem:[%s275] sm:$0xff]
        %v312 = vld [vmem:[%s275 + $0x8] sm:$0xff]
        %v313 = vld [vmem:[%s275 + $0x10] sm:$0xff]
        %v314 = vld [vmem:[%s275 + $0x18] sm:$0xff]
        %v315 = vld [vmem:[%s275 + $0x20] sm:$0xff]
        %v316 = vld [vmem:[%s275 + $0x28] sm:$0xff]
        %v317 = vld [vmem:[%s275 + $0x30] sm:$0xff]
        %v318 = vld [vmem:[%s275 + $0x38] sm:$0xff]
        %v319 = vadd.f32 %v311, %v312
        %320 = vadd.xlane.f32.xlu0 %v319
        %v321 = vpop.xlane.xlu0 %320
        %v322 = vadd.f32 %v313, %v314
        %323 = vadd.xlane.f32.xlu0 %v322
        %v324 = vpop.xlane.xlu0 %323
        %v325 = vadd.f32 %v315, %v316
        %326 = vadd.xlane.f32.xlu0 %v325
        %v327 = vpop.xlane.xlu0 %326
        %v328 = vadd.f32 %v317, %v318
        %329 = vadd.xlane.f32.xlu0 %v328
        %v330 = vpop.xlane.xlu0 %329
        %v331 = vrcp.pop 256.0
        %v332 = vmul.f32 %v321, %v331
        %v333 = vmul.f32 %v324, %v331
        %v334 = vmul.f32 %v327, %v331
        %v335 = vmul.f32 %v330, %v331
        %v336 = vmax.f32 %v311, %v312
        %337 = vmax.xlane.f32.xlu0 %v336
        %v338 = vpop.xlane.xlu0 %337
        %v339 = vmax.f32 %v313, %v314
        %340 = vmax.xlane.f32.xlu0 %v339
        %v341 = vpop.xlane.xlu0 %340
        %v342 = vmax.f32 %v315, %v316
        %343 = vmax.xlane.f32.xlu0 %v342
        %v344 = vpop.xlane.xlu0 %343
        %v345 = vmax.f32 %v317, %v318
        %346 = vmax.xlane.f32.xlu0 %v345
        %v347 = vpop.xlane.xlu0 %346
        %vm348 = vcmask 7168
        %v349 = vsel %vm348, %v332, %v338
        %v350 = vsel %vm348, %v333, %v341
        %v351 = vsel %vm348, %v334, %v344
        %v352 = vsel %vm348, %v335, %v347
        %v353 = vld [vmem:[%s1] sm:$0x3]
        %v354 = vld [vmem:[%s2] sm:$0x3]
        %356 = vset.pattern.permute.xlu0 0
        %357 = vperm.xlu0 %356, %v354
        %v358 = vpop.permute.xlu0 %357
        %vm360 = vcmask 261120
        %v362 = vsel %vm360, %v353, 0
        %364 = vmatprep.subr.mxu0 0.0
        %365 = vmatpush1.msra.mxu0 0.0
        %366 = vmatprep.subr.mxu0 0.0
        %367 = vmatpush1.msra.mxu0 0.0
        %368 = vmatprep.subr.mxu0 0.0
        %369 = vmatpush1.msra.mxu0 0.0
        %370 = vmatprep.subr.mxu0 0.0
        %371 = vmatpush1.msra.mxu0 0.0
        %372 = vmatprep.subr.mxu0 0.0
        %373 = vmatpush1.msra.mxu0 0.0
        %374 = vmatprep.subr.mxu0 0.0
        %375 = vmatpush1.msra.mxu0 0.0
        %376 = vmatprep.subr.mxu0 0.0
        %377 = vmatpush1.msra.mxu0 0.0
        %378 = vmatprep.subr.mxu0 0.0
        %379 = vmatpush1.msra.mxu0 0.0
        %380 = vmatprep.subr.mxu0 0.0
        %381 = vmatpush1.msra.mxu0 0.0
        %382 = vmatprep.subr.mxu0 0.0
        %383 = vmatpush1.msra.mxu0 0.0
        %384 = vmatprep.subr.mxu0 0.0
        %385 = vmatpush1.msra.mxu0 0.0
        %386 = vmatprep.subr.mxu0 0.0
        %387 = vmatpush1.msra.mxu0 0.0
        %388 = vmatprep.subr.mxu0 0.0
        %389 = vmatpush1.msra.mxu0 %v352
        %390 = vmatprep.subr.mxu0 0.0
        %391 = vmatpush1.msra.mxu0 %v351
        %392 = vmatprep.subr.mxu0 0.0
        %393 = vmatpush1.msra.mxu0 %v350
        %394 = vmatprep.subr.mxu0 0.0
        %395 = vmatpush1.msra.mxu0 %v349
        %396 = vmatprep.subr.mxu0 0.0
        %397 = vmatpush2.msra.mxu0 0.0
        %398 = vmatprep.subr.mxu0 0.0
        %399 = vmatpush2.msra.mxu0 0.0
        %400 = vmatprep.subr.mxu0 0.0
        %401 = vmatpush2.msra.mxu0 0.0
        %402 = vmatprep.subr.mxu0 0.0
        %403 = vmatpush2.msra.mxu0 0.0
        %404 = vmatprep.subr.mxu0 0.0
        %405 = vmatpush2.msra.mxu0 0.0
        %406 = vmatprep.subr.mxu0 0.0
        %407 = vmatpush2.msra.mxu0 0.0
        %408 = vmatprep.subr.mxu0 0.0
        %409 = vmatpush2.msra.mxu0 0.0
        %410 = vmatprep.subr.mxu0 0.0
        %411 = vmatpush2.msra.mxu0 0.0
        %412 = vmatprep.subr.mxu0 0.0
        %413 = vmatpush2.msra.mxu0 0.0
        %414 = vmatprep.subr.mxu0 0.0
        %415 = vmatpush2.msra.mxu0 0.0
        %416 = vmatprep.subr.mxu0 0.0
        %417 = vmatpush2.msra.mxu0 0.0
        %418 = vmatprep.subr.mxu0 0.0
        %419 = vmatpush2.msra.mxu0 0.0
        %420 = vmatprep.subr.mxu0 0.0
        %421 = vmatpush2.msra.mxu0 0.0
        %422 = vmatprep.subr.mxu0 0.0
        %423 = vmatpush2.msra.mxu0 0.0
        %424 = vmatprep.subr.mxu0 0.0
        %425 = vmatpush2.msra.mxu0 0.0
        %426 = vmatprep.subr.mxu0 0.0
        %427 = vmatpush2.msra.mxu0 0.0
        %428 = vmatprep.mubr.f32.mxu0 0.0
        %429 = vmatmul.mubr.f32.gmra.mxu0 %v362
        %v430 = vpop.f32.mrf.mxu0
        %v431 = vadd.f32 %v358, %v430
        %v432 = vpop.f32.mrf.mxu0
        %433 = vdwg.mxu0
        %v434 = vmax.f32 %v431, 0.0
        %v435 = vld [vmem:[%s3] sm:$0xff]
        %v436 = vld [vmem:[%s3 + $0x8] sm:$0xff]
        %v437 = vld [vmem:[%s3 + $0x10] sm:$0xff]
        %v438 = vld [vmem:[%s3 + $0x18] sm:$0xff]
        %v439 = vld [vmem:[%s4] sm:$0xff]
        %v440 = vld [vmem:[%s4 + $0x8] sm:$0xff]
        %v441 = vld [vmem:[%s4 + $0x10] sm:$0xff]
        %v442 = vld [vmem:[%s4 + $0x18] sm:$0xff]
        %444 = vset.pattern.permute.xlu0 0
        %445 = vperm.xlu0 %444, %v439
        %v446 = vpop.permute.xlu0 %445
        %449 = vset.pattern.permute.xlu0 0
        %450 = vperm.xlu0 %449, %v440
        %v451 = vpop.permute.xlu0 %450
        %454 = vset.pattern.permute.xlu0 0
        %455 = vperm.xlu0 %454, %v441
        %v456 = vpop.permute.xlu0 %455
        %459 = vset.pattern.permute.xlu0 0
        %460 = vperm.xlu0 %459, %v442
        %v461 = vpop.permute.xlu0 %460
        %vm463 = vcmask 15360
        %v465 = vsel %vm463, %v435, 0
        %v468 = vsel %vm463, %v436, 0
        %v471 = vsel %vm463, %v437, 0
        %v474 = vsel %vm463, %v438, 0
        %vm476 = vcmask 1041408
        %v478 = vsel %vm476, %v434, 0
        %480 = vmatprep.subr.mxu0 0.0
        %481 = vmatpush1.msra.mxu0 0.0
        %482 = vmatprep.subr.mxu0 0.0
        %483 = vmatpush1.msra.mxu0 0.0
        %484 = vmatprep.subr.mxu0 0.0
        %485 = vmatpush1.msra.mxu0 0.0
        %486 = vmatprep.subr.mxu0 0.0
        %487 = vmatpush1.msra.mxu0 0.0
        %488 = vmatprep.subr.mxu0 0.0
        %489 = vmatpush1.msra.mxu0 0.0
        %490 = vmatprep.subr.mxu0 0.0
        %491 = vmatpush1.msra.mxu0 0.0
        %492 = vmatprep.subr.mxu0 0.0
        %493 = vmatpush1.msra.mxu0 0.0
        %494 = vmatprep.subr.mxu0 0.0
        %495 = vmatpush1.msra.mxu0 0.0
        %496 = vmatprep.subr.mxu0 0.0
        %497 = vmatpush1.msra.mxu0 0.0
        %498 = vmatprep.subr.mxu0 0.0
        %499 = vmatpush1.msra.mxu0 0.0
        %500 = vmatprep.subr.mxu0 0.0
        %501 = vmatpush1.msra.mxu0 0.0
        %502 = vmatprep.subr.mxu0 0.0
        %503 = vmatpush1.msra.mxu0 0.0
        %504 = vmatprep.subr.mxu0 0.0
        %505 = vmatpush1.msra.mxu0 0.0
        %506 = vmatprep.subr.mxu0 0.0
        %507 = vmatpush1.msra.mxu0 0.0
        %508 = vmatprep.subr.mxu0 0.0
        %509 = vmatpush1.msra.mxu0 0.0
        %510 = vmatprep.subr.mxu0 0.0
        %511 = vmatpush1.msra.mxu0 %v478
        %512 = vmatprep.subr.mxu0 0.0
        %513 = vmatpush2.msra.mxu0 0.0
        %514 = vmatprep.subr.mxu0 0.0
        %515 = vmatpush2.msra.mxu0 0.0
        %516 = vmatprep.subr.mxu0 0.0
        %517 = vmatpush2.msra.mxu0 0.0
        %518 = vmatprep.subr.mxu0 0.0
        %519 = vmatpush2.msra.mxu0 0.0
        %520 = vmatprep.subr.mxu0 0.0
        %521 = vmatpush2.msra.mxu0 0.0
        %522 = vmatprep.subr.mxu0 0.0
        %523 = vmatpush2.msra.mxu0 0.0
        %524 = vmatprep.subr.mxu0 0.0
        %525 = vmatpush2.msra.mxu0 0.0
        %526 = vmatprep.subr.mxu0 0.0
        %527 = vmatpush2.msra.mxu0 0.0
        %528 = vmatprep.subr.mxu0 0.0
        %529 = vmatpush2.msra.mxu0 0.0
        %530 = vmatprep.subr.mxu0 0.0
        %531 = vmatpush2.msra.mxu0 0.0
        %532 = vmatprep.subr.mxu0 0.0
        %533 = vmatpush2.msra.mxu0 0.0
        %534 = vmatprep.subr.mxu0 0.0
        %535 = vmatpush2.msra.mxu0 0.0
        %536 = vmatprep.subr.mxu0 0.0
        %537 = vmatpush2.msra.mxu0 0.0
        %538 = vmatprep.subr.mxu0 0.0
        %539 = vmatpush2.msra.mxu0 0.0
        %540 = vmatprep.subr.mxu0 0.0
        %541 = vmatpush2.msra.mxu0 0.0
        %542 = vmatprep.subr.mxu0 0.0
        %543 = vmatpush2.msra.mxu0 0.0
        %544 = vmatprep.mubr.f32.mxu0 0.0
        %545 = vmatmul.mubr.f32.gmra.mxu0 %v465
        %v546 = vpop.f32.mrf.mxu0
        %v547 = vadd.f32 %v446, %v546
        %v548 = vpop.f32.mrf.mxu0
        %549 = vmatprep.mubr.f32.mxu0 0.0
        %550 = vmatmul.mubr.f32.gmra.mxu0 %v468
        %v551 = vpop.f32.mrf.mxu0
        %v552 = vadd.f32 %v451, %v551
        %v553 = vpop.f32.mrf.mxu0
        %554 = vmatprep.mubr.f32.mxu0 0.0
        %555 = vmatmul.mubr.f32.gmra.mxu0 %v471
        %v556 = vpop.f32.mrf.mxu0
        %v557 = vadd.f32 %v456, %v556
        %v558 = vpop.f32.mrf.mxu0
        %559 = vmatprep.mubr.f32.mxu0 0.0
        %560 = vmatmul.mubr.f32.gmra.mxu0 %v474
        %v561 = vpop.f32.mrf.mxu0
        %v562 = vadd.f32 %v461, %v561
        %v563 = vpop.f32.mrf.mxu0
        %564 = vdwg.mxu0
        %569 = vrot.lane.b32.xlu0 %v547, 127
        %v570 = vpop.permute.xlu0 %569
        %571 = vrot.lane.b32.xlu0 %v552, 127
        %v572 = vpop.permute.xlu0 %571
        %573 = vrot.lane.b32.xlu0 %v557, 127
        %v574 = vpop.permute.xlu0 %573
        %575 = vrot.lane.b32.xlu0 %v562, 127
        %v576 = vpop.permute.xlu0 %575
        %v581 = vadd.f32 %v547, %v570
        %v582 = vadd.f32 %v552, %v572
        %v583 = vadd.f32 %v557, %v574
        %v584 = vadd.f32 %v562, %v576
        %v585 = vsub.f32 0.0, %v581
        %v586 = vsub.f32 0.0, %v582
        %v587 = vsub.f32 0.0, %v583
        %v588 = vsub.f32 0.0, %v584
        %v589 = vmul.f32 %v585, 1.442695
        %v590 = vpow.pop %v589
        %v591 = vmul.f32 %v586, 1.442695
        %v592 = vpow.pop %v591
        %v593 = vmul.f32 %v587, 1.442695
        %v594 = vpow.pop %v593
        %v595 = vmul.f32 %v588, 1.442695
        %v596 = vpow.pop %v595
        %v597 = vadd.f32 %v590, 1.0
        %v598 = vadd.f32 %v592, 1.0
        %v599 = vadd.f32 %v594, 1.0
        %v600 = vadd.f32 %v596, 1.0
        %v601 = vrcp.pop %v597
        %v602 = vmul.f32 1.0, %v601
        %v603 = vrcp.pop %v598
        %v604 = vmul.f32 1.0, %v603
        %v605 = vrcp.pop %v599
        %v606 = vmul.f32 1.0, %v605
        %v607 = vrcp.pop %v600
        %v608 = vmul.f32 1.0, %v607
        %610 = vset.pattern.permute.xlu0 0
        %611 = vperm.xlu0 %610, %v602
        %v612 = vpop.permute.xlu0 %611
        %615 = vset.pattern.permute.xlu0 0
        %616 = vperm.xlu0 %615, %v604
        %v617 = vpop.permute.xlu0 %616
        %620 = vset.pattern.permute.xlu0 0
        %621 = vperm.xlu0 %620, %v606
        %v622 = vpop.permute.xlu0 %621
        %625 = vset.pattern.permute.xlu0 0
        %626 = vperm.xlu0 %625, %v608
        %v627 = vpop.permute.xlu0 %626
        %v629 = vmul.f32 %v311, %v612
        %v630 = vmul.f32 %v312, %v612
        %v631 = vmul.f32 %v313, %v617
        %v632 = vmul.f32 %v314, %v617
        %v633 = vmul.f32 %v315, %v622
        %v634 = vmul.f32 %v316, %v622
        %v635 = vmul.f32 %v317, %v627
        %v636 = vmul.f32 %v318, %v627
        %v637 = vmax.f32 %v629, %v633
        %v638 = vmax.f32 %v631, %v635
        %v639 = vmax.f32 %v637, %v638
        %v640 = vrot.slane %v639, 4
        %v641 = vmax.f32 %v639, %v640
        %v642 = vrot.slane %v641, 2
        %v643 = vmax.f32 %v641, %v642
        %v644 = vrot.slane %v643, 1
        %v645 = vmax.f32 %v643, %v644
        %v646 = vmax.f32 %v630, %v634
        %v647 = vmax.f32 %v632, %v636
        %v648 = vmax.f32 %v646, %v647
        %v649 = vrot.slane %v648, 4
        %v650 = vmax.f32 %v648, %v649
        %v651 = vrot.slane %v650, 2
        %v652 = vmax.f32 %v650, %v651
        %v653 = vrot.slane %v652, 1
        %v654 = vmax.f32 %v652, %v653
        %v655 = vadd.f32 %v629, %v631
        %v656 = vadd.f32 %v655, %v633
        %v657 = vadd.f32 %v656, %v635
        %v658 = vrot.slane %v657, 4
        %v659 = vadd.f32 %v657, %v658
        %v660 = vrot.slane %v659, 2
        %v661 = vadd.f32 %v659, %v660
        %v662 = vrot.slane %v661, 1
        %v663 = vadd.f32 %v661, %v662
        %v664 = vadd.f32 %v630, %v632
        %v665 = vadd.f32 %v664, %v634
        %v666 = vadd.f32 %v665, %v636
        %v667 = vrot.slane %v666, 4
        %v668 = vadd.f32 %v666, %v667
        %v669 = vrot.slane %v668, 2
        %v670 = vadd.f32 %v668, %v669
        %v671 = vrot.slane %v670, 1
        %v672 = vadd.f32 %v670, %v671
        %v673 = vrcp.pop 32.0
        %v674 = vmul.f32 %v663, %v673
        %v675 = vmul.f32 %v672, %v673
        %vm676 = vcmask 1040384
        %v677 = vsel %vm676, %v645, %v674
        %v678 = vsel %vm676, %v654, %v675
        %v679 = vld [vmem:[%s5] sm:$0x7f]
        %v680 = vld [vmem:[%s5 + $0x8] sm:$0x7f]
        %s681 = sld [smem:[#allocation6]]
        %v682 = vstv %s681
        %v683 = vmul.f32 %v682, 0.0
        %v684 = vmul.f32 %v682, %v677
        %v685 = vmul.f32 %v682, %v678
        %v686 = vadd.f32 %v683, 0.0
        %v687 = vadd.f32 %v684, 0.0
        %v688 = vadd.f32 %v685, 0.0
        %s689 = sld [smem:[#allocation6 + $0x7]]
        %v690 = vstv %s689
        %v691 = vmul.f32 %v690, 0.0
        %v692 = vmul.f32 %v690, %v677
        %v693 = vmul.f32 %v690, %v678
        %697 = vrot.lane.b32.xlu0 %v691, 112
        %v698 = vpop.permute.xlu0 %697
        %699 = vrot.lane.b32.xlu0 %v692, 112
        %v700 = vpop.permute.xlu0 %699
        %701 = vrot.lane.b32.xlu0 %v693, 112
        %v702 = vpop.permute.xlu0 %701
        %vm703 = vcmask 916480
        %v704 = vsel %vm703, %v698, %v700
        %v705 = vsel %vm703, %v700, %v702
        %v709 = vadd.f32 %v686, %v704
        %v710 = vadd.f32 %v687, %v705
        %v711 = vadd.f32 %v688, %v702
        %s712 = sld [smem:[#allocation6 + $0xe]]
        %v713 = vstv %s712
        %v714 = vmul.f32 %v713, 0.0
        %v715 = vmul.f32 %v713, %v677
        %v716 = vmul.f32 %v713, %v678
        %720 = vrot.lane.b32.xlu0 %v714, 96
        %v721 = vpop.permute.xlu0 %720
        %722 = vrot.lane.b32.xlu0 %v715, 96
        %v723 = vpop.permute.xlu0 %722
        %724 = vrot.lane.b32.xlu0 %v716, 96
        %v725 = vpop.permute.xlu0 %724
        %vm726 = vcmask 785408
        %v727 = vsel %vm726, %v721, %v723
        %v728 = vsel %vm726, %v723, %v725
        %v732 = vadd.f32 %v709, %v727
        %v733 = vadd.f32 %v710, %v728
        %v734 = vadd.f32 %v711, %v725
        %s735 = sld [smem:[#allocation6 + $0x15]]
        %v736 = vstv %s735
        %v737 = vmul.f32 %v736, 0.0
        %v738 = vmul.f32 %v736, %v677
        %v739 = vmul.f32 %v736, %v678
        %743 = vrot.lane.b32.xlu0 %v737, 80
        %v744 = vpop.permute.xlu0 %743
        %745 = vrot.lane.b32.xlu0 %v738, 80
        %v746 = vpop.permute.xlu0 %745
        %747 = vrot.lane.b32.xlu0 %v739, 80
        %v748 = vpop.permute.xlu0 %747
        %vm749 = vcmask 654336
        %v750 = vsel %vm749, %v744, %v746
        %v751 = vsel %vm749, %v746, %v748
        %v755 = vadd.f32 %v732, %v750
        %v756 = vadd.f32 %v733, %v751
        %v757 = vadd.f32 %v734, %v748
        %s758 = sld [smem:[#allocation6 + $0x1c]]
        %v759 = vstv %s758
        %v760 = vmul.f32 %v759, %v677
        %v761 = vmul.f32 %v759, %v678
        %v762 = vmul.f32 %v759, 0.0
        %766 = vrot.lane.b32.xlu0 %v760, 64
        %v767 = vpop.permute.xlu0 %766
        %768 = vrot.lane.b32.xlu0 %v761, 64
        %v769 = vpop.permute.xlu0 %768
        %770 = vrot.lane.b32.xlu0 %v762, 64
        %v771 = vpop.permute.xlu0 %770
        %vm772 = vcmask 523264
        %v773 = vsel %vm772, %v767, %v769
        %v774 = vsel %vm772, %v769, %v771
        %v778 = vadd.f32 %v755, %v767
        %v779 = vadd.f32 %v756, %v773
        %v780 = vadd.f32 %v757, %v774
        %s781 = sld [smem:[#allocation6 + $0x23]]
        %v782 = vstv %s781
        %v783 = vmul.f32 %v782, %v677
        %v784 = vmul.f32 %v782, %v678
        %v785 = vmul.f32 %v782, 0.0
        %789 = vrot.lane.b32.xlu0 %v783, 48
        %v790 = vpop.permute.xlu0 %789
        %791 = vrot.lane.b32.xlu0 %v784, 48
        %v792 = vpop.permute.xlu0 %791
        %793 = vrot.lane.b32.xlu0 %v785, 48
        %v794 = vpop.permute.xlu0 %793
        %vm795 = vcmask 392192
        %v796 = vsel %vm795, %v790, %v792
        %v797 = vsel %vm795, %v792, %v794
        %v801 = vadd.f32 %v778, %v790
        %v802 = vadd.f32 %v779, %v796
        %v803 = vadd.f32 %v780, %v797
        %s804 = sld [smem:[#allocation6 + $0x2a]]
        %v805 = vstv %s804
        %v806 = vmul.f32 %v805, %v677
        %v807 = vmul.f32 %v805, %v678
        %v808 = vmul.f32 %v805, 0.0
        %812 = vrot.lane.b32.xlu0 %v806, 32
        %v813 = vpop.permute.xlu0 %812
        %814 = vrot.lane.b32.xlu0 %v807, 32
        %v815 = vpop.permute.xlu0 %814
        %816 = vrot.lane.b32.xlu0 %v808, 32
        %v817 = vpop.permute.xlu0 %816
        %v818 = vsel %vm360, %v813, %v815
        %v819 = vsel %vm360, %v815, %v817
        %v823 = vadd.f32 %v801, %v813
        %v824 = vadd.f32 %v802, %v818
        %v825 = vadd.f32 %v803, %v819
        %s826 = sld [smem:[#allocation6 + $0x31]]
        %v827 = vstv %s826
        %v828 = vmul.f32 %v827, 0.0
        %v829 = vmul.f32 %v827, %v677
        %v830 = vmul.f32 %v827, %v678
        %v834 = vrot.slane %v828, 1
        %v835 = vrot.slane %v829, 1
        %v836 = vrot.slane %v830, 1
        %v840 = vadd.f32 %v823, %v834
        %v841 = vadd.f32 %v824, %v835
        %v842 = vadd.f32 %v825, %v836
        %s843 = sld [smem:[#allocation6 + $0x38]]
        %v844 = vstv %s843
        %v845 = vmul.f32 %v844, 0.0
        %v846 = vmul.f32 %v844, %v677
        %v847 = vmul.f32 %v844, %v678
        %v851 = vrot.slane %v845, 1
        %v852 = vrot.slane %v846, 1
        %v853 = vrot.slane %v847, 1
        %854 = vrot.lane.b32.xlu0 %v851, 112
        %v855 = vpop.permute.xlu0 %854
        %856 = vrot.lane.b32.xlu0 %v852, 112
        %v857 = vpop.permute.xlu0 %856
        %858 = vrot.lane.b32.xlu0 %v853, 112
        %v859 = vpop.permute.xlu0 %858
        %v860 = vsel %vm703, %v855, %v857
        %v861 = vsel %vm703, %v857, %v859
        %v865 = vadd.f32 %v840, %v860
        %v866 = vadd.f32 %v841, %v861
        %v867 = vadd.f32 %v842, %v859
        %s868 = sld [smem:[#allocation6 + $0x3f]]
        %v869 = vstv %s868
        %v870 = vmul.f32 %v869, 0.0
        %v871 = vmul.f32 %v869, %v677
        %v872 = vmul.f32 %v869, %v678
        %v876 = vrot.slane %v870, 1
        %v877 = vrot.slane %v871, 1
        %v878 = vrot.slane %v872, 1
        %879 = vrot.lane.b32.xlu0 %v876, 96
        %v880 = vpop.permute.xlu0 %879
        %881 = vrot.lane.b32.xlu0 %v877, 96
        %v882 = vpop.permute.xlu0 %881
        %883 = vrot.lane.b32.xlu0 %v878, 96
        %v884 = vpop.permute.xlu0 %883
        %v885 = vsel %vm726, %v880, %v882
        %v886 = vsel %vm726, %v882, %v884
        %v890 = vadd.f32 %v865, %v885
        %v891 = vadd.f32 %v866, %v886
        %v892 = vadd.f32 %v867, %v884
        %s893 = sld [smem:[#allocation6 + $0x46]]
        %v894 = vstv %s893
        %v895 = vmul.f32 %v894, 0.0
        %v896 = vmul.f32 %v894, %v677
        %v897 = vmul.f32 %v894, %v678
        %v901 = vrot.slane %v895, 1
        %v902 = vrot.slane %v896, 1
        %v903 = vrot.slane %v897, 1
        %904 = vrot.lane.b32.xlu0 %v901, 80
        %v905 = vpop.permute.xlu0 %904
        %906 = vrot.lane.b32.xlu0 %v902, 80
        %v907 = vpop.permute.xlu0 %906
        %908 = vrot.lane.b32.xlu0 %v903, 80
        %v909 = vpop.permute.xlu0 %908
        %v910 = vsel %vm749, %v905, %v907
        %v911 = vsel %vm749, %v907, %v909
        %v915 = vadd.f32 %v890, %v910
        %v916 = vadd.f32 %v891, %v911
        %v917 = vadd.f32 %v892, %v909
        %s918 = sld [smem:[#allocation6 + $0x4d]]
        %v919 = vstv %s918
        %v920 = vmul.f32 %v919, %v677
        %v921 = vmul.f32 %v919, %v678
        %v922 = vmul.f32 %v919, 0.0
        %v926 = vrot.slane %v920, 1
        %v927 = vrot.slane %v921, 1
        %v928 = vrot.slane %v922, 1
        %929 = vrot.lane.b32.xlu0 %v926, 64
        %v930 = vpop.permute.xlu0 %929
        %931 = vrot.lane.b32.xlu0 %v927, 64
        %v932 = vpop.permute.xlu0 %931
        %933 = vrot.lane.b32.xlu0 %v928, 64
        %v934 = vpop.permute.xlu0 %933
        %v935 = vsel %vm772, %v930, %v932
        %v936 = vsel %vm772, %v932, %v934
        %v940 = vadd.f32 %v915, %v930
        %v941 = vadd.f32 %v916, %v935
        %v942 = vadd.f32 %v917, %v936
        %s943 = sld [smem:[#allocation6 + $0x54]]
        %v944 = vstv %s943
        %v945 = vmul.f32 %v944, %v677
        %v946 = vmul.f32 %v944, %v678
        %v947 = vmul.f32 %v944, 0.0
        %v951 = vrot.slane %v945, 1
        %v952 = vrot.slane %v946, 1
        %v953 = vrot.slane %v947, 1
        %954 = vrot.lane.b32.xlu0 %v951, 48
        %v955 = vpop.permute.xlu0 %954
        %956 = vrot.lane.b32.xlu0 %v952, 48
        %v957 = vpop.permute.xlu0 %956
        %958 = vrot.lane.b32.xlu0 %v953, 48
        %v959 = vpop.permute.xlu0 %958
        %v960 = vsel %vm795, %v955, %v957
        %v961 = vsel %vm795, %v957, %v959
        %v965 = vadd.f32 %v940, %v955
        %v966 = vadd.f32 %v941, %v960
        %v967 = vadd.f32 %v942, %v961
        %s968 = sld [smem:[#allocation6 + $0x5b]]
        %v969 = vstv %s968
        %v970 = vmul.f32 %v969, %v677
        %v971 = vmul.f32 %v969, %v678
        %v972 = vmul.f32 %v969, 0.0
        %v976 = vrot.slane %v970, 1
        %v977 = vrot.slane %v971, 1
        %v978 = vrot.slane %v972, 1
        %979 = vrot.lane.b32.xlu0 %v976, 32
        %v980 = vpop.permute.xlu0 %979
        %981 = vrot.lane.b32.xlu0 %v977, 32
        %v982 = vpop.permute.xlu0 %981
        %983 = vrot.lane.b32.xlu0 %v978, 32
        %v984 = vpop.permute.xlu0 %983
        %v985 = vsel %vm360, %v980, %v982
        %v986 = vsel %vm360, %v982, %v984
        %v990 = vadd.f32 %v965, %v980
        %v991 = vadd.f32 %v966, %v985
        %v992 = vadd.f32 %v967, %v986
        %996 = vrot.lane.b32.xlu0 %v990, 51
        %v997 = vpop.permute.xlu0 %996
        %998 = vrot.lane.b32.xlu0 %v991, 51
        %v999 = vpop.permute.xlu0 %998
        %1000 = vrot.lane.b32.xlu0 %v992, 51
        %v1001 = vpop.permute.xlu0 %1000
        %vm1002 = vcmask 416768
        %v1003 = vsel %vm1002, %v997, %v999
        %v1004 = vsel %vm1002, %v999, %v1001
        %v1007 = vmul.f32 %v679, %v1003
        %v1008 = vmul.f32 %v680, %v1004
        %v1009 = vadd.f32 %v1007, 0.0
        %v1010 = vadd.f32 %v1008, 0.0
        %s1011 = sld [smem:[#allocation6 + $0x1]]
        %v1012 = vstv %s1011
        %v1013 = vmul.f32 %v1012, 0.0
        %v1014 = vmul.f32 %v1012, %v677
        %v1015 = vmul.f32 %v1012, %v678
        %v1016 = vadd.f32 %v1013, 0.0
        %v1017 = vadd.f32 %v1014, 0.0
        %v1018 = vadd.f32 %v1015, 0.0
        %s1019 = sld [smem:[#allocation6 + $0x8]]
        %v1020 = vstv %s1019
        %v1021 = vmul.f32 %v1020, 0.0
        %v1022 = vmul.f32 %v1020, %v677
        %v1023 = vmul.f32 %v1020, %v678
        %1027 = vrot.lane.b32.xlu0 %v1021, 112
        %v1028 = vpop.permute.xlu0 %1027
        %1029 = vrot.lane.b32.xlu0 %v1022, 112
        %v1030 = vpop.permute.xlu0 %1029
        %1031 = vrot.lane.b32.xlu0 %v1023, 112
        %v1032 = vpop.permute.xlu0 %1031
        %v1033 = vsel %vm703, %v1028, %v1030
        %v1034 = vsel %vm703, %v1030, %v1032
        %v1038 = vadd.f32 %v1016, %v1033
        %v1039 = vadd.f32 %v1017, %v1034
        %v1040 = vadd.f32 %v1018, %v1032
        %s1041 = sld [smem:[#allocation6 + $0xf]]
        %v1042 = vstv %s1041
        %v1043 = vmul.f32 %v1042, 0.0
        %v1044 = vmul.f32 %v1042, %v677
        %v1045 = vmul.f32 %v1042, %v678
        %1049 = vrot.lane.b32.xlu0 %v1043, 96
        %v1050 = vpop.permute.xlu0 %1049
        %1051 = vrot.lane.b32.xlu0 %v1044, 96
        %v1052 = vpop.permute.xlu0 %1051
        %1053 = vrot.lane.b32.xlu0 %v1045, 96
        %v1054 = vpop.permute.xlu0 %1053
        %v1055 = vsel %vm726, %v1050, %v1052
        %v1056 = vsel %vm726, %v1052, %v1054
        %v1060 = vadd.f32 %v1038, %v1055
        %v1061 = vadd.f32 %v1039, %v1056
        %v1062 = vadd.f32 %v1040, %v1054
        %s1063 = sld [smem:[#allocation6 + $0x16]]
        %v1064 = vstv %s1063
        %v1065 = vmul.f32 %v1064, 0.0
        %v1066 = vmul.f32 %v1064, %v677
        %v1067 = vmul.f32 %v1064, %v678
        %1071 = vrot.lane.b32.xlu0 %v1065, 80
        %v1072 = vpop.permute.xlu0 %1071
        %1073 = vrot.lane.b32.xlu0 %v1066, 80
        %v1074 = vpop.permute.xlu0 %1073
        %1075 = vrot.lane.b32.xlu0 %v1067, 80
        %v1076 = vpop.permute.xlu0 %1075
        %v1077 = vsel %vm749, %v1072, %v1074
        %v1078 = vsel %vm749, %v1074, %v1076
        %v1082 = vadd.f32 %v1060, %v1077
        %v1083 = vadd.f32 %v1061, %v1078
        %v1084 = vadd.f32 %v1062, %v1076
        %s1085 = sld [smem:[#allocation6 + $0x1d]]
        %v1086 = vstv %s1085
        %v1087 = vmul.f32 %v1086, %v677
        %v1088 = vmul.f32 %v1086, %v678
        %v1089 = vmul.f32 %v1086, 0.0
        %1093 = vrot.lane.b32.xlu0 %v1087, 64
        %v1094 = vpop.permute.xlu0 %1093
        %1095 = vrot.lane.b32.xlu0 %v1088, 64
        %v1096 = vpop.permute.xlu0 %1095
        %1097 = vrot.lane.b32.xlu0 %v1089, 64
        %v1098 = vpop.permute.xlu0 %1097
        %v1099 = vsel %vm772, %v1094, %v1096
        %v1100 = vsel %vm772, %v1096, %v1098
        %v1104 = vadd.f32 %v1082, %v1094
        %v1105 = vadd.f32 %v1083, %v1099
        %v1106 = vadd.f32 %v1084, %v1100
        %s1107 = sld [smem:[#allocation6 + $0x24]]
        %v1108 = vstv %s1107
        %v1109 = vmul.f32 %v1108, %v677
        %v1110 = vmul.f32 %v1108, %v678
        %v1111 = vmul.f32 %v1108, 0.0
        %1115 = vrot.lane.b32.xlu0 %v1109, 48
        %v1116 = vpop.permute.xlu0 %1115
        %1117 = vrot.lane.b32.xlu0 %v1110, 48
        %v1118 = vpop.permute.xlu0 %1117
        %1119 = vrot.lane.b32.xlu0 %v1111, 48
        %v1120 = vpop.permute.xlu0 %1119
        %v1121 = vsel %vm795, %v1116, %v1118
        %v1122 = vsel %vm795, %v1118, %v1120
        %v1126 = vadd.f32 %v1104, %v1116
        %v1127 = vadd.f32 %v1105, %v1121
        %v1128 = vadd.f32 %v1106, %v1122
        %s1129 = sld [smem:[#allocation6 + $0x2b]]
        %v1130 = vstv %s1129
        %v1131 = vmul.f32 %v1130, %v677
        %v1132 = vmul.f32 %v1130, %v678
        %v1133 = vmul.f32 %v1130, 0.0
        %1137 = vrot.lane.b32.xlu0 %v1131, 32
        %v1138 = vpop.permute.xlu0 %1137
        %1139 = vrot.lane.b32.xlu0 %v1132, 32
        %v1140 = vpop.permute.xlu0 %1139
        %1141 = vrot.lane.b32.xlu0 %v1133, 32
        %v1142 = vpop.permute.xlu0 %1141
        %v1143 = vsel %vm360, %v1138, %v1140
        %v1144 = vsel %vm360, %v1140, %v1142
        %v1148 = vadd.f32 %v1126, %v1138
        %v1149 = vadd.f32 %v1127, %v1143
        %v1150 = vadd.f32 %v1128, %v1144
        %s1151 = sld [smem:[#allocation6 + $0x32]]
        %v1152 = vstv %s1151
        %v1153 = vmul.f32 %v1152, 0.0
        %v1154 = vmul.f32 %v1152, %v677
        %v1155 = vmul.f32 %v1152, %v678
        %v1159 = vrot.slane %v1153, 1
        %v1160 = vrot.slane %v1154, 1
        %v1161 = vrot.slane %v1155, 1
        %v1165 = vadd.f32 %v1148, %v1159
        %v1166 = vadd.f32 %v1149, %v1160
        %v1167 = vadd.f32 %v1150, %v1161
        %s1168 = sld [smem:[#allocation6 + $0x39]]
        %v1169 = vstv %s1168
        %v1170 = vmul.f32 %v1169, 0.0
        %v1171 = vmul.f32 %v1169, %v677
        %v1172 = vmul.f32 %v1169, %v678
        %v1176 = vrot.slane %v1170, 1
        %v1177 = vrot.slane %v1171, 1
        %v1178 = vrot.slane %v1172, 1
        %1179 = vrot.lane.b32.xlu0 %v1176, 112
        %v1180 = vpop.permute.xlu0 %1179
        %1181 = vrot.lane.b32.xlu0 %v1177, 112
        %v1182 = vpop.permute.xlu0 %1181
        %1183 = vrot.lane.b32.xlu0 %v1178, 112
        %v1184 = vpop.permute.xlu0 %1183
        %v1185 = vsel %vm703, %v1180, %v1182
        %v1186 = vsel %vm703, %v1182, %v1184
        %v1190 = vadd.f32 %v1165, %v1185
        %v1191 = vadd.f32 %v1166, %v1186
        %v1192 = vadd.f32 %v1167, %v1184
        %s1193 = sld [smem:[#allocation6 + $0x40]]
        %v1194 = vstv %s1193
        %v1195 = vmul.f32 %v1194, 0.0
        %v1196 = vmul.f32 %v1194, %v677
        %v1197 = vmul.f32 %v1194, %v678
        %v1201 = vrot.slane %v1195, 1
        %v1202 = vrot.slane %v1196, 1
        %v1203 = vrot.slane %v1197, 1
        %1204 = vrot.lane.b32.xlu0 %v1201, 96
        %v1205 = vpop.permute.xlu0 %1204
        %1206 = vrot.lane.b32.xlu0 %v1202, 96
        %v1207 = vpop.permute.xlu0 %1206
        %1208 = vrot.lane.b32.xlu0 %v1203, 96
        %v1209 = vpop.permute.xlu0 %1208
        %v1210 = vsel %vm726, %v1205, %v1207
        %v1211 = vsel %vm726, %v1207, %v1209
        %v1215 = vadd.f32 %v1190, %v1210
        %v1216 = vadd.f32 %v1191, %v1211
        %v1217 = vadd.f32 %v1192, %v1209
        %s1218 = sld [smem:[#allocation6 + $0x47]]
        %v1219 = vstv %s1218
        %v1220 = vmul.f32 %v1219, 0.0
        %v1221 = vmul.f32 %v1219, %v677
        %v1222 = vmul.f32 %v1219, %v678
        %v1226 = vrot.slane %v1220, 1
        %v1227 = vrot.slane %v1221, 1
        %v1228 = vrot.slane %v1222, 1
        %1229 = vrot.lane.b32.xlu0 %v1226, 80
        %v1230 = vpop.permute.xlu0 %1229
        %1231 = vrot.lane.b32.xlu0 %v1227, 80
        %v1232 = vpop.permute.xlu0 %1231
        %1233 = vrot.lane.b32.xlu0 %v1228, 80
        %v1234 = vpop.permute.xlu0 %1233
        %v1235 = vsel %vm749, %v1230, %v1232
        %v1236 = vsel %vm749, %v1232, %v1234
        %v1240 = vadd.f32 %v1215, %v1235
        %v1241 = vadd.f32 %v1216, %v1236
        %v1242 = vadd.f32 %v1217, %v1234
        %s1243 = sld [smem:[#allocation6 + $0x4e]]
        %v1244 = vstv %s1243
        %v1245 = vmul.f32 %v1244, %v677
        %v1246 = vmul.f32 %v1244, %v678
        %v1247 = vmul.f32 %v1244, 0.0
        %v1251 = vrot.slane %v1245, 1
        %v1252 = vrot.slane %v1246, 1
        %v1253 = vrot.slane %v1247, 1
        %1254 = vrot.lane.b32.xlu0 %v1251, 64
        %v1255 = vpop.permute.xlu0 %1254
        %1256 = vrot.lane.b32.xlu0 %v1252, 64
        %v1257 = vpop.permute.xlu0 %1256
        %1258 = vrot.lane.b32.xlu0 %v1253, 64
        %v1259 = vpop.permute.xlu0 %1258
        %v1260 = vsel %vm772, %v1255, %v1257
        %v1261 = vsel %vm772, %v1257, %v1259
        %v1265 = vadd.f32 %v1240, %v1255
        %v1266 = vadd.f32 %v1241, %v1260
        %v1267 = vadd.f32 %v1242, %v1261
        %s1268 = sld [smem:[#allocation6 + $0x55]]
        %v1269 = vstv %s1268
        %v1270 = vmul.f32 %v1269, %v677
        %v1271 = vmul.f32 %v1269, %v678
        %v1272 = vmul.f32 %v1269, 0.0
        %v1276 = vrot.slane %v1270, 1
        %v1277 = vrot.slane %v1271, 1
        %v1278 = vrot.slane %v1272, 1
        %1279 = vrot.lane.b32.xlu0 %v1276, 48
        %v1280 = vpop.permute.xlu0 %1279
        %1281 = vrot.lane.b32.xlu0 %v1277, 48
        %v1282 = vpop.permute.xlu0 %1281
        %1283 = vrot.lane.b32.xlu0 %v1278, 48
        %v1284 = vpop.permute.xlu0 %1283
        %v1285 = vsel %vm795, %v1280, %v1282
        %v1286 = vsel %vm795, %v1282, %v1284
        %v1290 = vadd.f32 %v1265, %v1280
        %v1291 = vadd.f32 %v1266, %v1285
        %v1292 = vadd.f32 %v1267, %v1286
        %s1293 = sld [smem:[#allocation6 + $0x5c]]
        %v1294 = vstv %s1293
        %v1295 = vmul.f32 %v1294, %v677
        %v1296 = vmul.f32 %v1294, %v678
        %v1297 = vmul.f32 %v1294, 0.0
        %v1301 = vrot.slane %v1295, 1
        %v1302 = vrot.slane %v1296, 1
        %v1303 = vrot.slane %v1297, 1
        %1304 = vrot.lane.b32.xlu0 %v1301, 32
        %v1305 = vpop.permute.xlu0 %1304
        %1306 = vrot.lane.b32.xlu0 %v1302, 32
        %v1307 = vpop.permute.xlu0 %1306
        %1308 = vrot.lane.b32.xlu0 %v1303, 32
        %v1309 = vpop.permute.xlu0 %1308
        %v1310 = vsel %vm360, %v1305, %v1307
        %v1311 = vsel %vm360, %v1307, %v1309
        %v1315 = vadd.f32 %v1290, %v1305
        %v1316 = vadd.f32 %v1291, %v1310
        %v1317 = vadd.f32 %v1292, %v1311
        %v1321 = vrot.slane %v1315, 7
        %v1322 = vrot.slane %v1316, 7
        %v1323 = vrot.slane %v1317, 7
        %1324 = vrot.lane.b32.xlu0 %v1321, 50
        %v1325 = vpop.permute.xlu0 %1324
        %1326 = vrot.lane.b32.xlu0 %v1322, 50
        %v1327 = vpop.permute.xlu0 %1326
        %1328 = vrot.lane.b32.xlu0 %v1323, 50
        %v1329 = vpop.permute.xlu0 %1328
        %vm1330 = vcmask 408576
        %v1331 = vsel %vm1330, %v1325, %v1327
        %v1332 = vsel %vm1330, %v1327, %v1329
        %v1335 = vmul.f32 %v679, %v1331
        %v1336 = vmul.f32 %v680, %v1332
        %v1339 = vrot.slane %v1335, 1
        %v1340 = vrot.slane %v1336, 1
        %v1343 = vadd.f32 %v1009, %v1339
        %v1344 = vadd.f32 %v1010, %v1340
        %s1345 = sld [smem:[#allocation6 + $0x2]]
        %v1346 = vstv %s1345
        %v1347 = vmul.f32 %v1346, 0.0
        %v1348 = vmul.f32 %v1346, %v677
        %v1349 = vmul.f32 %v1346, %v678
        %v1350 = vadd.f32 %v1347, 0.0
        %v1351 = vadd.f32 %v1348, 0.0
        %v1352 = vadd.f32 %v1349, 0.0
        %s1353 = sld [smem:[#allocation6 + $0x9]]
        %v1354 = vstv %s1353
        %v1355 = vmul.f32 %v1354, 0.0
        %v1356 = vmul.f32 %v1354, %v677
        %v1357 = vmul.f32 %v1354, %v678
        %1361 = vrot.lane.b32.xlu0 %v1355, 112
        %v1362 = vpop.permute.xlu0 %1361
        %1363 = vrot.lane.b32.xlu0 %v1356, 112
        %v1364 = vpop.permute.xlu0 %1363
        %1365 = vrot.lane.b32.xlu0 %v1357, 112
        %v1366 = vpop.permute.xlu0 %1365
        %v1367 = vsel %vm703, %v1362, %v1364
        %v1368 = vsel %vm703, %v1364, %v1366
        %v1372 = vadd.f32 %v1350, %v1367
        %v1373 = vadd.f32 %v1351, %v1368
        %v1374 = vadd.f32 %v1352, %v1366
        %s1375 = sld [smem:[#allocation6 + $0x10]]
        %v1376 = vstv %s1375
        %v1377 = vmul.f32 %v1376, 0.0
        %v1378 = vmul.f32 %v1376, %v677
        %v1379 = vmul.f32 %v1376, %v678
        %1383 = vrot.lane.b32.xlu0 %v1377, 96
        %v1384 = vpop.permute.xlu0 %1383
        %1385 = vrot.lane.b32.xlu0 %v1378, 96
        %v1386 = vpop.permute.xlu0 %1385
        %1387 = vrot.lane.b32.xlu0 %v1379, 96
        %v1388 = vpop.permute.xlu0 %1387
        %v1389 = vsel %vm726, %v1384, %v1386
        %v1390 = vsel %vm726, %v1386, %v1388
        %v1394 = vadd.f32 %v1372, %v1389
        %v1395 = vadd.f32 %v1373, %v1390
        %v1396 = vadd.f32 %v1374, %v1388
        %s1397 = sld [smem:[#allocation6 + $0x17]]
        %v1398 = vstv %s1397
        %v1399 = vmul.f32 %v1398, 0.0
        %v1400 = vmul.f32 %v1398, %v677
        %v1401 = vmul.f32 %v1398, %v678
        %1405 = vrot.lane.b32.xlu0 %v1399, 80
        %v1406 = vpop.permute.xlu0 %1405
        %1407 = vrot.lane.b32.xlu0 %v1400, 80
        %v1408 = vpop.permute.xlu0 %1407
        %1409 = vrot.lane.b32.xlu0 %v1401, 80
        %v1410 = vpop.permute.xlu0 %1409
        %v1411 = vsel %vm749, %v1406, %v1408
        %v1412 = vsel %vm749, %v1408, %v1410
        %v1416 = vadd.f32 %v1394, %v1411
        %v1417 = vadd.f32 %v1395, %v1412
        %v1418 = vadd.f32 %v1396, %v1410
        %s1419 = sld [smem:[#allocation6 + $0x1e]]
        %v1420 = vstv %s1419
        %v1421 = vmul.f32 %v1420, %v677
        %v1422 = vmul.f32 %v1420, %v678
        %v1423 = vmul.f32 %v1420, 0.0
        %1427 = vrot.lane.b32.xlu0 %v1421, 64
        %v1428 = vpop.permute.xlu0 %1427
        %1429 = vrot.lane.b32.xlu0 %v1422, 64
        %v1430 = vpop.permute.xlu0 %1429
        %1431 = vrot.lane.b32.xlu0 %v1423, 64
        %v1432 = vpop.permute.xlu0 %1431
        %v1433 = vsel %vm772, %v1428, %v1430
        %v1434 = vsel %vm772, %v1430, %v1432
        %v1438 = vadd.f32 %v1416, %v1428
        %v1439 = vadd.f32 %v1417, %v1433
        %v1440 = vadd.f32 %v1418, %v1434
        %s1441 = sld [smem:[#allocation6 + $0x25]]
        %v1442 = vstv %s1441
        %v1443 = vmul.f32 %v1442, %v677
        %v1444 = vmul.f32 %v1442, %v678
        %v1445 = vmul.f32 %v1442, 0.0
        %1449 = vrot.lane.b32.xlu0 %v1443, 48
        %v1450 = vpop.permute.xlu0 %1449
        %1451 = vrot.lane.b32.xlu0 %v1444, 48
        %v1452 = vpop.permute.xlu0 %1451
        %1453 = vrot.lane.b32.xlu0 %v1445, 48
        %v1454 = vpop.permute.xlu0 %1453
        %v1455 = vsel %vm795, %v1450, %v1452
        %v1456 = vsel %vm795, %v1452, %v1454
        %v1460 = vadd.f32 %v1438, %v1450
        %v1461 = vadd.f32 %v1439, %v1455
        %v1462 = vadd.f32 %v1440, %v1456
        %s1463 = sld [smem:[#allocation6 + $0x2c]]
        %v1464 = vstv %s1463
        %v1465 = vmul.f32 %v1464, %v677
        %v1466 = vmul.f32 %v1464, %v678
        %v1467 = vmul.f32 %v1464, 0.0
        %1471 = vrot.lane.b32.xlu0 %v1465, 32
        %v1472 = vpop.permute.xlu0 %1471
        %1473 = vrot.lane.b32.xlu0 %v1466, 32
        %v1474 = vpop.permute.xlu0 %1473
        %1475 = vrot.lane.b32.xlu0 %v1467, 32
        %v1476 = vpop.permute.xlu0 %1475
        %v1477 = vsel %vm360, %v1472, %v1474
        %v1478 = vsel %vm360, %v1474, %v1476
        %v1482 = vadd.f32 %v1460, %v1472
        %v1483 = vadd.f32 %v1461, %v1477
        %v1484 = vadd.f32 %v1462, %v1478
        %s1485 = sld [smem:[#allocation6 + $0x33]]
        %v1486 = vstv %s1485
        %v1487 = vmul.f32 %v1486, 0.0
        %v1488 = vmul.f32 %v1486, %v677
        %v1489 = vmul.f32 %v1486, %v678
        %v1493 = vrot.slane %v1487, 1
        %v1494 = vrot.slane %v1488, 1
        %v1495 = vrot.slane %v1489, 1
        %v1499 = vadd.f32 %v1482, %v1493
        %v1500 = vadd.f32 %v1483, %v1494
        %v1501 = vadd.f32 %v1484, %v1495
        %s1502 = sld [smem:[#allocation6 + $0x3a]]
        %v1503 = vstv %s1502
        %v1504 = vmul.f32 %v1503, 0.0
        %v1505 = vmul.f32 %v1503, %v677
        %v1506 = vmul.f32 %v1503, %v678
        %v1510 = vrot.slane %v1504, 1
        %v1511 = vrot.slane %v1505, 1
        %v1512 = vrot.slane %v1506, 1
        %1513 = vrot.lane.b32.xlu0 %v1510, 112
        %v1514 = vpop.permute.xlu0 %1513
        %1515 = vrot.lane.b32.xlu0 %v1511, 112
        %v1516 = vpop.permute.xlu0 %1515
        %1517 = vrot.lane.b32.xlu0 %v1512, 112
        %v1518 = vpop.permute.xlu0 %1517
        %v1519 = vsel %vm703, %v1514, %v1516
        %v1520 = vsel %vm703, %v1516, %v1518
        %v1524 = vadd.f32 %v1499, %v1519
        %v1525 = vadd.f32 %v1500, %v1520
        %v1526 = vadd.f32 %v1501, %v1518
        %s1527 = sld [smem:[#allocation6 + $0x41]]
        %v1528 = vstv %s1527
        %v1529 = vmul.f32 %v1528, 0.0
        %v1530 = vmul.f32 %v1528, %v677
        %v1531 = vmul.f32 %v1528, %v678
        %v1535 = vrot.slane %v1529, 1
        %v1536 = vrot.slane %v1530, 1
        %v1537 = vrot.slane %v1531, 1
        %1538 = vrot.lane.b32.xlu0 %v1535, 96
        %v1539 = vpop.permute.xlu0 %1538
        %1540 = vrot.lane.b32.xlu0 %v1536, 96
        %v1541 = vpop.permute.xlu0 %1540
        %1542 = vrot.lane.b32.xlu0 %v1537, 96
        %v1543 = vpop.permute.xlu0 %1542
        %v1544 = vsel %vm726, %v1539, %v1541
        %v1545 = vsel %vm726, %v1541, %v1543
        %v1549 = vadd.f32 %v1524, %v1544
        %v1550 = vadd.f32 %v1525, %v1545
        %v1551 = vadd.f32 %v1526, %v1543
        %s1552 = sld [smem:[#allocation6 + $0x48]]
        %v1553 = vstv %s1552
        %v1554 = vmul.f32 %v1553, 0.0
        %v1555 = vmul.f32 %v1553, %v677
        %v1556 = vmul.f32 %v1553, %v678
        %v1560 = vrot.slane %v1554, 1
        %v1561 = vrot.slane %v1555, 1
        %v1562 = vrot.slane %v1556, 1
        %1563 = vrot.lane.b32.xlu0 %v1560, 80
        %v1564 = vpop.permute.xlu0 %1563
        %1565 = vrot.lane.b32.xlu0 %v1561, 80
        %v1566 = vpop.permute.xlu0 %1565
        %1567 = vrot.lane.b32.xlu0 %v1562, 80
        %v1568 = vpop.permute.xlu0 %1567
        %v1569 = vsel %vm749, %v1564, %v1566
        %v1570 = vsel %vm749, %v1566, %v1568
        %v1574 = vadd.f32 %v1549, %v1569
        %v1575 = vadd.f32 %v1550, %v1570
        %v1576 = vadd.f32 %v1551, %v1568
        %s1577 = sld [smem:[#allocation6 + $0x4f]]
        %v1578 = vstv %s1577
        %v1579 = vmul.f32 %v1578, %v677
        %v1580 = vmul.f32 %v1578, %v678
        %v1581 = vmul.f32 %v1578, 0.0
        %v1585 = vrot.slane %v1579, 1
        %v1586 = vrot.slane %v1580, 1
        %v1587 = vrot.slane %v1581, 1
        %1588 = vrot.lane.b32.xlu0 %v1585, 64
        %v1589 = vpop.permute.xlu0 %1588
        %1590 = vrot.lane.b32.xlu0 %v1586, 64
        %v1591 = vpop.permute.xlu0 %1590
        %1592 = vrot.lane.b32.xlu0 %v1587, 64
        %v1593 = vpop.permute.xlu0 %1592
        %v1594 = vsel %vm772, %v1589, %v1591
        %v1595 = vsel %vm772, %v1591, %v1593
        %v1599 = vadd.f32 %v1574, %v1589
        %v1600 = vadd.f32 %v1575, %v1594
        %v1601 = vadd.f32 %v1576, %v1595
        %s1602 = sld [smem:[#allocation6 + $0x56]]
        %v1603 = vstv %s1602
        %v1604 = vmul.f32 %v1603, %v677
        %v1605 = vmul.f32 %v1603, %v678
        %v1606 = vmul.f32 %v1603, 0.0
        %v1610 = vrot.slane %v1604, 1
        %v1611 = vrot.slane %v1605, 1
        %v1612 = vrot.slane %v1606, 1
        %1613 = vrot.lane.b32.xlu0 %v1610, 48
        %v1614 = vpop.permute.xlu0 %1613
        %1615 = vrot.lane.b32.xlu0 %v1611, 48
        %v1616 = vpop.permute.xlu0 %1615
        %1617 = vrot.lane.b32.xlu0 %v1612, 48
        %v1618 = vpop.permute.xlu0 %1617
        %v1619 = vsel %vm795, %v1614, %v1616
        %v1620 = vsel %vm795, %v1616, %v1618
        %v1624 = vadd.f32 %v1599, %v1614
        %v1625 = vadd.f32 %v1600, %v1619
        %v1626 = vadd.f32 %v1601, %v1620
        %s1627 = sld [smem:[#allocation6 + $0x5d]]
        %v1628 = vstv %s1627
        %v1629 = vmul.f32 %v1628, %v677
        %v1630 = vmul.f32 %v1628, %v678
        %v1631 = vmul.f32 %v1628, 0.0
        %v1635 = vrot.slane %v1629, 1
        %v1636 = vrot.slane %v1630, 1
        %v1637 = vrot.slane %v1631, 1
        %1638 = vrot.lane.b32.xlu0 %v1635, 32
        %v1639 = vpop.permute.xlu0 %1638
        %1640 = vrot.lane.b32.xlu0 %v1636, 32
        %v1641 = vpop.permute.xlu0 %1640
        %1642 = vrot.lane.b32.xlu0 %v1637, 32
        %v1643 = vpop.permute.xlu0 %1642
        %v1644 = vsel %vm360, %v1639, %v1641
        %v1645 = vsel %vm360, %v1641, %v1643
        %v1649 = vadd.f32 %v1624, %v1639
        %v1650 = vadd.f32 %v1625, %v1644
        %v1651 = vadd.f32 %v1626, %v1645
        %v1655 = vrot.slane %v1649, 6
        %v1656 = vrot.slane %v1650, 6
        %v1657 = vrot.slane %v1651, 6
        %1658 = vrot.lane.b32.xlu0 %v1655, 49
        %v1659 = vpop.permute.xlu0 %1658
        %1660 = vrot.lane.b32.xlu0 %v1656, 49
        %v1661 = vpop.permute.xlu0 %1660
        %1662 = vrot.lane.b32.xlu0 %v1657, 49
        %v1663 = vpop.permute.xlu0 %1662
        %vm1664 = vcmask 400384
        %v1665 = vsel %vm1664, %v1659, %v1661
        %v1666 = vsel %vm1664, %v1661, %v1663
        %v1669 = vmul.f32 %v679, %v1665
        %v1670 = vmul.f32 %v680, %v1666
        %v1673 = vrot.slane %v1669, 2
        %v1674 = vrot.slane %v1670, 2
        %v1677 = vadd.f32 %v1343, %v1673
        %v1678 = vadd.f32 %v1344, %v1674
        %s1679 = sld [smem:[#allocation6 + $0x3]]
        %v1680 = vstv %s1679
        %v1681 = vmul.f32 %v1680, 0.0
        %v1682 = vmul.f32 %v1680, %v677
        %v1683 = vmul.f32 %v1680, %v678
        %v1684 = vadd.f32 %v1681, 0.0
        %v1685 = vadd.f32 %v1682, 0.0
        %v1686 = vadd.f32 %v1683, 0.0
        %s1687 = sld [smem:[#allocation6 + $0xa]]
        %v1688 = vstv %s1687
        %v1689 = vmul.f32 %v1688, 0.0
        %v1690 = vmul.f32 %v1688, %v677
        %v1691 = vmul.f32 %v1688, %v678
        %1695 = vrot.lane.b32.xlu0 %v1689, 112
        %v1696 = vpop.permute.xlu0 %1695
        %1697 = vrot.lane.b32.xlu0 %v1690, 112
        %v1698 = vpop.permute.xlu0 %1697
        %1699 = vrot.lane.b32.xlu0 %v1691, 112
        %v1700 = vpop.permute.xlu0 %1699
        %v1701 = vsel %vm703, %v1696, %v1698
        %v1702 = vsel %vm703, %v1698, %v1700
        %v1706 = vadd.f32 %v1684, %v1701
        %v1707 = vadd.f32 %v1685, %v1702
        %v1708 = vadd.f32 %v1686, %v1700
        %s1709 = sld [smem:[#allocation6 + $0x11]]
        %v1710 = vstv %s1709
        %v1711 = vmul.f32 %v1710, 0.0
        %v1712 = vmul.f32 %v1710, %v677
        %v1713 = vmul.f32 %v1710, %v678
        %1717 = vrot.lane.b32.xlu0 %v1711, 96
        %v1718 = vpop.permute.xlu0 %1717
        %1719 = vrot.lane.b32.xlu0 %v1712, 96
        %v1720 = vpop.permute.xlu0 %1719
        %1721 = vrot.lane.b32.xlu0 %v1713, 96
        %v1722 = vpop.permute.xlu0 %1721
        %v1723 = vsel %vm726, %v1718, %v1720
        %v1724 = vsel %vm726, %v1720, %v1722
        %v1728 = vadd.f32 %v1706, %v1723
        %v1729 = vadd.f32 %v1707, %v1724
        %v1730 = vadd.f32 %v1708, %v1722
        %s1731 = sld [smem:[#allocation6 + $0x18]]
        %v1732 = vstv %s1731
        %v1733 = vmul.f32 %v1732, %v677
        %v1734 = vmul.f32 %v1732, %v678
        %1737 = vrot.lane.b32.xlu0 %v1733, 80
        %v1738 = vpop.permute.xlu0 %1737
        %1739 = vrot.lane.b32.xlu0 %v1734, 80
        %v1740 = vpop.permute.xlu0 %1739
        %v1741 = vsel %vm749, %v1738, %v1740
        %v1745 = vadd.f32 %v1728, %v1738
        %v1746 = vadd.f32 %v1729, %v1741
        %v1747 = vadd.f32 %v1730, %v1740
        %s1748 = sld [smem:[#allocation6 + $0x1f]]
        %v1749 = vstv %s1748
        %v1750 = vmul.f32 %v1749, %v677
        %v1751 = vmul.f32 %v1749, %v678
        %v1752 = vmul.f32 %v1749, 0.0
        %1756 = vrot.lane.b32.xlu0 %v1750, 64
        %v1757 = vpop.permute.xlu0 %1756
        %1758 = vrot.lane.b32.xlu0 %v1751, 64
        %v1759 = vpop.permute.xlu0 %1758
        %1760 = vrot.lane.b32.xlu0 %v1752, 64
        %v1761 = vpop.permute.xlu0 %1760
        %v1762 = vsel %vm772, %v1757, %v1759
        %v1763 = vsel %vm772, %v1759, %v1761
        %v1767 = vadd.f32 %v1745, %v1757
        %v1768 = vadd.f32 %v1746, %v1762
        %v1769 = vadd.f32 %v1747, %v1763
        %s1770 = sld [smem:[#allocation6 + $0x26]]
        %v1771 = vstv %s1770
        %v1772 = vmul.f32 %v1771, %v677
        %v1773 = vmul.f32 %v1771, %v678
        %v1774 = vmul.f32 %v1771, 0.0
        %1778 = vrot.lane.b32.xlu0 %v1772, 48
        %v1779 = vpop.permute.xlu0 %1778
        %1780 = vrot.lane.b32.xlu0 %v1773, 48
        %v1781 = vpop.permute.xlu0 %1780
        %1782 = vrot.lane.b32.xlu0 %v1774, 48
        %v1783 = vpop.permute.xlu0 %1782
        %v1784 = vsel %vm795, %v1779, %v1781
        %v1785 = vsel %vm795, %v1781, %v1783
        %v1789 = vadd.f32 %v1767, %v1779
        %v1790 = vadd.f32 %v1768, %v1784
        %v1791 = vadd.f32 %v1769, %v1785
        %s1792 = sld [smem:[#allocation6 + $0x2d]]
        %v1793 = vstv %s1792
        %v1794 = vmul.f32 %v1793, %v677
        %v1795 = vmul.f32 %v1793, %v678
        %v1796 = vmul.f32 %v1793, 0.0
        %1800 = vrot.lane.b32.xlu0 %v1794, 32
        %v1801 = vpop.permute.xlu0 %1800
        %1802 = vrot.lane.b32.xlu0 %v1795, 32
        %v1803 = vpop.permute.xlu0 %1802
        %1804 = vrot.lane.b32.xlu0 %v1796, 32
        %v1805 = vpop.permute.xlu0 %1804
        %v1806 = vsel %vm360, %v1801, %v1803
        %v1807 = vsel %vm360, %v1803, %v1805
        %v1811 = vadd.f32 %v1789, %v1801
        %v1812 = vadd.f32 %v1790, %v1806
        %v1813 = vadd.f32 %v1791, %v1807
        %s1814 = sld [smem:[#allocation6 + $0x34]]
        %v1815 = vstv %s1814
        %v1816 = vmul.f32 %v1815, 0.0
        %v1817 = vmul.f32 %v1815, %v677
        %v1818 = vmul.f32 %v1815, %v678
        %v1822 = vrot.slane %v1816, 1
        %v1823 = vrot.slane %v1817, 1
        %v1824 = vrot.slane %v1818, 1
        %v1828 = vadd.f32 %v1811, %v1822
        %v1829 = vadd.f32 %v1812, %v1823
        %v1830 = vadd.f32 %v1813, %v1824
        %s1831 = sld [smem:[#allocation6 + $0x3b]]
        %v1832 = vstv %s1831
        %v1833 = vmul.f32 %v1832, 0.0
        %v1834 = vmul.f32 %v1832, %v677
        %v1835 = vmul.f32 %v1832, %v678
        %v1839 = vrot.slane %v1833, 1
        %v1840 = vrot.slane %v1834, 1
        %v1841 = vrot.slane %v1835, 1
        %1842 = vrot.lane.b32.xlu0 %v1839, 112
        %v1843 = vpop.permute.xlu0 %1842
        %1844 = vrot.lane.b32.xlu0 %v1840, 112
        %v1845 = vpop.permute.xlu0 %1844
        %1846 = vrot.lane.b32.xlu0 %v1841, 112
        %v1847 = vpop.permute.xlu0 %1846
        %v1848 = vsel %vm703, %v1843, %v1845
        %v1849 = vsel %vm703, %v1845, %v1847
        %v1853 = vadd.f32 %v1828, %v1848
        %v1854 = vadd.f32 %v1829, %v1849
        %v1855 = vadd.f32 %v1830, %v1847
        %s1856 = sld [smem:[#allocation6 + $0x42]]
        %v1857 = vstv %s1856
        %v1858 = vmul.f32 %v1857, 0.0
        %v1859 = vmul.f32 %v1857, %v677
        %v1860 = vmul.f32 %v1857, %v678
        %v1864 = vrot.slane %v1858, 1
        %v1865 = vrot.slane %v1859, 1
        %v1866 = vrot.slane %v1860, 1
        %1867 = vrot.lane.b32.xlu0 %v1864, 96
        %v1868 = vpop.permute.xlu0 %1867
        %1869 = vrot.lane.b32.xlu0 %v1865, 96
        %v1870 = vpop.permute.xlu0 %1869
        %1871 = vrot.lane.b32.xlu0 %v1866, 96
        %v1872 = vpop.permute.xlu0 %1871
        %v1873 = vsel %vm726, %v1868, %v1870
        %v1874 = vsel %vm726, %v1870, %v1872
        %v1878 = vadd.f32 %v1853, %v1873
        %v1879 = vadd.f32 %v1854, %v1874
        %v1880 = vadd.f32 %v1855, %v1872
        %s1881 = sld [smem:[#allocation6 + $0x49]]
        %v1882 = vstv %s1881
        %v1883 = vmul.f32 %v1882, %v677
        %v1884 = vmul.f32 %v1882, %v678
        %v1887 = vrot.slane %v1883, 1
        %v1888 = vrot.slane %v1884, 1
        %1889 = vrot.lane.b32.xlu0 %v1887, 80
        %v1890 = vpop.permute.xlu0 %1889
        %1891 = vrot.lane.b32.xlu0 %v1888, 80
        %v1892 = vpop.permute.xlu0 %1891
        %v1893 = vsel %vm749, %v1890, %v1892
        %v1897 = vadd.f32 %v1878, %v1890
        %v1898 = vadd.f32 %v1879, %v1893
        %v1899 = vadd.f32 %v1880, %v1892
        %s1900 = sld [smem:[#allocation6 + $0x50]]
        %v1901 = vstv %s1900
        %v1902 = vmul.f32 %v1901, %v677
        %v1903 = vmul.f32 %v1901, %v678
        %v1904 = vmul.f32 %v1901, 0.0
        %v1908 = vrot.slane %v1902, 1
        %v1909 = vrot.slane %v1903, 1
        %v1910 = vrot.slane %v1904, 1
        %1911 = vrot.lane.b32.xlu0 %v1908, 64
        %v1912 = vpop.permute.xlu0 %1911
        %1913 = vrot.lane.b32.xlu0 %v1909, 64
        %v1914 = vpop.permute.xlu0 %1913
        %1915 = vrot.lane.b32.xlu0 %v1910, 64
        %v1916 = vpop.permute.xlu0 %1915
        %v1917 = vsel %vm772, %v1912, %v1914
        %v1918 = vsel %vm772, %v1914, %v1916
        %v1922 = vadd.f32 %v1897, %v1912
        %v1923 = vadd.f32 %v1898, %v1917
        %v1924 = vadd.f32 %v1899, %v1918
        %s1925 = sld [smem:[#allocation6 + $0x57]]
        %v1926 = vstv %s1925
        %v1927 = vmul.f32 %v1926, %v677
        %v1928 = vmul.f32 %v1926, %v678
        %v1929 = vmul.f32 %v1926, 0.0
        %v1933 = vrot.slane %v1927, 1
        %v1934 = vrot.slane %v1928, 1
        %v1935 = vrot.slane %v1929, 1
        %1936 = vrot.lane.b32.xlu0 %v1933, 48
        %v1937 = vpop.permute.xlu0 %1936
        %1938 = vrot.lane.b32.xlu0 %v1934, 48
        %v1939 = vpop.permute.xlu0 %1938
        %1940 = vrot.lane.b32.xlu0 %v1935, 48
        %v1941 = vpop.permute.xlu0 %1940
        %v1942 = vsel %vm795, %v1937, %v1939
        %v1943 = vsel %vm795, %v1939, %v1941
        %v1947 = vadd.f32 %v1922, %v1937
        %v1948 = vadd.f32 %v1923, %v1942
        %v1949 = vadd.f32 %v1924, %v1943
        %s1950 = sld [smem:[#allocation6 + $0x5e]]
        %v1951 = vstv %s1950
        %v1952 = vmul.f32 %v1951, %v677
        %v1953 = vmul.f32 %v1951, %v678
        %v1954 = vmul.f32 %v1951, 0.0
        %v1958 = vrot.slane %v1952, 1
        %v1959 = vrot.slane %v1953, 1
        %v1960 = vrot.slane %v1954, 1
        %1961 = vrot.lane.b32.xlu0 %v1958, 32
        %v1962 = vpop.permute.xlu0 %1961
        %1963 = vrot.lane.b32.xlu0 %v1959, 32
        %v1964 = vpop.permute.xlu0 %1963
        %1965 = vrot.lane.b32.xlu0 %v1960, 32
        %v1966 = vpop.permute.xlu0 %1965
        %v1967 = vsel %vm360, %v1962, %v1964
        %v1968 = vsel %vm360, %v1964, %v1966
        %v1972 = vadd.f32 %v1947, %v1962
        %v1973 = vadd.f32 %v1948, %v1967
        %v1974 = vadd.f32 %v1949, %v1968
        %v1978 = vrot.slane %v1972, 5
        %v1979 = vrot.slane %v1973, 5
        %v1980 = vrot.slane %v1974, 5
        %1981 = vrot.lane.b32.xlu0 %v1978, 48
        %v1982 = vpop.permute.xlu0 %1981
        %1983 = vrot.lane.b32.xlu0 %v1979, 48
        %v1984 = vpop.permute.xlu0 %1983
        %1985 = vrot.lane.b32.xlu0 %v1980, 48
        %v1986 = vpop.permute.xlu0 %1985
        %v1987 = vsel %vm795, %v1982, %v1984
        %v1988 = vsel %vm795, %v1984, %v1986
        %v1991 = vmul.f32 %v679, %v1987
        %v1992 = vmul.f32 %v680, %v1988
        %v1995 = vrot.slane %v1991, 3
        %v1996 = vrot.slane %v1992, 3
        %v1999 = vadd.f32 %v1677, %v1995
        %v2000 = vadd.f32 %v1678, %v1996
        %s2001 = sld [smem:[#allocation6 + $0x4]]
        %v2002 = vstv %s2001
        %v2003 = vmul.f32 %v2002, 0.0
        %v2004 = vmul.f32 %v2002, %v677
        %v2005 = vmul.f32 %v2002, %v678
        %v2006 = vadd.f32 %v2003, 0.0
        %v2007 = vadd.f32 %v2004, 0.0
        %v2008 = vadd.f32 %v2005, 0.0
        %s2009 = sld [smem:[#allocation6 + $0xb]]
        %v2010 = vstv %s2009
        %v2011 = vmul.f32 %v2010, 0.0
        %v2012 = vmul.f32 %v2010, %v677
        %v2013 = vmul.f32 %v2010, %v678
        %2017 = vrot.lane.b32.xlu0 %v2011, 112
        %v2018 = vpop.permute.xlu0 %2017
        %2019 = vrot.lane.b32.xlu0 %v2012, 112
        %v2020 = vpop.permute.xlu0 %2019
        %2021 = vrot.lane.b32.xlu0 %v2013, 112
        %v2022 = vpop.permute.xlu0 %2021
        %v2023 = vsel %vm703, %v2018, %v2020
        %v2024 = vsel %vm703, %v2020, %v2022
        %v2028 = vadd.f32 %v2006, %v2023
        %v2029 = vadd.f32 %v2007, %v2024
        %v2030 = vadd.f32 %v2008, %v2022
        %s2031 = sld [smem:[#allocation6 + $0x12]]
        %v2032 = vstv %s2031
        %v2033 = vmul.f32 %v2032, 0.0
        %v2034 = vmul.f32 %v2032, %v677
        %v2035 = vmul.f32 %v2032, %v678
        %2039 = vrot.lane.b32.xlu0 %v2033, 96
        %v2040 = vpop.permute.xlu0 %2039
        %2041 = vrot.lane.b32.xlu0 %v2034, 96
        %v2042 = vpop.permute.xlu0 %2041
        %2043 = vrot.lane.b32.xlu0 %v2035, 96
        %v2044 = vpop.permute.xlu0 %2043
        %v2045 = vsel %vm726, %v2040, %v2042
        %v2046 = vsel %vm726, %v2042, %v2044
        %v2050 = vadd.f32 %v2028, %v2045
        %v2051 = vadd.f32 %v2029, %v2046
        %v2052 = vadd.f32 %v2030, %v2044
        %s2053 = sld [smem:[#allocation6 + $0x19]]
        %v2054 = vstv %s2053
        %v2055 = vmul.f32 %v2054, %v677
        %v2056 = vmul.f32 %v2054, %v678
        %v2057 = vmul.f32 %v2054, 0.0
        %2061 = vrot.lane.b32.xlu0 %v2055, 80
        %v2062 = vpop.permute.xlu0 %2061
        %2063 = vrot.lane.b32.xlu0 %v2056, 80
        %v2064 = vpop.permute.xlu0 %2063
        %2065 = vrot.lane.b32.xlu0 %v2057, 80
        %v2066 = vpop.permute.xlu0 %2065
        %v2067 = vsel %vm749, %v2062, %v2064
        %v2068 = vsel %vm749, %v2064, %v2066
        %v2072 = vadd.f32 %v2050, %v2062
        %v2073 = vadd.f32 %v2051, %v2067
        %v2074 = vadd.f32 %v2052, %v2068
        %s2075 = sld [smem:[#allocation6 + $0x20]]
        %v2076 = vstv %s2075
        %v2077 = vmul.f32 %v2076, %v677
        %v2078 = vmul.f32 %v2076, %v678
        %v2079 = vmul.f32 %v2076, 0.0
        %2083 = vrot.lane.b32.xlu0 %v2077, 64
        %v2084 = vpop.permute.xlu0 %2083
        %2085 = vrot.lane.b32.xlu0 %v2078, 64
        %v2086 = vpop.permute.xlu0 %2085
        %2087 = vrot.lane.b32.xlu0 %v2079, 64
        %v2088 = vpop.permute.xlu0 %2087
        %v2089 = vsel %vm772, %v2084, %v2086
        %v2090 = vsel %vm772, %v2086, %v2088
        %v2094 = vadd.f32 %v2072, %v2084
        %v2095 = vadd.f32 %v2073, %v2089
        %v2096 = vadd.f32 %v2074, %v2090
        %s2097 = sld [smem:[#allocation6 + $0x27]]
        %v2098 = vstv %s2097
        %v2099 = vmul.f32 %v2098, %v677
        %v2100 = vmul.f32 %v2098, %v678
        %v2101 = vmul.f32 %v2098, 0.0
        %2105 = vrot.lane.b32.xlu0 %v2099, 48
        %v2106 = vpop.permute.xlu0 %2105
        %2107 = vrot.lane.b32.xlu0 %v2100, 48
        %v2108 = vpop.permute.xlu0 %2107
        %2109 = vrot.lane.b32.xlu0 %v2101, 48
        %v2110 = vpop.permute.xlu0 %2109
        %v2111 = vsel %vm795, %v2106, %v2108
        %v2112 = vsel %vm795, %v2108, %v2110
        %v2116 = vadd.f32 %v2094, %v2106
        %v2117 = vadd.f32 %v2095, %v2111
        %v2118 = vadd.f32 %v2096, %v2112
        %s2119 = sld [smem:[#allocation6 + $0x2e]]
        %v2120 = vstv %s2119
        %v2121 = vmul.f32 %v2120, %v677
        %v2122 = vmul.f32 %v2120, %v678
        %v2123 = vmul.f32 %v2120, 0.0
        %2127 = vrot.lane.b32.xlu0 %v2121, 32
        %v2128 = vpop.permute.xlu0 %2127
        %2129 = vrot.lane.b32.xlu0 %v2122, 32
        %v2130 = vpop.permute.xlu0 %2129
        %2131 = vrot.lane.b32.xlu0 %v2123, 32
        %v2132 = vpop.permute.xlu0 %2131
        %v2133 = vsel %vm360, %v2128, %v2130
        %v2134 = vsel %vm360, %v2130, %v2132
        %v2138 = vadd.f32 %v2116, %v2128
        %v2139 = vadd.f32 %v2117, %v2133
        %v2140 = vadd.f32 %v2118, %v2134
        %s2141 = sld [smem:[#allocation6 + $0x35]]
        %v2142 = vstv %s2141
        %v2143 = vmul.f32 %v2142, 0.0
        %v2144 = vmul.f32 %v2142, %v677
        %v2145 = vmul.f32 %v2142, %v678
        %v2149 = vrot.slane %v2143, 1
        %v2150 = vrot.slane %v2144, 1
        %v2151 = vrot.slane %v2145, 1
        %v2155 = vadd.f32 %v2138, %v2149
        %v2156 = vadd.f32 %v2139, %v2150
        %v2157 = vadd.f32 %v2140, %v2151
        %s2158 = sld [smem:[#allocation6 + $0x3c]]
        %v2159 = vstv %s2158
        %v2160 = vmul.f32 %v2159, 0.0
        %v2161 = vmul.f32 %v2159, %v677
        %v2162 = vmul.f32 %v2159, %v678
        %v2166 = vrot.slane %v2160, 1
        %v2167 = vrot.slane %v2161, 1
        %v2168 = vrot.slane %v2162, 1
        %2169 = vrot.lane.b32.xlu0 %v2166, 112
        %v2170 = vpop.permute.xlu0 %2169
        %2171 = vrot.lane.b32.xlu0 %v2167, 112
        %v2172 = vpop.permute.xlu0 %2171
        %2173 = vrot.lane.b32.xlu0 %v2168, 112
        %v2174 = vpop.permute.xlu0 %2173
        %v2175 = vsel %vm703, %v2170, %v2172
        %v2176 = vsel %vm703, %v2172, %v2174
        %v2180 = vadd.f32 %v2155, %v2175
        %v2181 = vadd.f32 %v2156, %v2176
        %v2182 = vadd.f32 %v2157, %v2174
        %s2183 = sld [smem:[#allocation6 + $0x43]]
        %v2184 = vstv %s2183
        %v2185 = vmul.f32 %v2184, 0.0
        %v2186 = vmul.f32 %v2184, %v677
        %v2187 = vmul.f32 %v2184, %v678
        %v2191 = vrot.slane %v2185, 1
        %v2192 = vrot.slane %v2186, 1
        %v2193 = vrot.slane %v2187, 1
        %2194 = vrot.lane.b32.xlu0 %v2191, 96
        %v2195 = vpop.permute.xlu0 %2194
        %2196 = vrot.lane.b32.xlu0 %v2192, 96
        %v2197 = vpop.permute.xlu0 %2196
        %2198 = vrot.lane.b32.xlu0 %v2193, 96
        %v2199 = vpop.permute.xlu0 %2198
        %v2200 = vsel %vm726, %v2195, %v2197
        %v2201 = vsel %vm726, %v2197, %v2199
        %v2205 = vadd.f32 %v2180, %v2200
        %v2206 = vadd.f32 %v2181, %v2201
        %v2207 = vadd.f32 %v2182, %v2199
        %s2208 = sld [smem:[#allocation6 + $0x4a]]
        %v2209 = vstv %s2208
        %v2210 = vmul.f32 %v2209, %v677
        %v2211 = vmul.f32 %v2209, %v678
        %v2212 = vmul.f32 %v2209, 0.0
        %v2216 = vrot.slane %v2210, 1
        %v2217 = vrot.slane %v2211, 1
        %v2218 = vrot.slane %v2212, 1
        %2219 = vrot.lane.b32.xlu0 %v2216, 80
        %v2220 = vpop.permute.xlu0 %2219
        %2221 = vrot.lane.b32.xlu0 %v2217, 80
        %v2222 = vpop.permute.xlu0 %2221
        %2223 = vrot.lane.b32.xlu0 %v2218, 80
        %v2224 = vpop.permute.xlu0 %2223
        %v2225 = vsel %vm749, %v2220, %v2222
        %v2226 = vsel %vm749, %v2222, %v2224
        %v2230 = vadd.f32 %v2205, %v2220
        %v2231 = vadd.f32 %v2206, %v2225
        %v2232 = vadd.f32 %v2207, %v2226
        %s2233 = sld [smem:[#allocation6 + $0x51]]
        %v2234 = vstv %s2233
        %v2235 = vmul.f32 %v2234, %v677
        %v2236 = vmul.f32 %v2234, %v678
        %v2237 = vmul.f32 %v2234, 0.0
        %v2241 = vrot.slane %v2235, 1
        %v2242 = vrot.slane %v2236, 1
        %v2243 = vrot.slane %v2237, 1
        %2244 = vrot.lane.b32.xlu0 %v2241, 64
        %v2245 = vpop.permute.xlu0 %2244
        %2246 = vrot.lane.b32.xlu0 %v2242, 64
        %v2247 = vpop.permute.xlu0 %2246
        %2248 = vrot.lane.b32.xlu0 %v2243, 64
        %v2249 = vpop.permute.xlu0 %2248
        %v2250 = vsel %vm772, %v2245, %v2247
        %v2251 = vsel %vm772, %v2247, %v2249
        %v2255 = vadd.f32 %v2230, %v2245
        %v2256 = vadd.f32 %v2231, %v2250
        %v2257 = vadd.f32 %v2232, %v2251
        %s2258 = sld [smem:[#allocation6 + $0x58]]
        %v2259 = vstv %s2258
        %v2260 = vmul.f32 %v2259, %v677
        %v2261 = vmul.f32 %v2259, %v678
        %v2262 = vmul.f32 %v2259, 0.0
        %v2266 = vrot.slane %v2260, 1
        %v2267 = vrot.slane %v2261, 1
        %v2268 = vrot.slane %v2262, 1
        %2269 = vrot.lane.b32.xlu0 %v2266, 48
        %v2270 = vpop.permute.xlu0 %2269
        %2271 = vrot.lane.b32.xlu0 %v2267, 48
        %v2272 = vpop.permute.xlu0 %2271
        %2273 = vrot.lane.b32.xlu0 %v2268, 48
        %v2274 = vpop.permute.xlu0 %2273
        %v2275 = vsel %vm795, %v2270, %v2272
        %v2276 = vsel %vm795, %v2272, %v2274
        %v2280 = vadd.f32 %v2255, %v2270
        %v2281 = vadd.f32 %v2256, %v2275
        %v2282 = vadd.f32 %v2257, %v2276
        %s2283 = sld [smem:[#allocation6 + $0x5f]]
        %v2284 = vstv %s2283
        %v2285 = vmul.f32 %v2284, %v677
        %v2286 = vmul.f32 %v2284, %v678
        %v2287 = vmul.f32 %v2284, 0.0
        %v2291 = vrot.slane %v2285, 1
        %v2292 = vrot.slane %v2286, 1
        %v2293 = vrot.slane %v2287, 1
        %2294 = vrot.lane.b32.xlu0 %v2291, 32
        %v2295 = vpop.permute.xlu0 %2294
        %2296 = vrot.lane.b32.xlu0 %v2292, 32
        %v2297 = vpop.permute.xlu0 %2296
        %2298 = vrot.lane.b32.xlu0 %v2293, 32
        %v2299 = vpop.permute.xlu0 %2298
        %v2300 = vsel %vm360, %v2295, %v2297
        %v2301 = vsel %vm360, %v2297, %v2299
        %v2305 = vadd.f32 %v2280, %v2295
        %v2306 = vadd.f32 %v2281, %v2300
        %v2307 = vadd.f32 %v2282, %v2301
        %v2311 = vrot.slane %v2305, 4
        %v2312 = vrot.slane %v2306, 4
        %v2313 = vrot.slane %v2307, 4
        %2314 = vrot.lane.b32.xlu0 %v2311, 47
        %v2315 = vpop.permute.xlu0 %2314
        %2316 = vrot.lane.b32.xlu0 %v2312, 47
        %v2317 = vpop.permute.xlu0 %2316
        %2318 = vrot.lane.b32.xlu0 %v2313, 47
        %v2319 = vpop.permute.xlu0 %2318
        %vm2320 = vcmask 384000
        %v2321 = vsel %vm2320, %v2315, %v2317
        %v2322 = vsel %vm2320, %v2317, %v2319
        %v2325 = vmul.f32 %v679, %v2321
        %v2326 = vmul.f32 %v680, %v2322
        %v2329 = vrot.slane %v2325, 4
        %v2330 = vrot.slane %v2326, 4
        %v2333 = vadd.f32 %v1999, %v2329
        %v2334 = vadd.f32 %v2000, %v2330
        %s2335 = sld [smem:[#allocation6 + $0x5]]
        %v2336 = vstv %s2335
        %v2337 = vmul.f32 %v2336, 0.0
        %v2338 = vmul.f32 %v2336, %v677
        %v2339 = vmul.f32 %v2336, %v678
        %v2340 = vadd.f32 %v2337, 0.0
        %v2341 = vadd.f32 %v2338, 0.0
        %v2342 = vadd.f32 %v2339, 0.0
        %s2343 = sld [smem:[#allocation6 + $0xc]]
        %v2344 = vstv %s2343
        %v2345 = vmul.f32 %v2344, 0.0
        %v2346 = vmul.f32 %v2344, %v677
        %v2347 = vmul.f32 %v2344, %v678
        %2351 = vrot.lane.b32.xlu0 %v2345, 112
        %v2352 = vpop.permute.xlu0 %2351
        %2353 = vrot.lane.b32.xlu0 %v2346, 112
        %v2354 = vpop.permute.xlu0 %2353
        %2355 = vrot.lane.b32.xlu0 %v2347, 112
        %v2356 = vpop.permute.xlu0 %2355
        %v2357 = vsel %vm703, %v2352, %v2354
        %v2358 = vsel %vm703, %v2354, %v2356
        %v2362 = vadd.f32 %v2340, %v2357
        %v2363 = vadd.f32 %v2341, %v2358
        %v2364 = vadd.f32 %v2342, %v2356
        %s2365 = sld [smem:[#allocation6 + $0x13]]
        %v2366 = vstv %s2365
        %v2367 = vmul.f32 %v2366, 0.0
        %v2368 = vmul.f32 %v2366, %v677
        %v2369 = vmul.f32 %v2366, %v678
        %2373 = vrot.lane.b32.xlu0 %v2367, 96
        %v2374 = vpop.permute.xlu0 %2373
        %2375 = vrot.lane.b32.xlu0 %v2368, 96
        %v2376 = vpop.permute.xlu0 %2375
        %2377 = vrot.lane.b32.xlu0 %v2369, 96
        %v2378 = vpop.permute.xlu0 %2377
        %v2379 = vsel %vm726, %v2374, %v2376
        %v2380 = vsel %vm726, %v2376, %v2378
        %v2384 = vadd.f32 %v2362, %v2379
        %v2385 = vadd.f32 %v2363, %v2380
        %v2386 = vadd.f32 %v2364, %v2378
        %s2387 = sld [smem:[#allocation6 + $0x1a]]
        %v2388 = vstv %s2387
        %v2389 = vmul.f32 %v2388, %v677
        %v2390 = vmul.f32 %v2388, %v678
        %v2391 = vmul.f32 %v2388, 0.0
        %2395 = vrot.lane.b32.xlu0 %v2389, 80
        %v2396 = vpop.permute.xlu0 %2395
        %2397 = vrot.lane.b32.xlu0 %v2390, 80
        %v2398 = vpop.permute.xlu0 %2397
        %2399 = vrot.lane.b32.xlu0 %v2391, 80
        %v2400 = vpop.permute.xlu0 %2399
        %v2401 = vsel %vm749, %v2396, %v2398
        %v2402 = vsel %vm749, %v2398, %v2400
        %v2406 = vadd.f32 %v2384, %v2396
        %v2407 = vadd.f32 %v2385, %v2401
        %v2408 = vadd.f32 %v2386, %v2402
        %s2409 = sld [smem:[#allocation6 + $0x21]]
        %v2410 = vstv %s2409
        %v2411 = vmul.f32 %v2410, %v677
        %v2412 = vmul.f32 %v2410, %v678
        %v2413 = vmul.f32 %v2410, 0.0
        %2417 = vrot.lane.b32.xlu0 %v2411, 64
        %v2418 = vpop.permute.xlu0 %2417
        %2419 = vrot.lane.b32.xlu0 %v2412, 64
        %v2420 = vpop.permute.xlu0 %2419
        %2421 = vrot.lane.b32.xlu0 %v2413, 64
        %v2422 = vpop.permute.xlu0 %2421
        %v2423 = vsel %vm772, %v2418, %v2420
        %v2424 = vsel %vm772, %v2420, %v2422
        %v2428 = vadd.f32 %v2406, %v2418
        %v2429 = vadd.f32 %v2407, %v2423
        %v2430 = vadd.f32 %v2408, %v2424
        %s2431 = sld [smem:[#allocation6 + $0x28]]
        %v2432 = vstv %s2431
        %v2433 = vmul.f32 %v2432, %v677
        %v2434 = vmul.f32 %v2432, %v678
        %v2435 = vmul.f32 %v2432, 0.0
        %2439 = vrot.lane.b32.xlu0 %v2433, 48
        %v2440 = vpop.permute.xlu0 %2439
        %2441 = vrot.lane.b32.xlu0 %v2434, 48
        %v2442 = vpop.permute.xlu0 %2441
        %2443 = vrot.lane.b32.xlu0 %v2435, 48
        %v2444 = vpop.permute.xlu0 %2443
        %v2445 = vsel %vm795, %v2440, %v2442
        %v2446 = vsel %vm795, %v2442, %v2444
        %v2450 = vadd.f32 %v2428, %v2440
        %v2451 = vadd.f32 %v2429, %v2445
        %v2452 = vadd.f32 %v2430, %v2446
        %s2453 = sld [smem:[#allocation6 + $0x2f]]
        %v2454 = vstv %s2453
        %v2455 = vmul.f32 %v2454, %v677
        %v2456 = vmul.f32 %v2454, %v678
        %v2457 = vmul.f32 %v2454, 0.0
        %2461 = vrot.lane.b32.xlu0 %v2455, 32
        %v2462 = vpop.permute.xlu0 %2461
        %2463 = vrot.lane.b32.xlu0 %v2456, 32
        %v2464 = vpop.permute.xlu0 %2463
        %2465 = vrot.lane.b32.xlu0 %v2457, 32
        %v2466 = vpop.permute.xlu0 %2465
        %v2467 = vsel %vm360, %v2462, %v2464
        %v2468 = vsel %vm360, %v2464, %v2466
        %v2472 = vadd.f32 %v2450, %v2462
        %v2473 = vadd.f32 %v2451, %v2467
        %v2474 = vadd.f32 %v2452, %v2468
        %s2475 = sld [smem:[#allocation6 + $0x36]]
        %v2476 = vstv %s2475
        %v2477 = vmul.f32 %v2476, 0.0
        %v2478 = vmul.f32 %v2476, %v677
        %v2479 = vmul.f32 %v2476, %v678
        %v2483 = vrot.slane %v2477, 1
        %v2484 = vrot.slane %v2478, 1
        %v2485 = vrot.slane %v2479, 1
        %v2489 = vadd.f32 %v2472, %v2483
        %v2490 = vadd.f32 %v2473, %v2484
        %v2491 = vadd.f32 %v2474, %v2485
        %s2492 = sld [smem:[#allocation6 + $0x3d]]
        %v2493 = vstv %s2492
        %v2494 = vmul.f32 %v2493, 0.0
        %v2495 = vmul.f32 %v2493, %v677
        %v2496 = vmul.f32 %v2493, %v678
        %v2500 = vrot.slane %v2494, 1
        %v2501 = vrot.slane %v2495, 1
        %v2502 = vrot.slane %v2496, 1
        %2503 = vrot.lane.b32.xlu0 %v2500, 112
        %v2504 = vpop.permute.xlu0 %2503
        %2505 = vrot.lane.b32.xlu0 %v2501, 112
        %v2506 = vpop.permute.xlu0 %2505
        %2507 = vrot.lane.b32.xlu0 %v2502, 112
        %v2508 = vpop.permute.xlu0 %2507
        %v2509 = vsel %vm703, %v2504, %v2506
        %v2510 = vsel %vm703, %v2506, %v2508
        %v2514 = vadd.f32 %v2489, %v2509
        %v2515 = vadd.f32 %v2490, %v2510
        %v2516 = vadd.f32 %v2491, %v2508
        %s2517 = sld [smem:[#allocation6 + $0x44]]
        %v2518 = vstv %s2517
        %v2519 = vmul.f32 %v2518, 0.0
        %v2520 = vmul.f32 %v2518, %v677
        %v2521 = vmul.f32 %v2518, %v678
        %v2525 = vrot.slane %v2519, 1
        %v2526 = vrot.slane %v2520, 1
        %v2527 = vrot.slane %v2521, 1
        %2528 = vrot.lane.b32.xlu0 %v2525, 96
        %v2529 = vpop.permute.xlu0 %2528
        %2530 = vrot.lane.b32.xlu0 %v2526, 96
        %v2531 = vpop.permute.xlu0 %2530
        %2532 = vrot.lane.b32.xlu0 %v2527, 96
        %v2533 = vpop.permute.xlu0 %2532
        %v2534 = vsel %vm726, %v2529, %v2531
        %v2535 = vsel %vm726, %v2531, %v2533
        %v2539 = vadd.f32 %v2514, %v2534
        %v2540 = vadd.f32 %v2515, %v2535
        %v2541 = vadd.f32 %v2516, %v2533
        %s2542 = sld [smem:[#allocation6 + $0x4b]]
        %v2543 = vstv %s2542
        %v2544 = vmul.f32 %v2543, %v677
        %v2545 = vmul.f32 %v2543, %v678
        %v2546 = vmul.f32 %v2543, 0.0
        %v2550 = vrot.slane %v2544, 1
        %v2551 = vrot.slane %v2545, 1
        %v2552 = vrot.slane %v2546, 1
        %2553 = vrot.lane.b32.xlu0 %v2550, 80
        %v2554 = vpop.permute.xlu0 %2553
        %2555 = vrot.lane.b32.xlu0 %v2551, 80
        %v2556 = vpop.permute.xlu0 %2555
        %2557 = vrot.lane.b32.xlu0 %v2552, 80
        %v2558 = vpop.permute.xlu0 %2557
        %v2559 = vsel %vm749, %v2554, %v2556
        %v2560 = vsel %vm749, %v2556, %v2558
        %v2564 = vadd.f32 %v2539, %v2554
        %v2565 = vadd.f32 %v2540, %v2559
        %v2566 = vadd.f32 %v2541, %v2560
        %s2567 = sld [smem:[#allocation6 + $0x52]]
        %v2568 = vstv %s2567
        %v2569 = vmul.f32 %v2568, %v677
        %v2570 = vmul.f32 %v2568, %v678
        %v2571 = vmul.f32 %v2568, 0.0
        %v2575 = vrot.slane %v2569, 1
        %v2576 = vrot.slane %v2570, 1
        %v2577 = vrot.slane %v2571, 1
        %2578 = vrot.lane.b32.xlu0 %v2575, 64
        %v2579 = vpop.permute.xlu0 %2578
        %2580 = vrot.lane.b32.xlu0 %v2576, 64
        %v2581 = vpop.permute.xlu0 %2580
        %2582 = vrot.lane.b32.xlu0 %v2577, 64
        %v2583 = vpop.permute.xlu0 %2582
        %v2584 = vsel %vm772, %v2579, %v2581
        %v2585 = vsel %vm772, %v2581, %v2583
        %v2589 = vadd.f32 %v2564, %v2579
        %v2590 = vadd.f32 %v2565, %v2584
        %v2591 = vadd.f32 %v2566, %v2585
        %s2592 = sld [smem:[#allocation6 + $0x59]]
        %v2593 = vstv %s2592
        %v2594 = vmul.f32 %v2593, %v677
        %v2595 = vmul.f32 %v2593, %v678
        %v2596 = vmul.f32 %v2593, 0.0
        %v2600 = vrot.slane %v2594, 1
        %v2601 = vrot.slane %v2595, 1
        %v2602 = vrot.slane %v2596, 1
        %2603 = vrot.lane.b32.xlu0 %v2600, 48
        %v2604 = vpop.permute.xlu0 %2603
        %2605 = vrot.lane.b32.xlu0 %v2601, 48
        %v2606 = vpop.permute.xlu0 %2605
        %2607 = vrot.lane.b32.xlu0 %v2602, 48
        %v2608 = vpop.permute.xlu0 %2607
        %v2609 = vsel %vm795, %v2604, %v2606
        %v2610 = vsel %vm795, %v2606, %v2608
        %v2614 = vadd.f32 %v2589, %v2604
        %v2615 = vadd.f32 %v2590, %v2609
        %v2616 = vadd.f32 %v2591, %v2610
        %s2617 = sld [smem:[#allocation6 + $0x60]]
        %v2618 = vstv %s2617
        %v2619 = vmul.f32 %v2618, %v677
        %v2620 = vmul.f32 %v2618, %v678
        %v2621 = vmul.f32 %v2618, 0.0
        %v2625 = vrot.slane %v2619, 1
        %v2626 = vrot.slane %v2620, 1
        %v2627 = vrot.slane %v2621, 1
        %2628 = vrot.lane.b32.xlu0 %v2625, 32
        %v2629 = vpop.permute.xlu0 %2628
        %2630 = vrot.lane.b32.xlu0 %v2626, 32
        %v2631 = vpop.permute.xlu0 %2630
        %2632 = vrot.lane.b32.xlu0 %v2627, 32
        %v2633 = vpop.permute.xlu0 %2632
        %v2634 = vsel %vm360, %v2629, %v2631
        %v2635 = vsel %vm360, %v2631, %v2633
        %v2639 = vadd.f32 %v2614, %v2629
        %v2640 = vadd.f32 %v2615, %v2634
        %v2641 = vadd.f32 %v2616, %v2635
        %v2645 = vrot.slane %v2639, 3
        %v2646 = vrot.slane %v2640, 3
        %v2647 = vrot.slane %v2641, 3
        %2648 = vrot.lane.b32.xlu0 %v2645, 46
        %v2649 = vpop.permute.xlu0 %2648
        %2650 = vrot.lane.b32.xlu0 %v2646, 46
        %v2651 = vpop.permute.xlu0 %2650
        %2652 = vrot.lane.b32.xlu0 %v2647, 46
        %v2653 = vpop.permute.xlu0 %2652
        %vm2654 = vcmask 375808
        %v2655 = vsel %vm2654, %v2649, %v2651
        %v2656 = vsel %vm2654, %v2651, %v2653
        %v2659 = vmul.f32 %v679, %v2655
        %v2660 = vmul.f32 %v680, %v2656
        %v2663 = vrot.slane %v2659, 5
        %v2664 = vrot.slane %v2660, 5
        %v2667 = vadd.f32 %v2333, %v2663
        %v2668 = vadd.f32 %v2334, %v2664
        %s2669 = sld [smem:[#allocation6 + $0x6]]
        %v2670 = vstv %s2669
        %v2671 = vmul.f32 %v2670, 0.0
        %v2672 = vmul.f32 %v2670, %v677
        %v2673 = vmul.f32 %v2670, %v678
        %v2674 = vadd.f32 %v2671, 0.0
        %v2675 = vadd.f32 %v2672, 0.0
        %v2676 = vadd.f32 %v2673, 0.0
        %s2677 = sld [smem:[#allocation6 + $0xd]]
        %v2678 = vstv %s2677
        %v2679 = vmul.f32 %v2678, 0.0
        %v2680 = vmul.f32 %v2678, %v677
        %v2681 = vmul.f32 %v2678, %v678
        %2685 = vrot.lane.b32.xlu0 %v2679, 112
        %v2686 = vpop.permute.xlu0 %2685
        %2687 = vrot.lane.b32.xlu0 %v2680, 112
        %v2688 = vpop.permute.xlu0 %2687
        %2689 = vrot.lane.b32.xlu0 %v2681, 112
        %v2690 = vpop.permute.xlu0 %2689
        %v2691 = vsel %vm703, %v2686, %v2688
        %v2692 = vsel %vm703, %v2688, %v2690
        %v2696 = vadd.f32 %v2674, %v2691
        %v2697 = vadd.f32 %v2675, %v2692
        %v2698 = vadd.f32 %v2676, %v2690
        %s2699 = sld [smem:[#allocation6 + $0x14]]
        %v2700 = vstv %s2699
        %v2701 = vmul.f32 %v2700, 0.0
        %v2702 = vmul.f32 %v2700, %v677
        %v2703 = vmul.f32 %v2700, %v678
        %2707 = vrot.lane.b32.xlu0 %v2701, 96
        %v2708 = vpop.permute.xlu0 %2707
        %2709 = vrot.lane.b32.xlu0 %v2702, 96
        %v2710 = vpop.permute.xlu0 %2709
        %2711 = vrot.lane.b32.xlu0 %v2703, 96
        %v2712 = vpop.permute.xlu0 %2711
        %v2713 = vsel %vm726, %v2708, %v2710
        %v2714 = vsel %vm726, %v2710, %v2712
        %v2718 = vadd.f32 %v2696, %v2713
        %v2719 = vadd.f32 %v2697, %v2714
        %v2720 = vadd.f32 %v2698, %v2712
        %s2721 = sld [smem:[#allocation6 + $0x1b]]
        %v2722 = vstv %s2721
        %v2723 = vmul.f32 %v2722, %v677
        %v2724 = vmul.f32 %v2722, %v678
        %v2725 = vmul.f32 %v2722, 0.0
        %2729 = vrot.lane.b32.xlu0 %v2723, 80
        %v2730 = vpop.permute.xlu0 %2729
        %2731 = vrot.lane.b32.xlu0 %v2724, 80
        %v2732 = vpop.permute.xlu0 %2731
        %2733 = vrot.lane.b32.xlu0 %v2725, 80
        %v2734 = vpop.permute.xlu0 %2733
        %v2735 = vsel %vm749, %v2730, %v2732
        %v2736 = vsel %vm749, %v2732, %v2734
        %v2740 = vadd.f32 %v2718, %v2730
        %v2741 = vadd.f32 %v2719, %v2735
        %v2742 = vadd.f32 %v2720, %v2736
        %s2743 = sld [smem:[#allocation6 + $0x22]]
        %v2744 = vstv %s2743
        %v2745 = vmul.f32 %v2744, %v677
        %v2746 = vmul.f32 %v2744, %v678
        %v2747 = vmul.f32 %v2744, 0.0
        %2751 = vrot.lane.b32.xlu0 %v2745, 64
        %v2752 = vpop.permute.xlu0 %2751
        %2753 = vrot.lane.b32.xlu0 %v2746, 64
        %v2754 = vpop.permute.xlu0 %2753
        %2755 = vrot.lane.b32.xlu0 %v2747, 64
        %v2756 = vpop.permute.xlu0 %2755
        %v2757 = vsel %vm772, %v2752, %v2754
        %v2758 = vsel %vm772, %v2754, %v2756
        %v2762 = vadd.f32 %v2740, %v2752
        %v2763 = vadd.f32 %v2741, %v2757
        %v2764 = vadd.f32 %v2742, %v2758
        %s2765 = sld [smem:[#allocation6 + $0x29]]
        %v2766 = vstv %s2765
        %v2767 = vmul.f32 %v2766, %v677
        %v2768 = vmul.f32 %v2766, %v678
        %v2769 = vmul.f32 %v2766, 0.0
        %2773 = vrot.lane.b32.xlu0 %v2767, 48
        %v2774 = vpop.permute.xlu0 %2773
        %2775 = vrot.lane.b32.xlu0 %v2768, 48
        %v2776 = vpop.permute.xlu0 %2775
        %2777 = vrot.lane.b32.xlu0 %v2769, 48
        %v2778 = vpop.permute.xlu0 %2777
        %v2779 = vsel %vm795, %v2774, %v2776
        %v2780 = vsel %vm795, %v2776, %v2778
        %v2784 = vadd.f32 %v2762, %v2774
        %v2785 = vadd.f32 %v2763, %v2779
        %v2786 = vadd.f32 %v2764, %v2780
        %s2787 = sld [smem:[#allocation6 + $0x30]]
        %v2788 = vstv %s2787
        %v2789 = vmul.f32 %v2788, %v677
        %v2790 = vmul.f32 %v2788, %v678
        %v2791 = vmul.f32 %v2788, 0.0
        %2795 = vrot.lane.b32.xlu0 %v2789, 32
        %v2796 = vpop.permute.xlu0 %2795
        %2797 = vrot.lane.b32.xlu0 %v2790, 32
        %v2798 = vpop.permute.xlu0 %2797
        %2799 = vrot.lane.b32.xlu0 %v2791, 32
        %v2800 = vpop.permute.xlu0 %2799
        %v2801 = vsel %vm360, %v2796, %v2798
        %v2802 = vsel %vm360, %v2798, %v2800
        %v2806 = vadd.f32 %v2784, %v2796
        %v2807 = vadd.f32 %v2785, %v2801
        %v2808 = vadd.f32 %v2786, %v2802
        %s2809 = sld [smem:[#allocation6 + $0x37]]
        %v2810 = vstv %s2809
        %v2811 = vmul.f32 %v2810, 0.0
        %v2812 = vmul.f32 %v2810, %v677
        %v2813 = vmul.f32 %v2810, %v678
        %v2817 = vrot.slane %v2811, 1
        %v2818 = vrot.slane %v2812, 1
        %v2819 = vrot.slane %v2813, 1
        %v2823 = vadd.f32 %v2806, %v2817
        %v2824 = vadd.f32 %v2807, %v2818
        %v2825 = vadd.f32 %v2808, %v2819
        %s2826 = sld [smem:[#allocation6 + $0x3e]]
        %v2827 = vstv %s2826
        %v2828 = vmul.f32 %v2827, 0.0
        %v2829 = vmul.f32 %v2827, %v677
        %v2830 = vmul.f32 %v2827, %v678
        %v2834 = vrot.slane %v2828, 1
        %v2835 = vrot.slane %v2829, 1
        %v2836 = vrot.slane %v2830, 1
        %2837 = vrot.lane.b32.xlu0 %v2834, 112
        %v2838 = vpop.permute.xlu0 %2837
        %2839 = vrot.lane.b32.xlu0 %v2835, 112
        %v2840 = vpop.permute.xlu0 %2839
        %2841 = vrot.lane.b32.xlu0 %v2836, 112
        %v2842 = vpop.permute.xlu0 %2841
        %v2843 = vsel %vm703, %v2838, %v2840
        %v2844 = vsel %vm703, %v2840, %v2842
        %v2848 = vadd.f32 %v2823, %v2843
        %v2849 = vadd.f32 %v2824, %v2844
        %v2850 = vadd.f32 %v2825, %v2842
        %s2851 = sld [smem:[#allocation6 + $0x45]]
        %v2852 = vstv %s2851
        %v2853 = vmul.f32 %v2852, 0.0
        %v2854 = vmul.f32 %v2852, %v677
        %v2855 = vmul.f32 %v2852, %v678
        %v2859 = vrot.slane %v2853, 1
        %v2860 = vrot.slane %v2854, 1
        %v2861 = vrot.slane %v2855, 1
        %2862 = vrot.lane.b32.xlu0 %v2859, 96
        %v2863 = vpop.permute.xlu0 %2862
        %2864 = vrot.lane.b32.xlu0 %v2860, 96
        %v2865 = vpop.permute.xlu0 %2864
        %2866 = vrot.lane.b32.xlu0 %v2861, 96
        %v2867 = vpop.permute.xlu0 %2866
        %v2868 = vsel %vm726, %v2863, %v2865
        %v2869 = vsel %vm726, %v2865, %v2867
        %v2873 = vadd.f32 %v2848, %v2868
        %v2874 = vadd.f32 %v2849, %v2869
        %v2875 = vadd.f32 %v2850, %v2867
        %s2876 = sld [smem:[#allocation6 + $0x4c]]
        %v2877 = vstv %s2876
        %v2878 = vmul.f32 %v2877, %v677
        %v2879 = vmul.f32 %v2877, %v678
        %v2880 = vmul.f32 %v2877, 0.0
        %v2884 = vrot.slane %v2878, 1
        %v2885 = vrot.slane %v2879, 1
        %v2886 = vrot.slane %v2880, 1
        %2887 = vrot.lane.b32.xlu0 %v2884, 80
        %v2888 = vpop.permute.xlu0 %2887
        %2889 = vrot.lane.b32.xlu0 %v2885, 80
        %v2890 = vpop.permute.xlu0 %2889
        %2891 = vrot.lane.b32.xlu0 %v2886, 80
        %v2892 = vpop.permute.xlu0 %2891
        %v2893 = vsel %vm749, %v2888, %v2890
        %v2894 = vsel %vm749, %v2890, %v2892
        %v2898 = vadd.f32 %v2873, %v2888
        %v2899 = vadd.f32 %v2874, %v2893
        %v2900 = vadd.f32 %v2875, %v2894
        %s2901 = sld [smem:[#allocation6 + $0x53]]
        %v2902 = vstv %s2901
        %v2903 = vmul.f32 %v2902, %v677
        %v2904 = vmul.f32 %v2902, %v678
        %v2905 = vmul.f32 %v2902, 0.0
        %v2909 = vrot.slane %v2903, 1
        %v2910 = vrot.slane %v2904, 1
        %v2911 = vrot.slane %v2905, 1
        %2912 = vrot.lane.b32.xlu0 %v2909, 64
        %v2913 = vpop.permute.xlu0 %2912
        %2914 = vrot.lane.b32.xlu0 %v2910, 64
        %v2915 = vpop.permute.xlu0 %2914
        %2916 = vrot.lane.b32.xlu0 %v2911, 64
        %v2917 = vpop.permute.xlu0 %2916
        %v2918 = vsel %vm772, %v2913, %v2915
        %v2919 = vsel %vm772, %v2915, %v2917
        %v2923 = vadd.f32 %v2898, %v2913
        %v2924 = vadd.f32 %v2899, %v2918
        %v2925 = vadd.f32 %v2900, %v2919
        %s2926 = sld [smem:[#allocation6 + $0x5a]]
        %v2927 = vstv %s2926
        %v2928 = vmul.f32 %v2927, %v677
        %v2929 = vmul.f32 %v2927, %v678
        %v2930 = vmul.f32 %v2927, 0.0
        %v2934 = vrot.slane %v2928, 1
        %v2935 = vrot.slane %v2929, 1
        %v2936 = vrot.slane %v2930, 1
        %2937 = vrot.lane.b32.xlu0 %v2934, 48
        %v2938 = vpop.permute.xlu0 %2937
        %2939 = vrot.lane.b32.xlu0 %v2935, 48
        %v2940 = vpop.permute.xlu0 %2939
        %2941 = vrot.lane.b32.xlu0 %v2936, 48
        %v2942 = vpop.permute.xlu0 %2941
        %v2943 = vsel %vm795, %v2938, %v2940
        %v2944 = vsel %vm795, %v2940, %v2942
        %v2948 = vadd.f32 %v2923, %v2938
        %v2949 = vadd.f32 %v2924, %v2943
        %v2950 = vadd.f32 %v2925, %v2944
        %s2951 = sld [smem:[#allocation6 + $0x61]]
        %v2952 = vstv %s2951
        %v2953 = vmul.f32 %v2952, %v677
        %v2954 = vmul.f32 %v2952, %v678
        %v2955 = vmul.f32 %v2952, 0.0
        %v2959 = vrot.slane %v2953, 1
        %v2960 = vrot.slane %v2954, 1
        %v2961 = vrot.slane %v2955, 1
        %2962 = vrot.lane.b32.xlu0 %v2959, 32
        %v2963 = vpop.permute.xlu0 %2962
        %2964 = vrot.lane.b32.xlu0 %v2960, 32
        %v2965 = vpop.permute.xlu0 %2964
        %2966 = vrot.lane.b32.xlu0 %v2961, 32
        %v2967 = vpop.permute.xlu0 %2966
        %v2968 = vsel %vm360, %v2963, %v2965
        %v2969 = vsel %vm360, %v2965, %v2967
        %v2973 = vadd.f32 %v2948, %v2963
        %v2974 = vadd.f32 %v2949, %v2968
        %v2975 = vadd.f32 %v2950, %v2969
        %v2979 = vrot.slane %v2973, 2
        %v2980 = vrot.slane %v2974, 2
        %v2981 = vrot.slane %v2975, 2
        %2982 = vrot.lane.b32.xlu0 %v2979, 45
        %v2983 = vpop.permute.xlu0 %2982
        %2984 = vrot.lane.b32.xlu0 %v2980, 45
        %v2985 = vpop.permute.xlu0 %2984
        %2986 = vrot.lane.b32.xlu0 %v2981, 45
        %v2987 = vpop.permute.xlu0 %2986
        %vm2988 = vcmask 367616
        %v2989 = vsel %vm2988, %v2983, %v2985
        %v2990 = vsel %vm2988, %v2985, %v2987
        %v2993 = vmul.f32 %v679, %v2989
        %v2994 = vmul.f32 %v680, %v2990
        %v2997 = vrot.slane %v2993, 6
        %v2998 = vrot.slane %v2994, 6
        %v3001 = vadd.f32 %v2667, %v2997
        %v3002 = vadd.f32 %v2668, %v2998
        %s3003 = sld [smem:[#allocation6 + $0x62]]
        %v3004 = vstv %s3003
        %v3005 = vadd.f32 %v3001, %v3004
        %v3006 = vadd.f32 %v3002, %v3004
        %v3007 = vsub.f32 0.0, %v3005
        %v3008 = vsub.f32 0.0, %v3006
        %v3009 = vmul.f32 %v3007, 1.442695
        %v3010 = vpow.pop %v3009
        %v3011 = vmul.f32 %v3008, 1.442695
        %v3012 = vpow.pop %v3011
        %v3013 = vadd.f32 %v3010, 1.0
        %v3014 = vadd.f32 %v3012, 1.0
        %v3015 = vrcp.pop %v3013
        %v3016 = vmul.f32 1.0, %v3015
        %v3017 = vrcp.pop %v3014
        %v3018 = vmul.f32 1.0, %v3017
        %v3019 = vlaneseq
        %v3020 = vshrl.u32 %v3019, 7
        %v3021 = vsub.s32 0, %v3020
        %v3022 = vrot.slane %v3016, %v3021
        %v3023 = vlaneseq
        %v3024 = vshrl.u32 %v3023, 7
        %v3025 = vsub.s32 0, %v3024
        %v3026 = vrot.slane %v3018, %v3025
        %v3027 = vmul.f32 %v629, %v3022
        %v3028 = vmul.f32 %v630, %v3026
        %v3029 = vmul.f32 %v631, %v3022
        %v3030 = vmul.f32 %v632, %v3026
        %v3031 = vmul.f32 %v633, %v3022
        %v3032 = vmul.f32 %v634, %v3026
        %v3033 = vmul.f32 %v635, %v3022
        %v3034 = vmul.f32 %v636, %v3026
        %3035 = vst [vmem:[%s310] sm:$0xff] %v3027
        %3036 = vst [vmem:[%s310 + $0x8] sm:$0xff] %v3028
        %3037 = vst [vmem:[%s310 + $0x10] sm:$0xff] %v3029
        %3038 = vst [vmem:[%s310 + $0x18] sm:$0xff] %v3030
        %3039 = vst [vmem:[%s310 + $0x20] sm:$0xff] %v3031
        %3040 = vst [vmem:[%s310 + $0x28] sm:$0xff] %v3032
        %3041 = vst [vmem:[%s310 + $0x30] sm:$0xff] %v3033
        %3042 = vst [vmem:[%s310 + $0x38] sm:$0xff] %v3034
        %s3043 = sand.u32 %s185, 1
        %s3044 = scalar_lea.sflag [#allocation4], %s3043
        %s3045 = sand.u32 %s185, 1
        %s3046 = smul.addr %s3045, 64
        %s3047 = scalar_lea.vmem [#allocation7], %s3046
        // Predicated region
        $region57: #{tpu_custom_call.1} parent=47 // pred_check
          %p3048 = pneg %p195
        $region58: #{tpu_custom_call.1} parent=47 // pred_check_branch
          %3050 = sbr.rel (%p3048) target = $region60
        $region59: #{tpu_custom_call.1} parent=47 // pred_region
          %s3052 = ssub.s32 1024, 1024
          %3053 = vsyncadd %s3044, %s3052
          %s3054 = smul.addr %s25, 8
          %s3055 = smul.addr %s3054, 128
          %s3056 = scalar_lea.hbm %s7, %s3055
          %s3057 = sshll.u32 %s3047, 4
          %s3058 = int_to_ptr.vmem [resolvable:$true] %s3057
          %3063 = dma.vmem_to_hbm [thread:$0]  %s3058, 1024, %s3056, %s3044, 256, 256, 16
        $region60: #{tpu_custom_call.1} parent=47 // pred_fallthru
          _
      $region48: #{tpu_custom_call.1} parent=5 // pred_fallthru
        _
      %p3064 = scmp.le.s32.totalorder 2, %s20
      // Predicated region
      $region61: #{tpu_custom_call.1} parent=5 // pred_check
        %p3065 = pneg %p3064
      $region62: #{tpu_custom_call.1} parent=5 // pred_check_branch
        %3067 = sbr.rel (%p3065) target = $region64
      $region63: #{tpu_custom_call.1} parent=5 // pred_region
        %s3068 = ssub.s32 %s20, 2
        // Predicated region
        $region65: #{tpu_custom_call.1} parent=63 // pred_check
          %p3069 = pneg %p201
        $region66: #{tpu_custom_call.1} parent=63 // pred_check_branch
          %3071 = sbr.rel (%p3069) target = $region68
        $region67: #{tpu_custom_call.1} parent=63 // pred_region
          %s3072 = sand.u32 %s186, 1
          %s3073 = scalar_lea.sflag [#allocation4], %s3072
          %s3074 = sand.u32 %s186, 1
          %s3075 = smul.addr %s3074, 64
          %s3076 = scalar_lea.vmem [#allocation7], %s3075
          %3077 = dma.done %s3073, 1024
        $region68: #{tpu_custom_call.1} parent=63 // pred_fallthru
          _
      $region64: #{tpu_custom_call.1} parent=5 // pred_fallthru
        _
    $region6: #{tpu_custom_call.1} parent=1 // loop_footer
      %s24 = sadd.s32 1, %s20
    $region7: #{tpu_custom_call.1} parent=1 // loop_footer_branch
      %19 = sbr.rel target = $region3
    $region8: #{tpu_custom_call.1} parent=1 // loop_exit
      _
    %3078 = vsyncpa [#allocation3], 1
    %s3079 = scalar_lea.sflag [#allocation3], 1
    %3080 = vsyncpa %s3079, 1
    %3081 = vsyncpa [#allocation4], 1
    %s3082 = scalar_lea.sflag [#allocation4], 1
    %3083 = vsyncpa %s3082, 1
    %3084 = vsyncpa [#allocation5], 1
    %s3085 = scalar_lea.sflag [#allocation5], 1
    %3086 = vsyncpa %s3085, 1

</llo_original>
